<compile_context>
chip_gen: v7x
topology: tpu7x:2x2x1
jax: 0.10.0
libtpu: 0.0.40
codegen_flags: <defaults>
</compile_context>

<pallas_src>
import functools
import math

import jax
import jax.numpy as jnp
from jax import lax
from jax.experimental import pallas as pl
from jax.experimental.pallas import tpu as pltpu


def mha_kernel(xq_ref, xkv_ref, wq_ref, bq_ref, wkv_ref, bkv_ref, wo_ref, bo_ref,
               o_ref, q_scr, m_scr, l_scr, acc_scr, *, num_heads, head_dim):
    ki = pl.program_id(2)
    H = num_heads * head_dim

    # ---- kv step 0: project the q tile once, reset online-softmax state --------
    @pl.when(ki == 0)
    def _init():
        q = jnp.dot(xq_ref[0], wq_ref[...], preferred_element_type=jnp.float32)
        q_scr[...] = (q + bq_ref[...]).astype(q_scr.dtype)          # (tq, H)
        m_scr[...] = jnp.full_like(m_scr, -jnp.inf)
        l_scr[...] = jnp.zeros_like(l_scr)
        acc_scr[...] = jnp.zeros_like(acc_scr)

    # ---- every kv step: project K/V for this chunk only (bounded (tkv, 2H)) ----
    kv = jnp.dot(xkv_ref[0], wkv_ref[...], preferred_element_type=jnp.float32)
    kv = (kv + bkv_ref[...]).astype(q_scr.dtype)                    # (tkv, 2H)

    # ---- per-head flash update (heads statically unrolled; kv loop = grid axis,
    #      so there is exactly one fresh K chunk -> one contraction per head/step).
    for h in range(num_heads):
        lo = h * head_dim
        qh = q_scr[:, lo:lo + head_dim]                             # (tq, hd)
        kh = kv[:, lo:lo + head_dim]                                # (tkv, hd)
        vh = kv[:, H + lo:H + lo + head_dim]                        # (tkv, hd)
        s = lax.dot_general(qh, kh, (((1,), (1,)), ((), ())),
                            preferred_element_type=jnp.float32)     # (tq, tkv)
        m_prev = m_scr[h]                                           # (tq, 1)
        m_new = jnp.maximum(m_prev, jnp.max(s, axis=-1, keepdims=True))
        alpha = jnp.exp(m_prev - m_new)
        p = jnp.exp(s - m_new)
        l_scr[h] = alpha * l_scr[h] + jnp.sum(p, axis=-1, keepdims=True)
        acc_scr[:, lo:lo + head_dim] = (
            alpha * acc_scr[:, lo:lo + head_dim]
            + jnp.dot(p.astype(vh.dtype), vh, preferred_element_type=jnp.float32))
        m_scr[h] = m_new

    # ---- last kv step: normalize in place, output projection, lane-dense store -
    @pl.when(ki == pl.num_programs(2) - 1)
    def _finalize():
        for h in range(num_heads):
            lo = h * head_dim
            inv = pl.reciprocal(l_scr[h], approx=True)              # EUP slot
            acc_scr[:, lo:lo + head_dim] = acc_scr[:, lo:lo + head_dim] * inv
        ctx = acc_scr[...].astype(wo_ref.dtype)                     # (tq, H)
        out = jnp.dot(ctx, wo_ref[...], preferred_element_type=jnp.float32)
        o_ref[0] = (out + bo_ref[...]).astype(o_ref.dtype)


def _pick_tile(n, target):
    """Largest tile <= target dividing n with an 8-aligned sublane dim."""
    if n <= target:
        return n
    for t in range(target, 0, -1):
        if n % t == 0 and t % 8 == 0:
            return t
    # TODO(synk): pad + mask for sequence lengths with no 8-aligned divisor.
    return n


def multi_head_attention(x, params, num_heads, *, compute_dtype=None,
                         q_block=256, kv_block=512):
    B, S, H = x.shape
    assert H % num_heads == 0
    head_dim = H // num_heads
    compute_dtype = jnp.dtype(compute_dtype if compute_dtype is not None else x.dtype)
    scale = 1.0 / math.sqrt(head_dim)

    wq, bq = params['q']
    wk, bk = params['k']
    wv, bv = params['v']
    wo, bo = params['o']

    # Host-side one-off prep: transpose to [in, out], fuse k/v, fold the softmax
    # scale into the q projection, keep biases 2-D and f32.
    w_q = (wq.T * scale).astype(compute_dtype)
    b_q = (bq * scale).reshape(1, H).astype(jnp.float32)
    w_kv = jnp.concatenate([wk.T, wv.T], axis=1).astype(compute_dtype)
    b_kv = jnp.concatenate([bk, bv]).reshape(1, 2 * H).astype(jnp.float32)
    w_o = wo.T.astype(compute_dtype)
    b_o = bo.reshape(1, H).astype(jnp.float32)
    x_c = x.astype(compute_dtype)

    tq = _pick_tile(S, q_block)
    tkv = _pick_tile(S, kv_block)
    grid = (B, S // tq, S // tkv)

    kernel = functools.partial(mha_kernel, num_heads=num_heads, head_dim=head_dim)

    def qi_map(b, qi, ki):
        return (b, qi, 0)

    def kv_map(b, qi, ki):
        return (b, ki, 0)

    def const_map(b, qi, ki):
        return (0, 0)

    itemsize = jnp.dtype(compute_dtype).itemsize
    cost = pl.CostEstimate(
        flops=int(2 * B * S * H * 3 * H                       # q/k/v projections
                  + 4 * B * num_heads * S * S * head_dim      # QK^T + PV
                  + 2 * B * S * H * H),                       # output projection
        transcendentals=int(B * num_heads * S * S),
        bytes_accessed=int(2 * x_c.size * itemsize
                           + (w_q.size + w_kv.size + w_o.size) * itemsize
                           + (b_q.size + b_kv.size + b_o.size) * 4
                           + B * S * H * x.dtype.itemsize))

    def build(single_buffer_weights):
        wkw = dict(pipeline_mode=pl.Buffered(1)) if single_buffer_weights else {}
        in_specs = [
            pl.BlockSpec((1, tq, H), qi_map),                  # x rows for q tile
            pl.BlockSpec((1, tkv, H), kv_map),                 # x rows for kv chunk
            pl.BlockSpec((H, H), const_map, **wkw),            # w_q  [in, out] (scaled)
            pl.BlockSpec((1, H), const_map, **wkw),            # b_q
            pl.BlockSpec((H, 2 * H), const_map, **wkw),        # fused w_kv [in, 2H]
            pl.BlockSpec((1, 2 * H), const_map, **wkw),        # b_kv
            pl.BlockSpec((H, H), const_map, **wkw),            # w_o  [in, out]
            pl.BlockSpec((1, H), const_map, **wkw),            # b_o
        ]
        return pl.pallas_call(
            kernel,
            out_shape=jax.ShapeDtypeStruct((B, S, H), x.dtype),
            grid_spec=pltpu.PrefetchScalarGridSpec(
                num_scalar_prefetch=0,
                grid=grid,
                in_specs=in_specs,
                out_specs=pl.BlockSpec((1, tq, H), qi_map),
                scratch_shapes=[
                    pltpu.VMEM((tq, H), compute_dtype),               # projected q tile
                    pltpu.VMEM((num_heads, tq, 1), jnp.float32),      # running max
                    pltpu.VMEM((num_heads, tq, 1), jnp.float32),      # running sum
                    pltpu.VMEM((tq, H), jnp.float32),                 # per-head ctx acc
                ]),
            compiler_params=pltpu.CompilerParams(
                dimension_semantics=("parallel", "parallel", "arbitrary"),
                vmem_limit_bytes=48 * 1024 * 1024),
            cost_estimate=cost,
        )

    args = (x_c, x_c, w_q, b_q, w_kv, b_kv, w_o, b_o)
    try:
        return build(single_buffer_weights=True)(*args)
    except Exception:
        # Fallback for Pallas builds without BlockSpec(pipeline_mode=pl.Buffered(1)).
        return build(single_buffer_weights=False)(*args)


def reference_mha(x, params, num_heads):
    B, S, H = x.shape
    hd = H // num_heads
    wq, bq = params['q']
    wk, bk = params['k']
    wv, bv = params['v']
    wo, bo = params['o']
    q = x @ wq.T + bq
    k = x @ wk.T + bk
    v = x @ wv.T + bv
    q = q.reshape(B, S, num_heads, hd).transpose(0, 2, 1, 3)
    k = k.reshape(B, S, num_heads, hd).transpose(0, 2, 1, 3)
    v = v.reshape(B, S, num_heads, hd).transpose(0, 2, 1, 3)
    attn = jnp.einsum('bhqd,bhkd->bhqk', q, k) / math.sqrt(hd)
    attn = jax.nn.softmax(attn, axis=-1)
    ctx = jnp.einsum('bhqk,bhkd->bhqd', attn, v)
    ctx = ctx.transpose(0, 2, 1, 3).reshape(B, S, H)
    return ctx @ wo.T + bo


if __name__ == "__main__":
    batch, seq_len, hidden_dim, num_heads = 2, 8, 32, 4

    key = jax.random.PRNGKey(0)
    keys = jax.random.split(key, 10)

    def linear_init(kw, kb, fan_in, fan_out):
        bound = 1.0 / math.sqrt(fan_in)
        w = jax.random.uniform(kw, (fan_out, fan_in), jnp.float32, -bound, bound)
        b = jax.random.uniform(kb, (fan_out,), jnp.float32, -bound, bound)
        return w, b

    params = {
        'q': linear_init(keys[0], keys[1], hidden_dim, hidden_dim),
        'k': linear_init(keys[2], keys[3], hidden_dim, hidden_dim),
        'v': linear_init(keys[4], keys[5], hidden_dim, hidden_dim),
        'o': linear_init(keys[6], keys[7], hidden_dim, hidden_dim),
    }

    # Primary (toy) shape: single q-tile, single kv-chunk path.
    x = jax.random.normal(keys[8], (batch, seq_len, hidden_dim), jnp.float32)
    ref = reference_mha(x, params, num_heads)

    out = multi_head_attention(x, params, num_heads)
    out = jax.block_until_ready(out)
    assert out.shape == (batch, seq_len, hidden_dim)
    assert jnp.allclose(out, ref, atol=1e-2, rtol=1e-2), "f32 path mismatch vs reference"

    # bf16 MXU-operand path (softmax / accumulation stay f32); looser tolerance.
    out_bf16 = multi_head_attention(x, params, num_heads, compute_dtype=jnp.bfloat16)
    out_bf16 = jax.block_until_ready(out_bf16)
    assert out_bf16.dtype == x.dtype
    assert jnp.allclose(out_bf16, ref, atol=1e-1, rtol=1e-1), "bf16 path mismatch vs reference"

    # Secondary shape exercising multi q-tile (2) and multi kv-chunk (4) online softmax.
    x2 = jax.random.normal(keys[9], (batch, 32, hidden_dim), jnp.float32)
    ref2 = reference_mha(x2, params, num_heads)
    out2 = multi_head_attention(x2, params, num_heads, q_block=16, kv_block=8)
    out2 = jax.block_until_ready(out2)
    assert jnp.allclose(out2, ref2, atol=1e-2, rtol=1e-2), "tiled flash path mismatch"

    print("KERNEL_OK")
</pallas_src>

<mosaic_0001>
module attributes {stable_mosaic.version = 11 : i64} {
  func.func @mha_kernel(%arg0: i32, %arg1: i32, %arg2: i32, %arg3: memref<1x8x32xf32, #tpu.memory_space<vmem>>, %arg4: memref<1x8x32xf32, #tpu.memory_space<vmem>>, %arg5: memref<32x32xf32, #tpu.memory_space<vmem>>, %arg6: memref<1x32xf32, #tpu.memory_space<vmem>>, %arg7: memref<32x64xf32, #tpu.memory_space<vmem>>, %arg8: memref<1x64xf32, #tpu.memory_space<vmem>>, %arg9: memref<32x32xf32, #tpu.memory_space<vmem>>, %arg10: memref<1x32xf32, #tpu.memory_space<vmem>>, %arg11: memref<1x8x32xf32, #tpu.memory_space<vmem>>, %arg12: memref<8x32xf32, #tpu.memory_space<vmem>>, %arg13: memref<4x8x1xf32, #tpu.memory_space<vmem>>, %arg14: memref<4x8x1xf32, #tpu.memory_space<vmem>>, %arg15: memref<8x32xf32, #tpu.memory_space<vmem>>) attributes {dimension_semantics = [#tpu.dimension_semantics<parallel>, #tpu.dimension_semantics<parallel>, #tpu.dimension_semantics<arbitrary>], iteration_bounds = array<i64: 2, 1, 1>, scalar_prefetch = 0 : i64, scratch_operands = 4 : i64, tpu.core_type = #tpu.core_type<tc>, window_params = [{transform_indices = @transform_0, window_bounds = array<i64: 1, 8, 32>}, {transform_indices = @transform_1, window_bounds = array<i64: 1, 8, 32>}, {pipeline_mode = #tpu.pipeline_mode<synchronous>, transform_indices = @transform_2, window_bounds = array<i64: 32, 32>}, {pipeline_mode = #tpu.pipeline_mode<synchronous>, transform_indices = @transform_3, window_bounds = array<i64: 1, 32>}, {pipeline_mode = #tpu.pipeline_mode<synchronous>, transform_indices = @transform_4, window_bounds = array<i64: 32, 64>}, {pipeline_mode = #tpu.pipeline_mode<synchronous>, transform_indices = @transform_5, window_bounds = array<i64: 1, 64>}, {pipeline_mode = #tpu.pipeline_mode<synchronous>, transform_indices = @transform_6, window_bounds = array<i64: 32, 32>}, {pipeline_mode = #tpu.pipeline_mode<synchronous>, transform_indices = @transform_7, window_bounds = array<i64: 1, 32>}, {transform_indices = @transform_8, window_bounds = array<i64: 1, 8, 32>}]} {
    %c0_i32 = arith.constant 0 : i32
    %0 = arith.cmpi eq, %arg2, %c0_i32 : i32
    %1 = arith.extui %0 : i1 to i32
    %c0_i32_0 = arith.constant 0 : i32
    %2 = arith.cmpi ne, %1, %c0_i32_0 : i32
    scf.if %2 {
      %c0_91 = arith.constant 0 : index
      %c0_92 = arith.constant 0 : index
      %c0_93 = arith.constant 0 : index
      %141 = vector.load %arg3[%c0_91, %c0_92, %c0_93] : memref<1x8x32xf32, #tpu.memory_space<vmem>>, vector<1x8x32xf32>
      %142 = vector.shape_cast %141 : vector<1x8x32xf32> to vector<8x32xf32>
      %c0_94 = arith.constant 0 : index
      %c0_95 = arith.constant 0 : index
      %143 = vector.load %arg5[%c0_94, %c0_95] : memref<32x32xf32, #tpu.memory_space<vmem>>, vector<32x32xf32>
      %cst_96 = arith.constant dense<0.000000e+00> : vector<8x32xf32>
      %144 = tpu.matmul %142, %143, %cst_96 {dimension_numbers = #tpu.dot_dimension_numbers<[1], [0], [0], [1], [0, 0, 1, 1], [], []>} : vector<8x32xf32>, vector<32x32xf32>, vector<8x32xf32> -> vector<8x32xf32>
      %c0_97 = arith.constant 0 : index
      %c0_98 = arith.constant 0 : index
      %145 = vector.load %arg6[%c0_97, %c0_98] : memref<1x32xf32, #tpu.memory_space<vmem>>, vector<1x32xf32>
      %146 = vector.broadcast %145 : vector<1x32xf32> to vector<8x32xf32>
      %147 = arith.addf %144, %146 : vector<8x32xf32>
      %c0_99 = arith.constant 0 : index
      %c0_100 = arith.constant 0 : index
      %148 = vector.load %arg12[%c0_99, %c0_100] : memref<8x32xf32, #tpu.memory_space<vmem>>, vector<8x32xf32>
      tpu.vector_store %arg12[%c0_99, %c0_100], %147 {strides = array<i32>} : memref<8x32xf32, #tpu.memory_space<vmem>>, vector<8x32xf32>,
      %cst_101 = arith.constant 0xFF800000 : f32
      %149 = vector.broadcast %cst_101 : f32 to vector<4x8x1xf32>
      %c0_102 = arith.constant 0 : index
      %c0_103 = arith.constant 0 : index
      %c0_104 = arith.constant 0 : index
      %150 = vector.load %arg13[%c0_102, %c0_103, %c0_104] : memref<4x8x1xf32, #tpu.memory_space<vmem>>, vector<4x8x1xf32>
      tpu.vector_store %arg13[%c0_102, %c0_103, %c0_104], %149 {strides = array<i32>} : memref<4x8x1xf32, #tpu.memory_space<vmem>>, vector<4x8x1xf32>,
      %cst_105 = arith.constant 0.000000e+00 : f32
      %151 = vector.broadcast %cst_105 : f32 to vector<4x8x1xf32>
      %c0_106 = arith.constant 0 : index
      %c0_107 = arith.constant 0 : index
      %c0_108 = arith.constant 0 : index
      %152 = vector.load %arg14[%c0_106, %c0_107, %c0_108] : memref<4x8x1xf32, #tpu.memory_space<vmem>>, vector<4x8x1xf32>
      tpu.vector_store %arg14[%c0_106, %c0_107, %c0_108], %151 {strides = array<i32>} : memref<4x8x1xf32, #tpu.memory_space<vmem>>, vector<4x8x1xf32>,
      %cst_109 = arith.constant 0.000000e+00 : f32
      %153 = vector.broadcast %cst_109 : f32 to vector<8x32xf32>
      %c0_110 = arith.constant 0 : index
      %c0_111 = arith.constant 0 : index
      %154 = vector.load %arg15[%c0_110, %c0_111] : memref<8x32xf32, #tpu.memory_space<vmem>>, vector<8x32xf32>
      tpu.vector_store %arg15[%c0_110, %c0_111], %153 {strides = array<i32>} : memref<8x32xf32, #tpu.memory_space<vmem>>, vector<8x32xf32>,
    } else {
    }
    %c0 = arith.constant 0 : index
    %c0_1 = arith.constant 0 : index
    %c0_2 = arith.constant 0 : index
    %3 = vector.load %arg4[%c0, %c0_1, %c0_2] : memref<1x8x32xf32, #tpu.memory_space<vmem>>, vector<1x8x32xf32>
    %4 = vector.shape_cast %3 : vector<1x8x32xf32> to vector<8x32xf32>
    %c0_3 = arith.constant 0 : index
    %c0_4 = arith.constant 0 : index
    %5 = vector.load %arg7[%c0_3, %c0_4] : memref<32x64xf32, #tpu.memory_space<vmem>>, vector<32x64xf32>
    %cst = arith.constant dense<0.000000e+00> : vector<8x64xf32>
    %6 = tpu.matmul %4, %5, %cst {dimension_numbers = #tpu.dot_dimension_numbers<[1], [0], [0], [1], [0, 0, 1, 1], [], []>} : vector<8x32xf32>, vector<32x64xf32>, vector<8x64xf32> -> vector<8x64xf32>
    %c0_5 = arith.constant 0 : index
    %c0_6 = arith.constant 0 : index
    %7 = vector.load %arg8[%c0_5, %c0_6] : memref<1x64xf32, #tpu.memory_space<vmem>>, vector<1x64xf32>
    %8 = vector.broadcast %7 : vector<1x64xf32> to vector<8x64xf32>
    %9 = arith.addf %6, %8 : vector<8x64xf32>
    %c0_7 = arith.constant 0 : index
    %c0_8 = arith.constant 0 : index
    %10 = vector.load %arg12[%c0_7, %c0_8] : memref<8x32xf32, #tpu.memory_space<vmem>>, vector<8x8xf32>
    %11 = vector.extract_strided_slice %9 {offsets = [0, 0], sizes = [8, 8], strides = [1, 1]} : vector<8x64xf32> to vector<8x8xf32>
    %12 = vector.extract_strided_slice %9 {offsets = [0, 32], sizes = [8, 8], strides = [1, 1]} : vector<8x64xf32> to vector<8x8xf32>
    %cst_9 = arith.constant dense<0.000000e+00> : vector<8x8xf32>
    %13 = tpu.matmul %10, %11, %cst_9 {dimension_numbers = #tpu.dot_dimension_numbers<[1], [1], [0], [0], [0, 0, 1, 0], [], []>} : vector<8x8xf32>, vector<8x8xf32>, vector<8x8xf32> -> vector<8x8xf32>
    %c0_10 = arith.constant 0 : index
    %c0_11 = arith.constant 0 : index
    %c0_12 = arith.constant 0 : index
    %14 = vector.load %arg13[%c0_10, %c0_11, %c0_12] : memref<4x8x1xf32, #tpu.memory_space<vmem>>, vector<1x8x1xf32>
    %15 = vector.shape_cast %14 : vector<1x8x1xf32> to vector<8x1xf32>
    %cst_13 = arith.constant dense<0xFF800000> : vector<8xf32>
    %16 = vector.multi_reduction <maximumf>, %13, %cst_13 [1] : vector<8x8xf32> to vector<8xf32>
    %17 = vector.shape_cast %16 : vector<8xf32> to vector<8x1xf32>
    %18 = arith.maximumf %15, %17 : vector<8x1xf32>
    %19 = arith.subf %15, %18 : vector<8x1xf32>
    %20 = math.exp %19 : vector<8x1xf32>
    %21 = vector.broadcast %18 : vector<8x1xf32> to vector<8x8xf32>
    %22 = arith.subf %13, %21 : vector<8x8xf32>
    %23 = math.exp %22 : vector<8x8xf32>
    %c0_14 = arith.constant 0 : index
    %c0_15 = arith.constant 0 : index
    %c0_16 = arith.constant 0 : index
    %24 = vector.load %arg14[%c0_14, %c0_15, %c0_16] : memref<4x8x1xf32, #tpu.memory_space<vmem>>, vector<1x8x1xf32>
    %25 = vector.shape_cast %24 : vector<1x8x1xf32> to vector<8x1xf32>
    %26 = arith.mulf %20, %25 : vector<8x1xf32>
    %cst_17 = arith.constant dense<0.000000e+00> : vector<8xf32>
    %27 = vector.multi_reduction <add>, %23, %cst_17 [1] : vector<8x8xf32> to vector<8xf32>
    %28 = vector.shape_cast %27 : vector<8xf32> to vector<8x1xf32>
    %29 = arith.addf %26, %28 : vector<8x1xf32>
    %c0_18 = arith.constant 0 : index
    %c0_19 = arith.constant 0 : index
    %c0_20 = arith.constant 0 : index
    %30 = vector.load %arg14[%c0_18, %c0_19, %c0_20] : memref<4x8x1xf32, #tpu.memory_space<vmem>>, vector<1x8x1xf32>
    %31 = vector.shape_cast %30 : vector<1x8x1xf32> to vector<8x1xf32>
    %32 = vector.shape_cast %29 : vector<8x1xf32> to vector<1x8x1xf32>
    tpu.vector_store %arg14[%c0_18, %c0_19, %c0_20], %32 {strides = array<i32>} : memref<4x8x1xf32, #tpu.memory_space<vmem>>, vector<1x8x1xf32>,
    %c0_21 = arith.constant 0 : index
    %c0_22 = arith.constant 0 : index
    %33 = vector.load %arg15[%c0_21, %c0_22] : memref<8x32xf32, #tpu.memory_space<vmem>>, vector<8x8xf32>
    %34 = vector.broadcast %20 : vector<8x1xf32> to vector<8x8xf32>
    %35 = arith.mulf %34, %33 : vector<8x8xf32>
    %cst_23 = arith.constant dense<0.000000e+00> : vector<8x8xf32>
    %36 = tpu.matmul %23, %12, %cst_23 {dimension_numbers = #tpu.dot_dimension_numbers<[1], [0], [0], [1], [0, 0, 1, 1], [], []>} : vector<8x8xf32>, vector<8x8xf32>, vector<8x8xf32> -> vector<8x8xf32>
    %37 = arith.addf %35, %36 : vector<8x8xf32>
    %c0_24 = arith.constant 0 : index
    %c0_25 = arith.constant 0 : index
    %38 = vector.load %arg15[%c0_24, %c0_25] : memref<8x32xf32, #tpu.memory_space<vmem>>, vector<8x8xf32>
    tpu.vector_store %arg15[%c0_24, %c0_25], %37 {strides = array<i32>} : memref<8x32xf32, #tpu.memory_space<vmem>>, vector<8x8xf32>,
    %c0_26 = arith.constant 0 : index
    %c0_27 = arith.constant 0 : index
    %c0_28 = arith.constant 0 : index
    %39 = vector.load %arg13[%c0_26, %c0_27, %c0_28] : memref<4x8x1xf32, #tpu.memory_space<vmem>>, vector<1x8x1xf32>
    %40 = vector.shape_cast %39 : vector<1x8x1xf32> to vector<8x1xf32>
    %41 = vector.shape_cast %18 : vector<8x1xf32> to vector<1x8x1xf32>
    tpu.vector_store %arg13[%c0_26, %c0_27, %c0_28], %41 {strides = array<i32>} : memref<4x8x1xf32, #tpu.memory_space<vmem>>, vector<1x8x1xf32>,
    %c0_29 = arith.constant 0 : index
    %c8 = arith.constant 8 : index
    %42 = vector.load %arg12[%c0_29, %c8] : memref<8x32xf32, #tpu.memory_space<vmem>>, vector<8x8xf32>
    %43 = vector.extract_strided_slice %9 {offsets = [0, 8], sizes = [8, 8], strides = [1, 1]} : vector<8x64xf32> to vector<8x8xf32>
    %44 = vector.extract_strided_slice %9 {offsets = [0, 40], sizes = [8, 8], strides = [1, 1]} : vector<8x64xf32> to vector<8x8xf32>
    %cst_30 = arith.constant dense<0.000000e+00> : vector<8x8xf32>
    %45 = tpu.matmul %42, %43, %cst_30 {dimension_numbers = #tpu.dot_dimension_numbers<[1], [1], [0], [0], [0, 0, 1, 0], [], []>} : vector<8x8xf32>, vector<8x8xf32>, vector<8x8xf32> -> vector<8x8xf32>
    %c1 = arith.constant 1 : index
    %c0_31 = arith.constant 0 : index
    %c0_32 = arith.constant 0 : index
    %46 = vector.load %arg13[%c1, %c0_31, %c0_32] : memref<4x8x1xf32, #tpu.memory_space<vmem>>, vector<1x8x1xf32>
    %47 = vector.shape_cast %46 : vector<1x8x1xf32> to vector<8x1xf32>
    %cst_33 = arith.constant dense<0xFF800000> : vector<8xf32>
    %48 = vector.multi_reduction <maximumf>, %45, %cst_33 [1] : vector<8x8xf32> to vector<8xf32>
    %49 = vector.shape_cast %48 : vector<8xf32> to vector<8x1xf32>
    %50 = arith.maximumf %47, %49 : vector<8x1xf32>
    %51 = arith.subf %47, %50 : vector<8x1xf32>
    %52 = math.exp %51 : vector<8x1xf32>
    %53 = vector.broadcast %50 : vector<8x1xf32> to vector<8x8xf32>
    %54 = arith.subf %45, %53 : vector<8x8xf32>
    %55 = math.exp %54 : vector<8x8xf32>
    %c1_34 = arith.constant 1 : index
    %c0_35 = arith.constant 0 : index
    %c0_36 = arith.constant 0 : index
    %56 = vector.load %arg14[%c1_34, %c0_35, %c0_36] : memref<4x8x1xf32, #tpu.memory_space<vmem>>, vector<1x8x1xf32>
    %57 = vector.shape_cast %56 : vector<1x8x1xf32> to vector<8x1xf32>
    %58 = arith.mulf %52, %57 : vector<8x1xf32>
    %cst_37 = arith.constant dense<0.000000e+00> : vector<8xf32>
    %59 = vector.multi_reduction <add>, %55, %cst_37 [1] : vector<8x8xf32> to vector<8xf32>
    %60 = vector.shape_cast %59 : vector<8xf32> to vector<8x1xf32>
    %61 = arith.addf %58, %60 : vector<8x1xf32>
    %c1_38 = arith.constant 1 : index
    %c0_39 = arith.constant 0 : index
    %c0_40 = arith.constant 0 : index
    %62 = vector.load %arg14[%c1_38, %c0_39, %c0_40] : memref<4x8x1xf32, #tpu.memory_space<vmem>>, vector<1x8x1xf32>
    %63 = vector.shape_cast %62 : vector<1x8x1xf32> to vector<8x1xf32>
    %64 = vector.shape_cast %61 : vector<8x1xf32> to vector<1x8x1xf32>
    tpu.vector_store %arg14[%c1_38, %c0_39, %c0_40], %64 {strides = array<i32>} : memref<4x8x1xf32, #tpu.memory_space<vmem>>, vector<1x8x1xf32>,
    %c0_41 = arith.constant 0 : index
    %c8_42 = arith.constant 8 : index
    %65 = vector.load %arg15[%c0_41, %c8_42] : memref<8x32xf32, #tpu.memory_space<vmem>>, vector<8x8xf32>
    %66 = vector.broadcast %52 : vector<8x1xf32> to vector<8x8xf32>
    %67 = arith.mulf %66, %65 : vector<8x8xf32>
    %cst_43 = arith.constant dense<0.000000e+00> : vector<8x8xf32>
    %68 = tpu.matmul %55, %44, %cst_43 {dimension_numbers = #tpu.dot_dimension_numbers<[1], [0], [0], [1], [0, 0, 1, 1], [], []>} : vector<8x8xf32>, vector<8x8xf32>, vector<8x8xf32> -> vector<8x8xf32>
    %69 = arith.addf %67, %68 : vector<8x8xf32>
    %c0_44 = arith.constant 0 : index
    %c8_45 = arith.constant 8 : index
    %70 = vector.load %arg15[%c0_44, %c8_45] : memref<8x32xf32, #tpu.memory_space<vmem>>, vector<8x8xf32>
    tpu.vector_store %arg15[%c0_44, %c8_45], %69 {strides = array<i32>} : memref<8x32xf32, #tpu.memory_space<vmem>>, vector<8x8xf32>,
    %c1_46 = arith.constant 1 : index
    %c0_47 = arith.constant 0 : index
    %c0_48 = arith.constant 0 : index
    %71 = vector.load %arg13[%c1_46, %c0_47, %c0_48] : memref<4x8x1xf32, #tpu.memory_space<vmem>>, vector<1x8x1xf32>
    %72 = vector.shape_cast %71 : vector<1x8x1xf32> to vector<8x1xf32>
    %73 = vector.shape_cast %50 : vector<8x1xf32> to vector<1x8x1xf32>
    tpu.vector_store %arg13[%c1_46, %c0_47, %c0_48], %73 {strides = array<i32>} : memref<4x8x1xf32, #tpu.memory_space<vmem>>, vector<1x8x1xf32>,
    %c0_49 = arith.constant 0 : index
    %c16 = arith.constant 16 : index
    %74 = vector.load %arg12[%c0_49, %c16] : memref<8x32xf32, #tpu.memory_space<vmem>>, vector<8x8xf32>
    %75 = vector.extract_strided_slice %9 {offsets = [0, 16], sizes = [8, 8], strides = [1, 1]} : vector<8x64xf32> to vector<8x8xf32>
    %76 = vector.extract_strided_slice %9 {offsets = [0, 48], sizes = [8, 8], strides = [1, 1]} : vector<8x64xf32> to vector<8x8xf32>
    %cst_50 = arith.constant dense<0.000000e+00> : vector<8x8xf32>
    %77 = tpu.matmul %74, %75, %cst_50 {dimension_numbers = #tpu.dot_dimension_numbers<[1], [1], [0], [0], [0, 0, 1, 0], [], []>} : vector<8x8xf32>, vector<8x8xf32>, vector<8x8xf32> -> vector<8x8xf32>
    %c2 = arith.constant 2 : index
    %c0_51 = arith.constant 0 : index
    %c0_52 = arith.constant 0 : index
    %78 = vector.load %arg13[%c2, %c0_51, %c0_52] : memref<4x8x1xf32, #tpu.memory_space<vmem>>, vector<1x8x1xf32>
    %79 = vector.shape_cast %78 : vector<1x8x1xf32> to vector<8x1xf32>
    %cst_53 = arith.constant dense<0xFF800000> : vector<8xf32>
    %80 = vector.multi_reduction <maximumf>, %77, %cst_53 [1] : vector<8x8xf32> to vector<8xf32>
    %81 = vector.shape_cast %80 : vector<8xf32> to vector<8x1xf32>
    %82 = arith.maximumf %79, %81 : vector<8x1xf32>
    %83 = arith.subf %79, %82 : vector<8x1xf32>
    %84 = math.exp %83 : vector<8x1xf32>
    %85 = vector.broadcast %82 : vector<8x1xf32> to vector<8x8xf32>
    %86 = arith.subf %77, %85 : vector<8x8xf32>
    %87 = math.exp %86 : vector<8x8xf32>
    %c2_54 = arith.constant 2 : index
    %c0_55 = arith.constant 0 : index
    %c0_56 = arith.constant 0 : index
    %88 = vector.load %arg14[%c2_54, %c0_55, %c0_56] : memref<4x8x1xf32, #tpu.memory_space<vmem>>, vector<1x8x1xf32>
    %89 = vector.shape_cast %88 : vector<1x8x1xf32> to vector<8x1xf32>
    %90 = arith.mulf %84, %89 : vector<8x1xf32>
    %cst_57 = arith.constant dense<0.000000e+00> : vector<8xf32>
    %91 = vector.multi_reduction <add>, %87, %cst_57 [1] : vector<8x8xf32> to vector<8xf32>
    %92 = vector.shape_cast %91 : vector<8xf32> to vector<8x1xf32>
    %93 = arith.addf %90, %92 : vector<8x1xf32>
    %c2_58 = arith.constant 2 : index
    %c0_59 = arith.constant 0 : index
    %c0_60 = arith.constant 0 : index
    %94 = vector.load %arg14[%c2_58, %c0_59, %c0_60] : memref<4x8x1xf32, #tpu.memory_space<vmem>>, vector<1x8x1xf32>
    %95 = vector.shape_cast %94 : vector<1x8x1xf32> to vector<8x1xf32>
    %96 = vector.shape_cast %93 : vector<8x1xf32> to vector<1x8x1xf32>
    tpu.vector_store %arg14[%c2_58, %c0_59, %c0_60], %96 {strides = array<i32>} : memref<4x8x1xf32, #tpu.memory_space<vmem>>, vector<1x8x1xf32>,
    %c0_61 = arith.constant 0 : index
    %c16_62 = arith.constant 16 : index
    %97 = vector.load %arg15[%c0_61, %c16_62] : memref<8x32xf32, #tpu.memory_space<vmem>>, vector<8x8xf32>
    %98 = vector.broadcast %84 : vector<8x1xf32> to vector<8x8xf32>
    %99 = arith.mulf %98, %97 : vector<8x8xf32>
    %cst_63 = arith.constant dense<0.000000e+00> : vector<8x8xf32>
    %100 = tpu.matmul %87, %76, %cst_63 {dimension_numbers = #tpu.dot_dimension_numbers<[1], [0], [0], [1], [0, 0, 1, 1], [], []>} : vector<8x8xf32>, vector<8x8xf32>, vector<8x8xf32> -> vector<8x8xf32>
    %101 = arith.addf %99, %100 : vector<8x8xf32>
    %c0_64 = arith.constant 0 : index
    %c16_65 = arith.constant 16 : index
    %102 = vector.load %arg15[%c0_64, %c16_65] : memref<8x32xf32, #tpu.memory_space<vmem>>, vector<8x8xf32>
    tpu.vector_store %arg15[%c0_64, %c16_65], %101 {strides = array<i32>} : memref<8x32xf32, #tpu.memory_space<vmem>>, vector<8x8xf32>,
    %c2_66 = arith.constant 2 : index
    %c0_67 = arith.constant 0 : index
    %c0_68 = arith.constant 0 : index
    %103 = vector.load %arg13[%c2_66, %c0_67, %c0_68] : memref<4x8x1xf32, #tpu.memory_space<vmem>>, vector<1x8x1xf32>
    %104 = vector.shape_cast %103 : vector<1x8x1xf32> to vector<8x1xf32>
    %105 = vector.shape_cast %82 : vector<8x1xf32> to vector<1x8x1xf32>
    tpu.vector_store %arg13[%c2_66, %c0_67, %c0_68], %105 {strides = array<i32>} : memref<4x8x1xf32, #tpu.memory_space<vmem>>, vector<1x8x1xf32>,
    %c0_69 = arith.constant 0 : index
    %c24 = arith.constant 24 : index
    %106 = vector.load %arg12[%c0_69, %c24] : memref<8x32xf32, #tpu.memory_space<vmem>>, vector<8x8xf32>
    %107 = vector.extract_strided_slice %9 {offsets = [0, 24], sizes = [8, 8], strides = [1, 1]} : vector<8x64xf32> to vector<8x8xf32>
    %108 = vector.extract_strided_slice %9 {offsets = [0, 56], sizes = [8, 8], strides = [1, 1]} : vector<8x64xf32> to vector<8x8xf32>
    %cst_70 = arith.constant dense<0.000000e+00> : vector<8x8xf32>
    %109 = tpu.matmul %106, %107, %cst_70 {dimension_numbers = #tpu.dot_dimension_numbers<[1], [1], [0], [0], [0, 0, 1, 0], [], []>} : vector<8x8xf32>, vector<8x8xf32>, vector<8x8xf32> -> vector<8x8xf32>
    %c3 = arith.constant 3 : index
    %c0_71 = arith.constant 0 : index
    %c0_72 = arith.constant 0 : index
    %110 = vector.load %arg13[%c3, %c0_71, %c0_72] : memref<4x8x1xf32, #tpu.memory_space<vmem>>, vector<1x8x1xf32>
    %111 = vector.shape_cast %110 : vector<1x8x1xf32> to vector<8x1xf32>
    %cst_73 = arith.constant dense<0xFF800000> : vector<8xf32>
    %112 = vector.multi_reduction <maximumf>, %109, %cst_73 [1] : vector<8x8xf32> to vector<8xf32>
    %113 = vector.shape_cast %112 : vector<8xf32> to vector<8x1xf32>
    %114 = arith.maximumf %111, %113 : vector<8x1xf32>
    %115 = arith.subf %111, %114 : vector<8x1xf32>
    %116 = math.exp %115 : vector<8x1xf32>
    %117 = vector.broadcast %114 : vector<8x1xf32> to vector<8x8xf32>
    %118 = arith.subf %109, %117 : vector<8x8xf32>
    %119 = math.exp %118 : vector<8x8xf32>
    %c3_74 = arith.constant 3 : index
    %c0_75 = arith.constant 0 : index
    %c0_76 = arith.constant 0 : index
    %120 = vector.load %arg14[%c3_74, %c0_75, %c0_76] : memref<4x8x1xf32, #tpu.memory_space<vmem>>, vector<1x8x1xf32>
    %121 = vector.shape_cast %120 : vector<1x8x1xf32> to vector<8x1xf32>
    %122 = arith.mulf %116, %121 : vector<8x1xf32>
    %cst_77 = arith.constant dense<0.000000e+00> : vector<8xf32>
    %123 = vector.multi_reduction <add>, %119, %cst_77 [1] : vector<8x8xf32> to vector<8xf32>
    %124 = vector.shape_cast %123 : vector<8xf32> to vector<8x1xf32>
    %125 = arith.addf %122, %124 : vector<8x1xf32>
    %c3_78 = arith.constant 3 : index
    %c0_79 = arith.constant 0 : index
    %c0_80 = arith.constant 0 : index
    %126 = vector.load %arg14[%c3_78, %c0_79, %c0_80] : memref<4x8x1xf32, #tpu.memory_space<vmem>>, vector<1x8x1xf32>
    %127 = vector.shape_cast %126 : vector<1x8x1xf32> to vector<8x1xf32>
    %128 = vector.shape_cast %125 : vector<8x1xf32> to vector<1x8x1xf32>
    tpu.vector_store %arg14[%c3_78, %c0_79, %c0_80], %128 {strides = array<i32>} : memref<4x8x1xf32, #tpu.memory_space<vmem>>, vector<1x8x1xf32>,
    %c0_81 = arith.constant 0 : index
    %c24_82 = arith.constant 24 : index
    %129 = vector.load %arg15[%c0_81, %c24_82] : memref<8x32xf32, #tpu.memory_space<vmem>>, vector<8x8xf32>
    %130 = vector.broadcast %116 : vector<8x1xf32> to vector<8x8xf32>
    %131 = arith.mulf %130, %129 : vector<8x8xf32>
    %cst_83 = arith.constant dense<0.000000e+00> : vector<8x8xf32>
    %132 = tpu.matmul %119, %108, %cst_83 {dimension_numbers = #tpu.dot_dimension_numbers<[1], [0], [0], [1], [0, 0, 1, 1], [], []>} : vector<8x8xf32>, vector<8x8xf32>, vector<8x8xf32> -> vector<8x8xf32>
    %133 = arith.addf %131, %132 : vector<8x8xf32>
    %c0_84 = arith.constant 0 : index
    %c24_85 = arith.constant 24 : index
    %134 = vector.load %arg15[%c0_84, %c24_85] : memref<8x32xf32, #tpu.memory_space<vmem>>, vector<8x8xf32>
    tpu.vector_store %arg15[%c0_84, %c24_85], %133 {strides = array<i32>} : memref<8x32xf32, #tpu.memory_space<vmem>>, vector<8x8xf32>,
    %c3_86 = arith.constant 3 : index
    %c0_87 = arith.constant 0 : index
    %c0_88 = arith.constant 0 : index
    %135 = vector.load %arg13[%c3_86, %c0_87, %c0_88] : memref<4x8x1xf32, #tpu.memory_space<vmem>>, vector<1x8x1xf32>
    %136 = vector.shape_cast %135 : vector<1x8x1xf32> to vector<8x1xf32>
    %137 = vector.shape_cast %114 : vector<8x1xf32> to vector<1x8x1xf32>
    tpu.vector_store %arg13[%c3_86, %c0_87, %c0_88], %137 {strides = array<i32>} : memref<4x8x1xf32, #tpu.memory_space<vmem>>, vector<1x8x1xf32>,
    %c0_i32_89 = arith.constant 0 : i32
    %138 = arith.cmpi eq, %arg2, %c0_i32_89 : i32
    %139 = arith.extui %138 : i1 to i32
    %c0_i32_90 = arith.constant 0 : i32
    %140 = arith.cmpi ne, %139, %c0_i32_90 : i32
    scf.if %140 {
      %c0_91 = arith.constant 0 : index
      %c0_92 = arith.constant 0 : index
      %c0_93 = arith.constant 0 : index
      %141 = vector.load %arg14[%c0_91, %c0_92, %c0_93] : memref<4x8x1xf32, #tpu.memory_space<vmem>>, vector<1x8x1xf32>
      %142 = vector.shape_cast %141 : vector<1x8x1xf32> to vector<8x1xf32>
      %143 = tpu.reciprocal %142 {approx = true} : vector<8x1xf32> -> vector<8x1xf32>
      %c0_94 = arith.constant 0 : index
      %c0_95 = arith.constant 0 : index
      %144 = vector.load %arg15[%c0_94, %c0_95] : memref<8x32xf32, #tpu.memory_space<vmem>>, vector<8x8xf32>
      %145 = vector.broadcast %143 : vector<8x1xf32> to vector<8x8xf32>
      %146 = arith.mulf %144, %145 : vector<8x8xf32>
      %c0_96 = arith.constant 0 : index
      %c0_97 = arith.constant 0 : index
      %147 = vector.load %arg15[%c0_96, %c0_97] : memref<8x32xf32, #tpu.memory_space<vmem>>, vector<8x8xf32>
      tpu.vector_store %arg15[%c0_96, %c0_97], %146 {strides = array<i32>} : memref<8x32xf32, #tpu.memory_space<vmem>>, vector<8x8xf32>,
      %c1_98 = arith.constant 1 : index
      %c0_99 = arith.constant 0 : index
      %c0_100 = arith.constant 0 : index
      %148 = vector.load %arg14[%c1_98, %c0_99, %c0_100] : memref<4x8x1xf32, #tpu.memory_space<vmem>>, vector<1x8x1xf32>
      %149 = vector.shape_cast %148 : vector<1x8x1xf32> to vector<8x1xf32>
      %150 = tpu.reciprocal %149 {approx = true} : vector<8x1xf32> -> vector<8x1xf32>
      %c0_101 = arith.constant 0 : index
      %c8_102 = arith.constant 8 : index
      %151 = vector.load %arg15[%c0_101, %c8_102] : memref<8x32xf32, #tpu.memory_space<vmem>>, vector<8x8xf32>
      %152 = vector.broadcast %150 : vector<8x1xf32> to vector<8x8xf32>
      %153 = arith.mulf %151, %152 : vector<8x8xf32>
      %c0_103 = arith.constant 0 : index
      %c8_104 = arith.constant 8 : index
      %154 = vector.load %arg15[%c0_103, %c8_104] : memref<8x32xf32, #tpu.memory_space<vmem>>, vector<8x8xf32>
      tpu.vector_store %arg15[%c0_103, %c8_104], %153 {strides = array<i32>} : memref<8x32xf32, #tpu.memory_space<vmem>>, vector<8x8xf32>,
      %c2_105 = arith.constant 2 : index
      %c0_106 = arith.constant 0 : index
      %c0_107 = arith.constant 0 : index
      %155 = vector.load %arg14[%c2_105, %c0_106, %c0_107] : memref<4x8x1xf32, #tpu.memory_space<vmem>>, vector<1x8x1xf32>
      %156 = vector.shape_cast %155 : vector<1x8x1xf32> to vector<8x1xf32>
      %157 = tpu.reciprocal %156 {approx = true} : vector<8x1xf32> -> vector<8x1xf32>
      %c0_108 = arith.constant 0 : index
      %c16_109 = arith.constant 16 : index
      %158 = vector.load %arg15[%c0_108, %c16_109] : memref<8x32xf32, #tpu.memory_space<vmem>>, vector<8x8xf32>
      %159 = vector.broadcast %157 : vector<8x1xf32> to vector<8x8xf32>
      %160 = arith.mulf %158, %159 : vector<8x8xf32>
      %c0_110 = arith.constant 0 : index
      %c16_111 = arith.constant 16 : index
      %161 = vector.load %arg15[%c0_110, %c16_111] : memref<8x32xf32, #tpu.memory_space<vmem>>, vector<8x8xf32>
      tpu.vector_store %arg15[%c0_110, %c16_111], %160 {strides = array<i32>} : memref<8x32xf32, #tpu.memory_space<vmem>>, vector<8x8xf32>,
      %c3_112 = arith.constant 3 : index
      %c0_113 = arith.constant 0 : index
      %c0_114 = arith.constant 0 : index
      %162 = vector.load %arg14[%c3_112, %c0_113, %c0_114] : memref<4x8x1xf32, #tpu.memory_space<vmem>>, vector<1x8x1xf32>
      %163 = vector.shape_cast %162 : vector<1x8x1xf32> to vector<8x1xf32>
      %164 = tpu.reciprocal %163 {approx = true} : vector<8x1xf32> -> vector<8x1xf32>
      %c0_115 = arith.constant 0 : index
      %c24_116 = arith.constant 24 : index
      %165 = vector.load %arg15[%c0_115, %c24_116] : memref<8x32xf32, #tpu.memory_space<vmem>>, vector<8x8xf32>
      %166 = vector.broadcast %164 : vector<8x1xf32> to vector<8x8xf32>
      %167 = arith.mulf %165, %166 : vector<8x8xf32>
      %c0_117 = arith.constant 0 : index
      %c24_118 = arith.constant 24 : index
      %168 = vector.load %arg15[%c0_117, %c24_118] : memref<8x32xf32, #tpu.memory_space<vmem>>, vector<8x8xf32>
      tpu.vector_store %arg15[%c0_117, %c24_118], %167 {strides = array<i32>} : memref<8x32xf32, #tpu.memory_space<vmem>>, vector<8x8xf32>,
      %c0_119 = arith.constant 0 : index
      %c0_120 = arith.constant 0 : index
      %169 = vector.load %arg15[%c0_119, %c0_120] : memref<8x32xf32, #tpu.memory_space<vmem>>, vector<8x32xf32>
      %c0_121 = arith.constant 0 : index
      %c0_122 = arith.constant 0 : index
      %170 = vector.load %arg9[%c0_121, %c0_122] : memref<32x32xf32, #tpu.memory_space<vmem>>, vector<32x32xf32>
      %cst_123 = arith.constant dense<0.000000e+00> : vector<8x32xf32>
      %171 = tpu.matmul %169, %170, %cst_123 {dimension_numbers = #tpu.dot_dimension_numbers<[1], [0], [0], [1], [0, 0, 1, 1], [], []>} : vector<8x32xf32>, vector<32x32xf32>, vector<8x32xf32> -> vector<8x32xf32>
      %c0_124 = arith.constant 0 : index
      %c0_125 = arith.constant 0 : index
      %172 = vector.load %arg10[%c0_124, %c0_125] : memref<1x32xf32, #tpu.memory_space<vmem>>, vector<1x32xf32>
      %173 = vector.broadcast %172 : vector<1x32xf32> to vector<8x32xf32>
      %174 = arith.addf %171, %173 : vector<8x32xf32>
      %c0_126 = arith.constant 0 : index
      %c0_127 = arith.constant 0 : index
      %c0_128 = arith.constant 0 : index
      %175 = vector.load %arg11[%c0_126, %c0_127, %c0_128] : memref<1x8x32xf32, #tpu.memory_space<vmem>>, vector<1x8x32xf32>
      %176 = vector.shape_cast %175 : vector<1x8x32xf32> to vector<8x32xf32>
      %177 = vector.shape_cast %174 : vector<8x32xf32> to vector<1x8x32xf32>
      tpu.vector_store %arg11[%c0_126, %c0_127, %c0_128], %177 {strides = array<i32>} : memref<1x8x32xf32, #tpu.memory_space<vmem>>, vector<1x8x32xf32>,
    } else {
    }
    return
  }
  func.func @transform_0(%arg0: i32, %arg1: i32, %arg2: i32) -> (i32, i32, i32) {
    %c0_i32 = arith.constant 0 : i32
    %c0_i32_0 = arith.constant 0 : i32
    return %arg0, %arg1, %c0_i32 : i32, i32, i32
  }
  func.func @transform_1(%arg0: i32, %arg1: i32, %arg2: i32) -> (i32, i32, i32) {
    %c0_i32 = arith.constant 0 : i32
    %c0_i32_0 = arith.constant 0 : i32
    return %arg0, %arg2, %c0_i32 : i32, i32, i32
  }
  func.func @transform_2(%arg0: i32, %arg1: i32, %arg2: i32) -> (i32, i32) {
    %c0_i32 = arith.constant 0 : i32
    %c0_i32_0 = arith.constant 0 : i32
    %c0_i32_1 = arith.constant 0 : i32
    return %c0_i32, %c0_i32_0 : i32, i32
  }
  func.func @transform_3(%arg0: i32, %arg1: i32, %arg2: i32) -> (i32, i32) {
    %c0_i32 = arith.constant 0 : i32
    %c0_i32_0 = arith.constant 0 : i32
    %c0_i32_1 = arith.constant 0 : i32
    return %c0_i32, %c0_i32_0 : i32, i32
  }
  func.func @transform_4(%arg0: i32, %arg1: i32, %arg2: i32) -> (i32, i32) {
    %c0_i32 = arith.constant 0 : i32
    %c0_i32_0 = arith.constant 0 : i32
    %c0_i32_1 = arith.constant 0 : i32
    return %c0_i32, %c0_i32_0 : i32, i32
  }
  func.func @transform_5(%arg0: i32, %arg1: i32, %arg2: i32) -> (i32, i32) {
    %c0_i32 = arith.constant 0 : i32
    %c0_i32_0 = arith.constant 0 : i32
    %c0_i32_1 = arith.constant 0 : i32
    return %c0_i32, %c0_i32_0 : i32, i32
  }
  func.func @transform_6(%arg0: i32, %arg1: i32, %arg2: i32) -> (i32, i32) {
    %c0_i32 = arith.constant 0 : i32
    %c0_i32_0 = arith.constant 0 : i32
    %c0_i32_1 = arith.constant 0 : i32
    return %c0_i32, %c0_i32_0 : i32, i32
  }
  func.func @transform_7(%arg0: i32, %arg1: i32, %arg2: i32) -> (i32, i32) {
    %c0_i32 = arith.constant 0 : i32
    %c0_i32_0 = arith.constant 0 : i32
    %c0_i32_1 = arith.constant 0 : i32
    return %c0_i32, %c0_i32_0 : i32, i32
  }
  func.func @transform_8(%arg0: i32, %arg1: i32, %arg2: i32) -> (i32, i32, i32) {
    %c0_i32 = arith.constant 0 : i32
    %c0_i32_0 = arith.constant 0 : i32
    return %arg0, %arg1, %c0_i32 : i32, i32, i32
  }
}

module attributes {stable_mosaic.version = 11 : i64} {
  func.func @mha_kernel(%arg0: i32, %arg1: i32, %arg2: i32, %arg3: memref<1x8x32xf32, #tpu.memory_space<vmem>>, %arg4: memref<1x8x32xf32, #tpu.memory_space<vmem>>, %arg5: memref<32x32xf32, #tpu.memory_space<vmem>>, %arg6: memref<1x32xf32, #tpu.memory_space<vmem>>, %arg7: memref<32x64xf32, #tpu.memory_space<vmem>>, %arg8: memref<1x64xf32, #tpu.memory_space<vmem>>, %arg9: memref<32x32xf32, #tpu.memory_space<vmem>>, %arg10: memref<1x32xf32, #tpu.memory_space<vmem>>, %arg11: memref<1x8x32xf32, #tpu.memory_space<vmem>>, %arg12: memref<8x32xf32, #tpu.memory_space<vmem>>, %arg13: memref<4x8x1xf32, #tpu.memory_space<vmem>>, %arg14: memref<4x8x1xf32, #tpu.memory_space<vmem>>, %arg15: memref<8x32xf32, #tpu.memory_space<vmem>>) attributes {dimension_semantics = [#tpu.dimension_semantics<parallel>, #tpu.dimension_semantics<parallel>, #tpu.dimension_semantics<arbitrary>], iteration_bounds = array<i64: 2, 1, 1>, scalar_prefetch = 0 : i64, scratch_operands = 4 : i64, tpu.core_type = #tpu.core_type<tc>, window_params = [{transform_indices = @transform_0, window_bounds = array<i64: 1, 8, 32>}, {transform_indices = @transform_1, window_bounds = array<i64: 1, 8, 32>}, {pipeline_mode = #tpu.pipeline_mode<synchronous>, transform_indices = @transform_2, window_bounds = array<i64: 32, 32>}, {pipeline_mode = #tpu.pipeline_mode<synchronous>, transform_indices = @transform_3, window_bounds = array<i64: 1, 32>}, {pipeline_mode = #tpu.pipeline_mode<synchronous>, transform_indices = @transform_4, window_bounds = array<i64: 32, 64>}, {pipeline_mode = #tpu.pipeline_mode<synchronous>, transform_indices = @transform_5, window_bounds = array<i64: 1, 64>}, {pipeline_mode = #tpu.pipeline_mode<synchronous>, transform_indices = @transform_6, window_bounds = array<i64: 32, 32>}, {pipeline_mode = #tpu.pipeline_mode<synchronous>, transform_indices = @transform_7, window_bounds = array<i64: 1, 32>}, {transform_indices = @transform_8, window_bounds = array<i64: 1, 8, 32>}]} {
    %c0_i32 = arith.constant 0 : i32
    %0 = arith.cmpi eq, %arg2, %c0_i32 : i32
    %1 = arith.extui %0 : i1 to i32
    %c0_i32_0 = arith.constant 0 : i32
    %2 = arith.cmpi ne, %1, %c0_i32_0 : i32
    scf.if %2 {
      %c0_91 = arith.constant 0 : index
      %c0_92 = arith.constant 0 : index
      %c0_93 = arith.constant 0 : index
      %141 = vector.load %arg3[%c0_91, %c0_92, %c0_93] : memref<1x8x32xf32, #tpu.memory_space<vmem>>, vector<1x8x32xf32>
      %142 = vector.shape_cast %141 : vector<1x8x32xf32> to vector<8x32xf32>
      %c0_94 = arith.constant 0 : index
      %c0_95 = arith.constant 0 : index
      %143 = vector.load %arg5[%c0_94, %c0_95] : memref<32x32xf32, #tpu.memory_space<vmem>>, vector<32x32xf32>
      %cst_96 = arith.constant dense<0.000000e+00> : vector<8x32xf32>
      %144 = tpu.matmul %142, %143, %cst_96 {dimension_numbers = #tpu.dot_dimension_numbers<[1], [0], [0], [1], [0, 0, 1, 1], [], []>} : vector<8x32xf32>, vector<32x32xf32>, vector<8x32xf32> -> vector<8x32xf32>
      %c0_97 = arith.constant 0 : index
      %c0_98 = arith.constant 0 : index
      %145 = vector.load %arg6[%c0_97, %c0_98] : memref<1x32xf32, #tpu.memory_space<vmem>>, vector<1x32xf32>
      %146 = vector.broadcast %145 : vector<1x32xf32> to vector<8x32xf32>
      %147 = arith.addf %144, %146 : vector<8x32xf32>
      %c0_99 = arith.constant 0 : index
      %c0_100 = arith.constant 0 : index
      %148 = vector.load %arg12[%c0_99, %c0_100] : memref<8x32xf32, #tpu.memory_space<vmem>>, vector<8x32xf32>
      tpu.vector_store %arg12[%c0_99, %c0_100], %147 {strides = array<i32>} : memref<8x32xf32, #tpu.memory_space<vmem>>, vector<8x32xf32>,
      %cst_101 = arith.constant 0xFF800000 : f32
      %149 = vector.broadcast %cst_101 : f32 to vector<4x8x1xf32>
      %c0_102 = arith.constant 0 : index
      %c0_103 = arith.constant 0 : index
      %c0_104 = arith.constant 0 : index
      %150 = vector.load %arg13[%c0_102, %c0_103, %c0_104] : memref<4x8x1xf32, #tpu.memory_space<vmem>>, vector<4x8x1xf32>
      tpu.vector_store %arg13[%c0_102, %c0_103, %c0_104], %149 {strides = array<i32>} : memref<4x8x1xf32, #tpu.memory_space<vmem>>, vector<4x8x1xf32>,
      %cst_105 = arith.constant 0.000000e+00 : f32
      %151 = vector.broadcast %cst_105 : f32 to vector<4x8x1xf32>
      %c0_106 = arith.constant 0 : index
      %c0_107 = arith.constant 0 : index
      %c0_108 = arith.constant 0 : index
      %152 = vector.load %arg14[%c0_106, %c0_107, %c0_108] : memref<4x8x1xf32, #tpu.memory_space<vmem>>, vector<4x8x1xf32>
      tpu.vector_store %arg14[%c0_106, %c0_107, %c0_108], %151 {strides = array<i32>} : memref<4x8x1xf32, #tpu.memory_space<vmem>>, vector<4x8x1xf32>,
      %cst_109 = arith.constant 0.000000e+00 : f32
      %153 = vector.broadcast %cst_109 : f32 to vector<8x32xf32>
      %c0_110 = arith.constant 0 : index
      %c0_111 = arith.constant 0 : index
      %154 = vector.load %arg15[%c0_110, %c0_111] : memref<8x32xf32, #tpu.memory_space<vmem>>, vector<8x32xf32>
      tpu.vector_store %arg15[%c0_110, %c0_111], %153 {strides = array<i32>} : memref<8x32xf32, #tpu.memory_space<vmem>>, vector<8x32xf32>,
    } else {
    }
    %c0 = arith.constant 0 : index
    %c0_1 = arith.constant 0 : index
    %c0_2 = arith.constant 0 : index
    %3 = vector.load %arg4[%c0, %c0_1, %c0_2] : memref<1x8x32xf32, #tpu.memory_space<vmem>>, vector<1x8x32xf32>
    %4 = vector.shape_cast %3 : vector<1x8x32xf32> to vector<8x32xf32>
    %c0_3 = arith.constant 0 : index
    %c0_4 = arith.constant 0 : index
    %5 = vector.load %arg7[%c0_3, %c0_4] : memref<32x64xf32, #tpu.memory_space<vmem>>, vector<32x64xf32>
    %cst = arith.constant dense<0.000000e+00> : vector<8x64xf32>
    %6 = tpu.matmul %4, %5, %cst {dimension_numbers = #tpu.dot_dimension_numbers<[1], [0], [0], [1], [0, 0, 1, 1], [], []>} : vector<8x32xf32>, vector<32x64xf32>, vector<8x64xf32> -> vector<8x64xf32>
    %c0_5 = arith.constant 0 : index
    %c0_6 = arith.constant 0 : index
    %7 = vector.load %arg8[%c0_5, %c0_6] : memref<1x64xf32, #tpu.memory_space<vmem>>, vector<1x64xf32>
    %8 = vector.broadcast %7 : vector<1x64xf32> to vector<8x64xf32>
    %9 = arith.addf %6, %8 : vector<8x64xf32>
    %c0_7 = arith.constant 0 : index
    %c0_8 = arith.constant 0 : index
    %10 = vector.load %arg12[%c0_7, %c0_8] : memref<8x32xf32, #tpu.memory_space<vmem>>, vector<8x8xf32>
    %11 = vector.extract_strided_slice %9 {offsets = [0, 0], sizes = [8, 8], strides = [1, 1]} : vector<8x64xf32> to vector<8x8xf32>
    %12 = vector.extract_strided_slice %9 {offsets = [0, 32], sizes = [8, 8], strides = [1, 1]} : vector<8x64xf32> to vector<8x8xf32>
    %cst_9 = arith.constant dense<0.000000e+00> : vector<8x8xf32>
    %13 = tpu.matmul %10, %11, %cst_9 {dimension_numbers = #tpu.dot_dimension_numbers<[1], [1], [0], [0], [0, 0, 1, 0], [], []>} : vector<8x8xf32>, vector<8x8xf32>, vector<8x8xf32> -> vector<8x8xf32>
    %c0_10 = arith.constant 0 : index
    %c0_11 = arith.constant 0 : index
    %c0_12 = arith.constant 0 : index
    %14 = vector.load %arg13[%c0_10, %c0_11, %c0_12] : memref<4x8x1xf32, #tpu.memory_space<vmem>>, vector<1x8x1xf32>
    %15 = vector.shape_cast %14 : vector<1x8x1xf32> to vector<8x1xf32>
    %cst_13 = arith.constant dense<0xFF800000> : vector<8xf32>
    %16 = vector.multi_reduction <maximumf>, %13, %cst_13 [1] : vector<8x8xf32> to vector<8xf32>
    %17 = vector.shape_cast %16 : vector<8xf32> to vector<8x1xf32>
    %18 = arith.maximumf %15, %17 : vector<8x1xf32>
    %19 = arith.subf %15, %18 : vector<8x1xf32>
    %20 = math.exp %19 : vector<8x1xf32>
    %21 = vector.broadcast %18 : vector<8x1xf32> to vector<8x8xf32>
    %22 = arith.subf %13, %21 : vector<8x8xf32>
    %23 = math.exp %22 : vector<8x8xf32>
    %c0_14 = arith.constant 0 : index
    %c0_15 = arith.constant 0 : index
    %c0_16 = arith.constant 0 : index
    %24 = vector.load %arg14[%c0_14, %c0_15, %c0_16] : memref<4x8x1xf32, #tpu.memory_space<vmem>>, vector<1x8x1xf32>
    %25 = vector.shape_cast %24 : vector<1x8x1xf32> to vector<8x1xf32>
    %26 = arith.mulf %20, %25 : vector<8x1xf32>
    %cst_17 = arith.constant dense<0.000000e+00> : vector<8xf32>
    %27 = vector.multi_reduction <add>, %23, %cst_17 [1] : vector<8x8xf32> to vector<8xf32>
    %28 = vector.shape_cast %27 : vector<8xf32> to vector<8x1xf32>
    %29 = arith.addf %26, %28 : vector<8x1xf32>
    %c0_18 = arith.constant 0 : index
    %c0_19 = arith.constant 0 : index
    %c0_20 = arith.constant 0 : index
    %30 = vector.load %arg14[%c0_18, %c0_19, %c0_20] : memref<4x8x1xf32, #tpu.memory_space<vmem>>, vector<1x8x1xf32>
    %31 = vector.shape_cast %30 : vector<1x8x1xf32> to vector<8x1xf32>
    %32 = vector.shape_cast %29 : vector<8x1xf32> to vector<1x8x1xf32>
    tpu.vector_store %arg14[%c0_18, %c0_19, %c0_20], %32 {strides = array<i32>} : memref<4x8x1xf32, #tpu.memory_space<vmem>>, vector<1x8x1xf32>,
    %c0_21 = arith.constant 0 : index
    %c0_22 = arith.constant 0 : index
    %33 = vector.load %arg15[%c0_21, %c0_22] : memref<8x32xf32, #tpu.memory_space<vmem>>, vector<8x8xf32>
    %34 = vector.broadcast %20 : vector<8x1xf32> to vector<8x8xf32>
    %35 = arith.mulf %34, %33 : vector<8x8xf32>
    %cst_23 = arith.constant dense<0.000000e+00> : vector<8x8xf32>
    %36 = tpu.matmul %23, %12, %cst_23 {dimension_numbers = #tpu.dot_dimension_numbers<[1], [0], [0], [1], [0, 0, 1, 1], [], []>} : vector<8x8xf32>, vector<8x8xf32>, vector<8x8xf32> -> vector<8x8xf32>
    %37 = arith.addf %35, %36 : vector<8x8xf32>
    %c0_24 = arith.constant 0 : index
    %c0_25 = arith.constant 0 : index
    %38 = vector.load %arg15[%c0_24, %c0_25] : memref<8x32xf32, #tpu.memory_space<vmem>>, vector<8x8xf32>
    tpu.vector_store %arg15[%c0_24, %c0_25], %37 {strides = array<i32>} : memref<8x32xf32, #tpu.memory_space<vmem>>, vector<8x8xf32>,
    %c0_26 = arith.constant 0 : index
    %c0_27 = arith.constant 0 : index
    %c0_28 = arith.constant 0 : index
    %39 = vector.load %arg13[%c0_26, %c0_27, %c0_28] : memref<4x8x1xf32, #tpu.memory_space<vmem>>, vector<1x8x1xf32>
    %40 = vector.shape_cast %39 : vector<1x8x1xf32> to vector<8x1xf32>
    %41 = vector.shape_cast %18 : vector<8x1xf32> to vector<1x8x1xf32>
    tpu.vector_store %arg13[%c0_26, %c0_27, %c0_28], %41 {strides = array<i32>} : memref<4x8x1xf32, #tpu.memory_space<vmem>>, vector<1x8x1xf32>,
    %c0_29 = arith.constant 0 : index
    %c8 = arith.constant 8 : index
    %42 = vector.load %arg12[%c0_29, %c8] : memref<8x32xf32, #tpu.memory_space<vmem>>, vector<8x8xf32>
    %43 = vector.extract_strided_slice %9 {offsets = [0, 8], sizes = [8, 8], strides = [1, 1]} : vector<8x64xf32> to vector<8x8xf32>
    %44 = vector.extract_strided_slice %9 {offsets = [0, 40], sizes = [8, 8], strides = [1, 1]} : vector<8x64xf32> to vector<8x8xf32>
    %cst_30 = arith.constant dense<0.000000e+00> : vector<8x8xf32>
    %45 = tpu.matmul %42, %43, %cst_30 {dimension_numbers = #tpu.dot_dimension_numbers<[1], [1], [0], [0], [0, 0, 1, 0], [], []>} : vector<8x8xf32>, vector<8x8xf32>, vector<8x8xf32> -> vector<8x8xf32>
    %c1 = arith.constant 1 : index
    %c0_31 = arith.constant 0 : index
    %c0_32 = arith.constant 0 : index
    %46 = vector.load %arg13[%c1, %c0_31, %c0_32] : memref<4x8x1xf32, #tpu.memory_space<vmem>>, vector<1x8x1xf32>
    %47 = vector.shape_cast %46 : vector<1x8x1xf32> to vector<8x1xf32>
    %cst_33 = arith.constant dense<0xFF800000> : vector<8xf32>
    %48 = vector.multi_reduction <maximumf>, %45, %cst_33 [1] : vector<8x8xf32> to vector<8xf32>
    %49 = vector.shape_cast %48 : vector<8xf32> to vector<8x1xf32>
    %50 = arith.maximumf %47, %49 : vector<8x1xf32>
    %51 = arith.subf %47, %50 : vector<8x1xf32>
    %52 = math.exp %51 : vector<8x1xf32>
    %53 = vector.broadcast %50 : vector<8x1xf32> to vector<8x8xf32>
    %54 = arith.subf %45, %53 : vector<8x8xf32>
    %55 = math.exp %54 : vector<8x8xf32>
    %c1_34 = arith.constant 1 : index
    %c0_35 = arith.constant 0 : index
    %c0_36 = arith.constant 0 : index
    %56 = vector.load %arg14[%c1_34, %c0_35, %c0_36] : memref<4x8x1xf32, #tpu.memory_space<vmem>>, vector<1x8x1xf32>
    %57 = vector.shape_cast %56 : vector<1x8x1xf32> to vector<8x1xf32>
    %58 = arith.mulf %52, %57 : vector<8x1xf32>
    %cst_37 = arith.constant dense<0.000000e+00> : vector<8xf32>
    %59 = vector.multi_reduction <add>, %55, %cst_37 [1] : vector<8x8xf32> to vector<8xf32>
    %60 = vector.shape_cast %59 : vector<8xf32> to vector<8x1xf32>
    %61 = arith.addf %58, %60 : vector<8x1xf32>
    %c1_38 = arith.constant 1 : index
    %c0_39 = arith.constant 0 : index
    %c0_40 = arith.constant 0 : index
    %62 = vector.load %arg14[%c1_38, %c0_39, %c0_40] : memref<4x8x1xf32, #tpu.memory_space<vmem>>, vector<1x8x1xf32>
    %63 = vector.shape_cast %62 : vector<1x8x1xf32> to vector<8x1xf32>
    %64 = vector.shape_cast %61 : vector<8x1xf32> to vector<1x8x1xf32>
    tpu.vector_store %arg14[%c1_38, %c0_39, %c0_40], %64 {strides = array<i32>} : memref<4x8x1xf32, #tpu.memory_space<vmem>>, vector<1x8x1xf32>,
    %c0_41 = arith.constant 0 : index
    %c8_42 = arith.constant 8 : index
    %65 = vector.load %arg15[%c0_41, %c8_42] : memref<8x32xf32, #tpu.memory_space<vmem>>, vector<8x8xf32>
    %66 = vector.broadcast %52 : vector<8x1xf32> to vector<8x8xf32>
    %67 = arith.mulf %66, %65 : vector<8x8xf32>
    %cst_43 = arith.constant dense<0.000000e+00> : vector<8x8xf32>
    %68 = tpu.matmul %55, %44, %cst_43 {dimension_numbers = #tpu.dot_dimension_numbers<[1], [0], [0], [1], [0, 0, 1, 1], [], []>} : vector<8x8xf32>, vector<8x8xf32>, vector<8x8xf32> -> vector<8x8xf32>
    %69 = arith.addf %67, %68 : vector<8x8xf32>
    %c0_44 = arith.constant 0 : index
    %c8_45 = arith.constant 8 : index
    %70 = vector.load %arg15[%c0_44, %c8_45] : memref<8x32xf32, #tpu.memory_space<vmem>>, vector<8x8xf32>
    tpu.vector_store %arg15[%c0_44, %c8_45], %69 {strides = array<i32>} : memref<8x32xf32, #tpu.memory_space<vmem>>, vector<8x8xf32>,
    %c1_46 = arith.constant 1 : index
    %c0_47 = arith.constant 0 : index
    %c0_48 = arith.constant 0 : index
    %71 = vector.load %arg13[%c1_46, %c0_47, %c0_48] : memref<4x8x1xf32, #tpu.memory_space<vmem>>, vector<1x8x1xf32>
    %72 = vector.shape_cast %71 : vector<1x8x1xf32> to vector<8x1xf32>
    %73 = vector.shape_cast %50 : vector<8x1xf32> to vector<1x8x1xf32>
    tpu.vector_store %arg13[%c1_46, %c0_47, %c0_48], %73 {strides = array<i32>} : memref<4x8x1xf32, #tpu.memory_space<vmem>>, vector<1x8x1xf32>,
    %c0_49 = arith.constant 0 : index
    %c16 = arith.constant 16 : index
    %74 = vector.load %arg12[%c0_49, %c16] : memref<8x32xf32, #tpu.memory_space<vmem>>, vector<8x8xf32>
    %75 = vector.extract_strided_slice %9 {offsets = [0, 16], sizes = [8, 8], strides = [1, 1]} : vector<8x64xf32> to vector<8x8xf32>
    %76 = vector.extract_strided_slice %9 {offsets = [0, 48], sizes = [8, 8], strides = [1, 1]} : vector<8x64xf32> to vector<8x8xf32>
    %cst_50 = arith.constant dense<0.000000e+00> : vector<8x8xf32>
    %77 = tpu.matmul %74, %75, %cst_50 {dimension_numbers = #tpu.dot_dimension_numbers<[1], [1], [0], [0], [0, 0, 1, 0], [], []>} : vector<8x8xf32>, vector<8x8xf32>, vector<8x8xf32> -> vector<8x8xf32>
    %c2 = arith.constant 2 : index
    %c0_51 = arith.constant 0 : index
    %c0_52 = arith.constant 0 : index
    %78 = vector.load %arg13[%c2, %c0_51, %c0_52] : memref<4x8x1xf32, #tpu.memory_space<vmem>>, vector<1x8x1xf32>
    %79 = vector.shape_cast %78 : vector<1x8x1xf32> to vector<8x1xf32>
    %cst_53 = arith.constant dense<0xFF800000> : vector<8xf32>
    %80 = vector.multi_reduction <maximumf>, %77, %cst_53 [1] : vector<8x8xf32> to vector<8xf32>
    %81 = vector.shape_cast %80 : vector<8xf32> to vector<8x1xf32>
    %82 = arith.maximumf %79, %81 : vector<8x1xf32>
    %83 = arith.subf %79, %82 : vector<8x1xf32>
    %84 = math.exp %83 : vector<8x1xf32>
    %85 = vector.broadcast %82 : vector<8x1xf32> to vector<8x8xf32>
    %86 = arith.subf %77, %85 : vector<8x8xf32>
    %87 = math.exp %86 : vector<8x8xf32>
    %c2_54 = arith.constant 2 : index
    %c0_55 = arith.constant 0 : index
    %c0_56 = arith.constant 0 : index
    %88 = vector.load %arg14[%c2_54, %c0_55, %c0_56] : memref<4x8x1xf32, #tpu.memory_space<vmem>>, vector<1x8x1xf32>
    %89 = vector.shape_cast %88 : vector<1x8x1xf32> to vector<8x1xf32>
    %90 = arith.mulf %84, %89 : vector<8x1xf32>
    %cst_57 = arith.constant dense<0.000000e+00> : vector<8xf32>
    %91 = vector.multi_reduction <add>, %87, %cst_57 [1] : vector<8x8xf32> to vector<8xf32>
    %92 = vector.shape_cast %91 : vector<8xf32> to vector<8x1xf32>
    %93 = arith.addf %90, %92 : vector<8x1xf32>
    %c2_58 = arith.constant 2 : index
    %c0_59 = arith.constant 0 : index
    %c0_60 = arith.constant 0 : index
    %94 = vector.load %arg14[%c2_58, %c0_59, %c0_60] : memref<4x8x1xf32, #tpu.memory_space<vmem>>, vector<1x8x1xf32>
    %95 = vector.shape_cast %94 : vector<1x8x1xf32> to vector<8x1xf32>
    %96 = vector.shape_cast %93 : vector<8x1xf32> to vector<1x8x1xf32>
    tpu.vector_store %arg14[%c2_58, %c0_59, %c0_60], %96 {strides = array<i32>} : memref<4x8x1xf32, #tpu.memory_space<vmem>>, vector<1x8x1xf32>,
    %c0_61 = arith.constant 0 : index
    %c16_62 = arith.constant 16 : index
    %97 = vector.load %arg15[%c0_61, %c16_62] : memref<8x32xf32, #tpu.memory_space<vmem>>, vector<8x8xf32>
    %98 = vector.broadcast %84 : vector<8x1xf32> to vector<8x8xf32>
    %99 = arith.mulf %98, %97 : vector<8x8xf32>
    %cst_63 = arith.constant dense<0.000000e+00> : vector<8x8xf32>
    %100 = tpu.matmul %87, %76, %cst_63 {dimension_numbers = #tpu.dot_dimension_numbers<[1], [0], [0], [1], [0, 0, 1, 1], [], []>} : vector<8x8xf32>, vector<8x8xf32>, vector<8x8xf32> -> vector<8x8xf32>
    %101 = arith.addf %99, %100 : vector<8x8xf32>
    %c0_64 = arith.constant 0 : index
    %c16_65 = arith.constant 16 : index
    %102 = vector.load %arg15[%c0_64, %c16_65] : memref<8x32xf32, #tpu.memory_space<vmem>>, vector<8x8xf32>
    tpu.vector_store %arg15[%c0_64, %c16_65], %101 {strides = array<i32>} : memref<8x32xf32, #tpu.memory_space<vmem>>, vector<8x8xf32>,
    %c2_66 = arith.constant 2 : index
    %c0_67 = arith.constant 0 : index
    %c0_68 = arith.constant 0 : index
    %103 = vector.load %arg13[%c2_66, %c0_67, %c0_68] : memref<4x8x1xf32, #tpu.memory_space<vmem>>, vector<1x8x1xf32>
    %104 = vector.shape_cast %103 : vector<1x8x1xf32> to vector<8x1xf32>
    %105 = vector.shape_cast %82 : vector<8x1xf32> to vector<1x8x1xf32>
    tpu.vector_store %arg13[%c2_66, %c0_67, %c0_68], %105 {strides = array<i32>} : memref<4x8x1xf32, #tpu.memory_space<vmem>>, vector<1x8x1xf32>,
    %c0_69 = arith.constant 0 : index
    %c24 = arith.constant 24 : index
    %106 = vector.load %arg12[%c0_69, %c24] : memref<8x32xf32, #tpu.memory_space<vmem>>, vector<8x8xf32>
    %107 = vector.extract_strided_slice %9 {offsets = [0, 24], sizes = [8, 8], strides = [1, 1]} : vector<8x64xf32> to vector<8x8xf32>
    %108 = vector.extract_strided_slice %9 {offsets = [0, 56], sizes = [8, 8], strides = [1, 1]} : vector<8x64xf32> to vector<8x8xf32>
    %cst_70 = arith.constant dense<0.000000e+00> : vector<8x8xf32>
    %109 = tpu.matmul %106, %107, %cst_70 {dimension_numbers = #tpu.dot_dimension_numbers<[1], [1], [0], [0], [0, 0, 1, 0], [], []>} : vector<8x8xf32>, vector<8x8xf32>, vector<8x8xf32> -> vector<8x8xf32>
    %c3 = arith.constant 3 : index
    %c0_71 = arith.constant 0 : index
    %c0_72 = arith.constant 0 : index
    %110 = vector.load %arg13[%c3, %c0_71, %c0_72] : memref<4x8x1xf32, #tpu.memory_space<vmem>>, vector<1x8x1xf32>
    %111 = vector.shape_cast %110 : vector<1x8x1xf32> to vector<8x1xf32>
    %cst_73 = arith.constant dense<0xFF800000> : vector<8xf32>
    %112 = vector.multi_reduction <maximumf>, %109, %cst_73 [1] : vector<8x8xf32> to vector<8xf32>
    %113 = vector.shape_cast %112 : vector<8xf32> to vector<8x1xf32>
    %114 = arith.maximumf %111, %113 : vector<8x1xf32>
    %115 = arith.subf %111, %114 : vector<8x1xf32>
    %116 = math.exp %115 : vector<8x1xf32>
    %117 = vector.broadcast %114 : vector<8x1xf32> to vector<8x8xf32>
    %118 = arith.subf %109, %117 : vector<8x8xf32>
    %119 = math.exp %118 : vector<8x8xf32>
    %c3_74 = arith.constant 3 : index
    %c0_75 = arith.constant 0 : index
    %c0_76 = arith.constant 0 : index
    %120 = vector.load %arg14[%c3_74, %c0_75, %c0_76] : memref<4x8x1xf32, #tpu.memory_space<vmem>>, vector<1x8x1xf32>
    %121 = vector.shape_cast %120 : vector<1x8x1xf32> to vector<8x1xf32>
    %122 = arith.mulf %116, %121 : vector<8x1xf32>
    %cst_77 = arith.constant dense<0.000000e+00> : vector<8xf32>
    %123 = vector.multi_reduction <add>, %119, %cst_77 [1] : vector<8x8xf32> to vector<8xf32>
    %124 = vector.shape_cast %123 : vector<8xf32> to vector<8x1xf32>
    %125 = arith.addf %122, %124 : vector<8x1xf32>
    %c3_78 = arith.constant 3 : index
    %c0_79 = arith.constant 0 : index
    %c0_80 = arith.constant 0 : index
    %126 = vector.load %arg14[%c3_78, %c0_79, %c0_80] : memref<4x8x1xf32, #tpu.memory_space<vmem>>, vector<1x8x1xf32>
    %127 = vector.shape_cast %126 : vector<1x8x1xf32> to vector<8x1xf32>
    %128 = vector.shape_cast %125 : vector<8x1xf32> to vector<1x8x1xf32>
    tpu.vector_store %arg14[%c3_78, %c0_79, %c0_80], %128 {strides = array<i32>} : memref<4x8x1xf32, #tpu.memory_space<vmem>>, vector<1x8x1xf32>,
    %c0_81 = arith.constant 0 : index
    %c24_82 = arith.constant 24 : index
    %129 = vector.load %arg15[%c0_81, %c24_82] : memref<8x32xf32, #tpu.memory_space<vmem>>, vector<8x8xf32>
    %130 = vector.broadcast %116 : vector<8x1xf32> to vector<8x8xf32>
    %131 = arith.mulf %130, %129 : vector<8x8xf32>
    %cst_83 = arith.constant dense<0.000000e+00> : vector<8x8xf32>
    %132 = tpu.matmul %119, %108, %cst_83 {dimension_numbers = #tpu.dot_dimension_numbers<[1], [0], [0], [1], [0, 0, 1, 1], [], []>} : vector<8x8xf32>, vector<8x8xf32>, vector<8x8xf32> -> vector<8x8xf32>
    %133 = arith.addf %131, %132 : vector<8x8xf32>
    %c0_84 = arith.constant 0 : index
    %c24_85 = arith.constant 24 : index
    %134 = vector.load %arg15[%c0_84, %c24_85] : memref<8x32xf32, #tpu.memory_space<vmem>>, vector<8x8xf32>
    tpu.vector_store %arg15[%c0_84, %c24_85], %133 {strides = array<i32>} : memref<8x32xf32, #tpu.memory_space<vmem>>, vector<8x8xf32>,
    %c3_86 = arith.constant 3 : index
    %c0_87 = arith.constant 0 : index
    %c0_88 = arith.constant 0 : index
    %135 = vector.load %arg13[%c3_86, %c0_87, %c0_88] : memref<4x8x1xf32, #tpu.memory_space<vmem>>, vector<1x8x1xf32>
    %136 = vector.shape_cast %135 : vector<1x8x1xf32> to vector<8x1xf32>
    %137 = vector.shape_cast %114 : vector<8x1xf32> to vector<1x8x1xf32>
    tpu.vector_store %arg13[%c3_86, %c0_87, %c0_88], %137 {strides = array<i32>} : memref<4x8x1xf32, #tpu.memory_space<vmem>>, vector<1x8x1xf32>,
    %c0_i32_89 = arith.constant 0 : i32
    %138 = arith.cmpi eq, %arg2, %c0_i32_89 : i32
    %139 = arith.extui %138 : i1 to i32
    %c0_i32_90 = arith.constant 0 : i32
    %140 = arith.cmpi ne, %139, %c0_i32_90 : i32
    scf.if %140 {
      %c0_91 = arith.constant 0 : index
      %c0_92 = arith.constant 0 : index
      %c0_93 = arith.constant 0 : index
      %141 = vector.load %arg14[%c0_91, %c0_92, %c0_93] : memref<4x8x1xf32, #tpu.memory_space<vmem>>, vector<1x8x1xf32>
      %142 = vector.shape_cast %141 : vector<1x8x1xf32> to vector<8x1xf32>
      %143 = tpu.reciprocal %142 {approx = true} : vector<8x1xf32> -> vector<8x1xf32>
      %c0_94 = arith.constant 0 : index
      %c0_95 = arith.constant 0 : index
      %144 = vector.load %arg15[%c0_94, %c0_95] : memref<8x32xf32, #tpu.memory_space<vmem>>, vector<8x8xf32>
      %145 = vector.broadcast %143 : vector<8x1xf32> to vector<8x8xf32>
      %146 = arith.mulf %144, %145 : vector<8x8xf32>
      %c0_96 = arith.constant 0 : index
      %c0_97 = arith.constant 0 : index
      %147 = vector.load %arg15[%c0_96, %c0_97] : memref<8x32xf32, #tpu.memory_space<vmem>>, vector<8x8xf32>
      tpu.vector_store %arg15[%c0_96, %c0_97], %146 {strides = array<i32>} : memref<8x32xf32, #tpu.memory_space<vmem>>, vector<8x8xf32>,
      %c1_98 = arith.constant 1 : index
      %c0_99 = arith.constant 0 : index
      %c0_100 = arith.constant 0 : index
      %148 = vector.load %arg14[%c1_98, %c0_99, %c0_100] : memref<4x8x1xf32, #tpu.memory_space<vmem>>, vector<1x8x1xf32>
      %149 = vector.shape_cast %148 : vector<1x8x1xf32> to vector<8x1xf32>
      %150 = tpu.reciprocal %149 {approx = true} : vector<8x1xf32> -> vector<8x1xf32>
      %c0_101 = arith.constant 0 : index
      %c8_102 = arith.constant 8 : index
      %151 = vector.load %arg15[%c0_101, %c8_102] : memref<8x32xf32, #tpu.memory_space<vmem>>, vector<8x8xf32>
      %152 = vector.broadcast %150 : vector<8x1xf32> to vector<8x8xf32>
      %153 = arith.mulf %151, %152 : vector<8x8xf32>
      %c0_103 = arith.constant 0 : index
      %c8_104 = arith.constant 8 : index
      %154 = vector.load %arg15[%c0_103, %c8_104] : memref<8x32xf32, #tpu.memory_space<vmem>>, vector<8x8xf32>
      tpu.vector_store %arg15[%c0_103, %c8_104], %153 {strides = array<i32>} : memref<8x32xf32, #tpu.memory_space<vmem>>, vector<8x8xf32>,
      %c2_105 = arith.constant 2 : index
      %c0_106 = arith.constant 0 : index
      %c0_107 = arith.constant 0 : index
      %155 = vector.load %arg14[%c2_105, %c0_106, %c0_107] : memref<4x8x1xf32, #tpu.memory_space<vmem>>, vector<1x8x1xf32>
      %156 = vector.shape_cast %155 : vector<1x8x1xf32> to vector<8x1xf32>
      %157 = tpu.reciprocal %156 {approx = true} : vector<8x1xf32> -> vector<8x1xf32>
      %c0_108 = arith.constant 0 : index
      %c16_109 = arith.constant 16 : index
      %158 = vector.load %arg15[%c0_108, %c16_109] : memref<8x32xf32, #tpu.memory_space<vmem>>, vector<8x8xf32>
      %159 = vector.broadcast %157 : vector<8x1xf32> to vector<8x8xf32>
      %160 = arith.mulf %158, %159 : vector<8x8xf32>
      %c0_110 = arith.constant 0 : index
      %c16_111 = arith.constant 16 : index
      %161 = vector.load %arg15[%c0_110, %c16_111] : memref<8x32xf32, #tpu.memory_space<vmem>>, vector<8x8xf32>
      tpu.vector_store %arg15[%c0_110, %c16_111], %160 {strides = array<i32>} : memref<8x32xf32, #tpu.memory_space<vmem>>, vector<8x8xf32>,
      %c3_112 = arith.constant 3 : index
      %c0_113 = arith.constant 0 : index
      %c0_114 = arith.constant 0 : index
      %162 = vector.load %arg14[%c3_112, %c0_113, %c0_114] : memref<4x8x1xf32, #tpu.memory_space<vmem>>, vector<1x8x1xf32>
      %163 = vector.shape_cast %162 : vector<1x8x1xf32> to vector<8x1xf32>
      %164 = tpu.reciprocal %163 {approx = true} : vector<8x1xf32> -> vector<8x1xf32>
      %c0_115 = arith.constant 0 : index
      %c24_116 = arith.constant 24 : index
      %165 = vector.load %arg15[%c0_115, %c24_116] : memref<8x32xf32, #tpu.memory_space<vmem>>, vector<8x8xf32>
      %166 = vector.broadcast %164 : vector<8x1xf32> to vector<8x8xf32>
      %167 = arith.mulf %165, %166 : vector<8x8xf32>
      %c0_117 = arith.constant 0 : index
      %c24_118 = arith.constant 24 : index
      %168 = vector.load %arg15[%c0_117, %c24_118] : memref<8x32xf32, #tpu.memory_space<vmem>>, vector<8x8xf32>
      tpu.vector_store %arg15[%c0_117, %c24_118], %167 {strides = array<i32>} : memref<8x32xf32, #tpu.memory_space<vmem>>, vector<8x8xf32>,
      %c0_119 = arith.constant 0 : index
      %c0_120 = arith.constant 0 : index
      %169 = vector.load %arg15[%c0_119, %c0_120] : memref<8x32xf32, #tpu.memory_space<vmem>>, vector<8x32xf32>
      %c0_121 = arith.constant 0 : index
      %c0_122 = arith.constant 0 : index
      %170 = vector.load %arg9[%c0_121, %c0_122] : memref<32x32xf32, #tpu.memory_space<vmem>>, vector<32x32xf32>
      %cst_123 = arith.constant dense<0.000000e+00> : vector<8x32xf32>
      %171 = tpu.matmul %169, %170, %cst_123 {dimension_numbers = #tpu.dot_dimension_numbers<[1], [0], [0], [1], [0, 0, 1, 1], [], []>} : vector<8x32xf32>, vector<32x32xf32>, vector<8x32xf32> -> vector<8x32xf32>
      %c0_124 = arith.constant 0 : index
      %c0_125 = arith.constant 0 : index
      %172 = vector.load %arg10[%c0_124, %c0_125] : memref<1x32xf32, #tpu.memory_space<vmem>>, vector<1x32xf32>
      %173 = vector.broadcast %172 : vector<1x32xf32> to vector<8x32xf32>
      %174 = arith.addf %171, %173 : vector<8x32xf32>
      %c0_126 = arith.constant 0 : index
      %c0_127 = arith.constant 0 : index
      %c0_128 = arith.constant 0 : index
      %175 = vector.load %arg11[%c0_126, %c0_127, %c0_128] : memref<1x8x32xf32, #tpu.memory_space<vmem>>, vector<1x8x32xf32>
      %176 = vector.shape_cast %175 : vector<1x8x32xf32> to vector<8x32xf32>
      %177 = vector.shape_cast %174 : vector<8x32xf32> to vector<1x8x32xf32>
      tpu.vector_store %arg11[%c0_126, %c0_127, %c0_128], %177 {strides = array<i32>} : memref<1x8x32xf32, #tpu.memory_space<vmem>>, vector<1x8x32xf32>,
    } else {
    }
    return
  }
  func.func @transform_0(%arg0: i32, %arg1: i32, %arg2: i32) -> (i32, i32, i32) {
    %c0_i32 = arith.constant 0 : i32
    %c0_i32_0 = arith.constant 0 : i32
    return %arg0, %arg1, %c0_i32 : i32, i32, i32
  }
  func.func @transform_1(%arg0: i32, %arg1: i32, %arg2: i32) -> (i32, i32, i32) {
    %c0_i32 = arith.constant 0 : i32
    %c0_i32_0 = arith.constant 0 : i32
    return %arg0, %arg2, %c0_i32 : i32, i32, i32
  }
  func.func @transform_2(%arg0: i32, %arg1: i32, %arg2: i32) -> (i32, i32) {
    %c0_i32 = arith.constant 0 : i32
    %c0_i32_0 = arith.constant 0 : i32
    %c0_i32_1 = arith.constant 0 : i32
    return %c0_i32, %c0_i32_0 : i32, i32
  }
  func.func @transform_3(%arg0: i32, %arg1: i32, %arg2: i32) -> (i32, i32) {
    %c0_i32 = arith.constant 0 : i32
    %c0_i32_0 = arith.constant 0 : i32
    %c0_i32_1 = arith.constant 0 : i32
    return %c0_i32, %c0_i32_0 : i32, i32
  }
  func.func @transform_4(%arg0: i32, %arg1: i32, %arg2: i32) -> (i32, i32) {
    %c0_i32 = arith.constant 0 : i32
    %c0_i32_0 = arith.constant 0 : i32
    %c0_i32_1 = arith.constant 0 : i32
    return %c0_i32, %c0_i32_0 : i32, i32
  }
  func.func @transform_5(%arg0: i32, %arg1: i32, %arg2: i32) -> (i32, i32) {
    %c0_i32 = arith.constant 0 : i32
    %c0_i32_0 = arith.constant 0 : i32
    %c0_i32_1 = arith.constant 0 : i32
    return %c0_i32, %c0_i32_0 : i32, i32
  }
  func.func @transform_6(%arg0: i32, %arg1: i32, %arg2: i32) -> (i32, i32) {
    %c0_i32 = arith.constant 0 : i32
    %c0_i32_0 = arith.constant 0 : i32
    %c0_i32_1 = arith.constant 0 : i32
    return %c0_i32, %c0_i32_0 : i32, i32
  }
  func.func @transform_7(%arg0: i32, %arg1: i32, %arg2: i32) -> (i32, i32) {
    %c0_i32 = arith.constant 0 : i32
    %c0_i32_0 = arith.constant 0 : i32
    %c0_i32_1 = arith.constant 0 : i32
    return %c0_i32, %c0_i32_0 : i32, i32
  }
  func.func @transform_8(%arg0: i32, %arg1: i32, %arg2: i32) -> (i32, i32, i32) {
    %c0_i32 = arith.constant 0 : i32
    %c0_i32_0 = arith.constant 0 : i32
    return %arg0, %arg1, %c0_i32 : i32, i32, i32
  }
}

</mosaic_0001>

<llo_original>
// kernel: tpu_custom_call.1
$region0: #{tpu_custom_call.1}
  #allocation0 [shape = 'u32[]', space=smem, size = 0x4, offset = 0x4, fixed_abs, tag = 'smem constant byte address 0x4 - core index']
  #allocation1 [shape = 'u32[144,128]{1,0:T(1,128)}', space=vmem, size = 0x12000, scoped, tag = 'internal scratch']
  #allocation2 [shape = 'f32[8,32]{1,0:T(8,128)}', space=vmem, size = 0x1000, scoped, tag = 'scratch operand']
  #allocation3 [shape = 'f32[4,8,1]{2,1,0:T(8,128)}', space=vmem, size = 0x4000, scoped, tag = 'scratch operand']
  #allocation4 [shape = 'f32[4,8,1]{2,1,0:T(8,128)}', space=vmem, size = 0x4000, scoped, tag = 'scratch operand']
  #allocation5 [shape = 'f32[8,32]{1,0:T(8,128)}', space=vmem, size = 0x1000, scoped, tag = 'scratch operand']
  %s0 = inlined_call_operand.hbm [shape: f32[2,8,32], index: 0, kind: input, shape index: {}]
  %s1 = inlined_call_operand.hbm [shape: f32[2,8,32], index: 1, kind: input, shape index: {}]
  %s2 = inlined_call_operand.hbm [shape: f32[32,32], index: 2, kind: input, shape index: {}]
  %s3 = inlined_call_operand.vmem [shape: f32[1,32], index: 3, kind: input, shape index: {}]
  %s4 = inlined_call_operand.hbm [shape: f32[32,64], index: 4, kind: input, shape index: {}]
  %s5 = inlined_call_operand.vmem [shape: f32[1,64], index: 5, kind: input, shape index: {}]
  %s6 = inlined_call_operand.hbm [shape: f32[32,32], index: 6, kind: input, shape index: {}]
  %s7 = inlined_call_operand.vmem [shape: f32[1,32], index: 7, kind: input, shape index: {}]
  %s8 = inlined_call_operand.hbm [shape: f32[2,8,32], index: 8, kind: output, shape index: {}]
  %s9 = sld [smem:[#allocation0]]
  $region93: #{tpu_custom_call.1} parent=0
    _
  %s11 = ssub.s32 1, %s9
  %s12 = scalar_select 0, %s11, %s9
  $region1: #{tpu_custom_call.1} parent=0
    #allocation6 [shape = 'u8[8192]{0}', space=vmem, size = 0x2000, scoped, tag = 'input window, operand 0']
    #allocation7 [shape = 's32[2]{0}', space=sflag, size = 0x8, scoped, tag = 'scoped memory for tpu_custom_call.1']
    #allocation8 [shape = 's32[2]{0}', space=sflag, size = 0x8, scoped, tag = 'scoped memory for tpu_custom_call.1']
    #allocation9 [shape = 'u8[8192]{0}', space=vmem, size = 0x2000, scoped, tag = 'input window, operand 1']
    #allocation10 [shape = 's32[2]{0}', space=sflag, size = 0x8, scoped, tag = 'scoped memory for tpu_custom_call.1']
    #allocation11 [shape = 'u8[16384]{0}', space=vmem, size = 0x4000, scoped, tag = 'input window, operand 2, single buffered']
    #allocation12 [shape = 'u8[16384]{0}', space=vmem, size = 0x4000, scoped, tag = 'input window, operand 4, single buffered']
    #allocation13 [shape = 's32[1]{0}', space=sflag, size = 0x4, scoped, tag = 'scoped memory for tpu_custom_call.1']
    #allocation14 [shape = 'u8[16384]{0}', space=vmem, size = 0x4000, scoped, tag = 'input window, operand 6, single buffered']
    #allocation15 [shape = 'u8[8192]{0}', space=vmem, size = 0x2000, scoped, tag = 'output window, operand 0']
    %13 = vsyncpa [#allocation7], 0
    %s14 = scalar_lea.sflag [#allocation7], 1
    %15 = vsyncpa %s14, 0
    %16 = vsyncpa [#allocation10], 0
    %s17 = scalar_lea.sflag [#allocation10], 1
    %18 = vsyncpa %s17, 0
    %19 = vsyncpa [#allocation13], 0
    %20 = vsyncpa [#allocation8], 0
    %s21 = scalar_lea.sflag [#allocation8], 1
    %22 = vsyncpa %s21, 0
    loop: start=0, step=1, limit=4
    $region2: #{tpu_custom_call.1} parent=1 // loop_pre_header
      _
    $region3: #{tpu_custom_call.1} parent=1 // loop_header
      %s24 = sphi 0, %s28
      %p25 = scmp.ge.s32.totalorder %s24, 4
      %s31 = sphi 0, %s50
      %s32 = sphi 0, %s46
      %s33 = sphi 0, %s42
      %s34 = sphi 0, %s31
      %s35 = sphi 0, %s32
      %s36 = sphi 0, %s33
      %s37 = sphi 0, %s34
      %s38 = sphi 0, %s35
      %s39 = sphi 0, %s36
      %s55 = sphi 0, %s57
      %s58 = sphi 0, %s55
      %s59 = sphi 0, %s58
      %s75 = sphi 0, %s59
      %s83 = sphi 0, %s85
      %s86 = sphi 0, %s83
      %s87 = sphi 0, %s86
      %s103 = sphi 0, %s87
      %s107 = sphi 0, %s107
      %s109 = sphi 0, %s107
      %s110 = sphi 0, %s109
      %s124 = sphi 0, %s110
      %s128 = sphi 0, %s128
      %s130 = sphi 0, %s128
      %s131 = sphi 0, %s130
      %s145 = sphi 0, %s131
      %s149 = sphi 0, %s149
      %s151 = sphi 0, %s149
      %s152 = sphi 0, %s151
      %s166 = sphi 0, %s152
      %s170 = sphi 0, %s170
      %s172 = sphi 0, %s170
      %s173 = sphi 0, %s172
      %s187 = sphi 0, %s173
      %s191 = sphi 0, %s191
      %s193 = sphi 0, %s191
      %s194 = sphi 0, %s193
      %s208 = sphi 0, %s194
      %s212 = sphi 0, %s212
      %s214 = sphi 0, %s212
      %s215 = sphi 0, %s214
      %s229 = sphi 0, %s215
      %s237 = sphi 0, %s239
      %s240 = sphi 0, %s237
      %s241 = sphi 0, %s240
      %s257 = sphi 0, %s241
    $region4: #{tpu_custom_call.1} parent=1 // loop_header_branch
      %27 = sbr.rel (%p25) target = $region8
    $region5: #{tpu_custom_call.1} parent=1 // loop_body
      %s29 = ssub.s32 %s24, 1
      %s30 = ssub.s32 %s24, 2
      %s40 = sadd.s32 1, %s33
      %p41 = scmp.ge.s32.totalorder %s40, 1
      %s42 = scalar_select %p41, 0, %s40
      %s43 = sadd.s32 1, %s32
      %s44 = scalar_select %p41, %s43, %s32
      %p45 = scmp.ge.s32.totalorder %s44, 1
      %s46 = scalar_select %p45, 0, %s44
      %s47 = sadd.s32 1, %s31
      %s48 = scalar_select %p45, %s47, %s31
      %p49 = scmp.ge.s32.totalorder %s48, 2
      %s50 = scalar_select %p49, 0, %s48
      %s51 = ssub.s32 %s31, %s50
      %s52 = ssub.s32 %s32, %s46
      %s53 = sor.u32 %s51, %s52
      %p54 = scmp.eq.s32.totalorder %s53, 0
      %s56 = sadd.s32 %s55, 1
      %s57 = scalar_select %p54, %s55, %s56
      %p60 = pneg %p54
      %p61 = scmp.eq.s32.totalorder %s24, 1
      %p62 = por %p60, %p61
      %p63 = scmp.ne.s32.totalorder %s55, %s58
      %p64 = scmp.eq.s32.totalorder %s24, 0
      %p65 = por %p63, %p64
      %p66 = scmp.ne.s32.totalorder %s55, %s58
      %p67 = scmp.eq.s32.totalorder %s29, 1
      %p68 = por %p66, %p67
      %p69 = scmp.ne.s32.totalorder %s58, %s59
      %p70 = scmp.eq.s32.totalorder %s29, 0
      %p71 = por %p69, %p70
      %p72 = scmp.ne.s32.totalorder %s58, %s59
      %p73 = scmp.eq.s32.totalorder %s30, 1
      %p74 = por %p72, %p73
      %p76 = scmp.ne.s32.totalorder %s59, %s75
      %p77 = scmp.eq.s32.totalorder %s30, 0
      %p78 = por %p76, %p77
      %s79 = ssub.s32 %s31, %s50
      %s80 = ssub.s32 %s33, %s42
      %s81 = sor.u32 %s79, %s80
      %p82 = scmp.eq.s32.totalorder %s81, 0
      %s84 = sadd.s32 %s83, 1
      %s85 = scalar_select %p82, %s83, %s84
      %p88 = pneg %p82
      %p89 = scmp.eq.s32.totalorder %s24, 1
      %p90 = por %p88, %p89
      %p91 = scmp.ne.s32.totalorder %s83, %s86
      %p92 = scmp.eq.s32.totalorder %s24, 0
      %p93 = por %p91, %p92
      %p94 = scmp.ne.s32.totalorder %s83, %s86
      %p95 = scmp.eq.s32.totalorder %s29, 1
      %p96 = por %p94, %p95
      %p97 = scmp.ne.s32.totalorder %s86, %s87
      %p98 = scmp.eq.s32.totalorder %s29, 0
      %p99 = por %p97, %p98
      %p100 = scmp.ne.s32.totalorder %s86, %s87
      %p101 = scmp.eq.s32.totalorder %s30, 1
      %p102 = por %p100, %p101
      %p104 = scmp.ne.s32.totalorder %s87, %s103
      %p105 = scmp.eq.s32.totalorder %s30, 0
      %p106 = por %p104, %p105
      %s108 = sadd.s32 %s107, 1
      %p111 = scmp.eq.s32.totalorder %s24, 1
      %p112 = scmp.ne.s32.totalorder %s107, %s109
      %p113 = scmp.eq.s32.totalorder %s24, 0
      %p114 = por %p112, %p113
      %p115 = scmp.ne.s32.totalorder %s107, %s109
      %p116 = scmp.eq.s32.totalorder %s29, 1
      %p117 = por %p115, %p116
      %p118 = scmp.ne.s32.totalorder %s109, %s110
      %p119 = scmp.eq.s32.totalorder %s29, 0
      %p120 = por %p118, %p119
      %p121 = scmp.ne.s32.totalorder %s109, %s110
      %p122 = scmp.eq.s32.totalorder %s30, 1
      %p123 = por %p121, %p122
      %p125 = scmp.ne.s32.totalorder %s110, %s124
      %p126 = scmp.eq.s32.totalorder %s30, 0
      %p127 = por %p125, %p126
      %s129 = sadd.s32 %s128, 1
      %p132 = scmp.eq.s32.totalorder %s24, 1
      %p133 = scmp.ne.s32.totalorder %s128, %s130
      %p134 = scmp.eq.s32.totalorder %s24, 0
      %p135 = por %p133, %p134
      %p136 = scmp.ne.s32.totalorder %s128, %s130
      %p137 = scmp.eq.s32.totalorder %s29, 1
      %p138 = por %p136, %p137
      %p139 = scmp.ne.s32.totalorder %s130, %s131
      %p140 = scmp.eq.s32.totalorder %s29, 0
      %p141 = por %p139, %p140
      %p142 = scmp.ne.s32.totalorder %s130, %s131
      %p143 = scmp.eq.s32.totalorder %s30, 1
      %p144 = por %p142, %p143
      %p146 = scmp.ne.s32.totalorder %s131, %s145
      %p147 = scmp.eq.s32.totalorder %s30, 0
      %p148 = por %p146, %p147
      %s150 = sadd.s32 %s149, 1
      %p153 = scmp.eq.s32.totalorder %s24, 1
      %p154 = scmp.ne.s32.totalorder %s149, %s151
      %p155 = scmp.eq.s32.totalorder %s24, 0
      %p156 = por %p154, %p155
      %p157 = scmp.ne.s32.totalorder %s149, %s151
      %p158 = scmp.eq.s32.totalorder %s29, 1
      %p159 = por %p157, %p158
      %p160 = scmp.ne.s32.totalorder %s151, %s152
      %p161 = scmp.eq.s32.totalorder %s29, 0
      %p162 = por %p160, %p161
      %p163 = scmp.ne.s32.totalorder %s151, %s152
      %p164 = scmp.eq.s32.totalorder %s30, 1
      %p165 = por %p163, %p164
      %p167 = scmp.ne.s32.totalorder %s152, %s166
      %p168 = scmp.eq.s32.totalorder %s30, 0
      %p169 = por %p167, %p168
      %s171 = sadd.s32 %s170, 1
      %p174 = scmp.eq.s32.totalorder %s24, 1
      %p175 = scmp.ne.s32.totalorder %s170, %s172
      %p176 = scmp.eq.s32.totalorder %s24, 0
      %p177 = por %p175, %p176
      %p178 = scmp.ne.s32.totalorder %s170, %s172
      %p179 = scmp.eq.s32.totalorder %s29, 1
      %p180 = por %p178, %p179
      %p181 = scmp.ne.s32.totalorder %s172, %s173
      %p182 = scmp.eq.s32.totalorder %s29, 0
      %p183 = por %p181, %p182
      %p184 = scmp.ne.s32.totalorder %s172, %s173
      %p185 = scmp.eq.s32.totalorder %s30, 1
      %p186 = por %p184, %p185
      %p188 = scmp.ne.s32.totalorder %s173, %s187
      %p189 = scmp.eq.s32.totalorder %s30, 0
      %p190 = por %p188, %p189
      %s192 = sadd.s32 %s191, 1
      %p195 = scmp.eq.s32.totalorder %s24, 1
      %p196 = scmp.ne.s32.totalorder %s191, %s193
      %p197 = scmp.eq.s32.totalorder %s24, 0
      %p198 = por %p196, %p197
      %p199 = scmp.ne.s32.totalorder %s191, %s193
      %p200 = scmp.eq.s32.totalorder %s29, 1
      %p201 = por %p199, %p200
      %p202 = scmp.ne.s32.totalorder %s193, %s194
      %p203 = scmp.eq.s32.totalorder %s29, 0
      %p204 = por %p202, %p203
      %p205 = scmp.ne.s32.totalorder %s193, %s194
      %p206 = scmp.eq.s32.totalorder %s30, 1
      %p207 = por %p205, %p206
      %p209 = scmp.ne.s32.totalorder %s194, %s208
      %p210 = scmp.eq.s32.totalorder %s30, 0
      %p211 = por %p209, %p210
      %s213 = sadd.s32 %s212, 1
      %p216 = scmp.eq.s32.totalorder %s24, 1
      %p217 = scmp.ne.s32.totalorder %s212, %s214
      %p218 = scmp.eq.s32.totalorder %s24, 0
      %p219 = por %p217, %p218
      %p220 = scmp.ne.s32.totalorder %s212, %s214
      %p221 = scmp.eq.s32.totalorder %s29, 1
      %p222 = por %p220, %p221
      %p223 = scmp.ne.s32.totalorder %s214, %s215
      %p224 = scmp.eq.s32.totalorder %s29, 0
      %p225 = por %p223, %p224
      %p226 = scmp.ne.s32.totalorder %s214, %s215
      %p227 = scmp.eq.s32.totalorder %s30, 1
      %p228 = por %p226, %p227
      %p230 = scmp.ne.s32.totalorder %s215, %s229
      %p231 = scmp.eq.s32.totalorder %s30, 0
      %p232 = por %p230, %p231
      %s233 = ssub.s32 %s31, %s50
      %s234 = ssub.s32 %s32, %s46
      %s235 = sor.u32 %s233, %s234
      %p236 = scmp.eq.s32.totalorder %s235, 0
      %s238 = sadd.s32 %s237, 1
      %s239 = scalar_select %p236, %s237, %s238
      %p242 = pneg %p236
      %p243 = scmp.eq.s32.totalorder %s24, 1
      %p244 = por %p242, %p243
      %p245 = scmp.ne.s32.totalorder %s237, %s240
      %p246 = scmp.eq.s32.totalorder %s24, 0
      %p247 = por %p245, %p246
      %p248 = scmp.ne.s32.totalorder %s237, %s240
      %p249 = scmp.eq.s32.totalorder %s29, 1
      %p250 = por %p248, %p249
      %p251 = scmp.ne.s32.totalorder %s240, %s241
      %p252 = scmp.eq.s32.totalorder %s29, 0
      %p253 = por %p251, %p252
      %p254 = scmp.ne.s32.totalorder %s240, %s241
      %p255 = scmp.eq.s32.totalorder %s30, 1
      %p256 = por %p254, %p255
      %p258 = scmp.ne.s32.totalorder %s241, %s257
      %p259 = scmp.eq.s32.totalorder %s30, 0
      %p260 = por %p258, %p259
      %p261 = scmp.le.s32.totalorder 1, %s24
      %p262 = scmp.lt.s32.totalorder %s24, 3
      %p263 = pnand %p261, %p262
      %p264 = pneg %p263
      // Predicated region
      $region9: #{tpu_custom_call.1} parent=5 // pred_check
        _
      $region10: #{tpu_custom_call.1} parent=5 // pred_check_branch
        %266 = sbr.rel (%p263) target = $region12
      $region11: #{tpu_custom_call.1} parent=5 // pred_region
        %s267 = ssub.s32 %s24, 1
        // Predicated region
        $region13: #{tpu_custom_call.1} parent=11 // pred_check
          %p268 = pneg %p120
        $region14: #{tpu_custom_call.1} parent=11 // pred_check_branch
          %270 = sbr.rel (%p268) target = $region16
        $region15: #{tpu_custom_call.1} parent=11 // pred_region
          %s272 = ssub.s32 512, 512
          %273 = vsyncadd [#allocation10], %s272
          %s274 = sshll.u32 [#allocation11], 4
          %s275 = int_to_ptr.vmem [resolvable:$true] %s274
          %280 = dma.hbm_to_vmem [thread:$0]  %s2, 512, %s275, [#allocation10], 128, 128, 8
        $region16: #{tpu_custom_call.1} parent=11 // pred_fallthru
          _
        // Predicated region
        $region17: #{tpu_custom_call.1} parent=11 // pred_check
          %p281 = pneg %p141
        $region18: #{tpu_custom_call.1} parent=11 // pred_check_branch
          %283 = sbr.rel (%p281) target = $region20
        $region19: #{tpu_custom_call.1} parent=11 // pred_region
          _
        $region20: #{tpu_custom_call.1} parent=11 // pred_fallthru
          _
        // Predicated region
        $region21: #{tpu_custom_call.1} parent=11 // pred_check
          %p284 = pneg %p162
        $region22: #{tpu_custom_call.1} parent=11 // pred_check_branch
          %286 = sbr.rel (%p284) target = $region24
        $region23: #{tpu_custom_call.1} parent=11 // pred_region
          %s288 = ssub.s32 512, 512
          %289 = vsyncadd [#allocation13], %s288
          %s290 = sshll.u32 [#allocation12], 4
          %s291 = int_to_ptr.vmem [resolvable:$true] %s290
          %296 = dma.hbm_to_vmem [thread:$0]  %s4, 512, %s291, [#allocation13], 128, 128, 8
        $region24: #{tpu_custom_call.1} parent=11 // pred_fallthru
          _
        // Predicated region
        $region25: #{tpu_custom_call.1} parent=11 // pred_check
          %p297 = pneg %p183
        $region26: #{tpu_custom_call.1} parent=11 // pred_check_branch
          %299 = sbr.rel (%p297) target = $region28
        $region27: #{tpu_custom_call.1} parent=11 // pred_region
          _
        $region28: #{tpu_custom_call.1} parent=11 // pred_fallthru
          _
        // Predicated region
        $region29: #{tpu_custom_call.1} parent=11 // pred_check
          %p300 = pneg %p204
        $region30: #{tpu_custom_call.1} parent=11 // pred_check_branch
          %302 = sbr.rel (%p300) target = $region32
        $region31: #{tpu_custom_call.1} parent=11 // pred_region
          %s304 = ssub.s32 512, 512
          %305 = vsyncadd [#allocation13], %s304
          %s306 = sshll.u32 [#allocation14], 4
          %s307 = int_to_ptr.vmem [resolvable:$true] %s306
          %312 = dma.hbm_to_vmem [thread:$0]  %s6, 512, %s307, [#allocation13], 128, 128, 8
        $region32: #{tpu_custom_call.1} parent=11 // pred_fallthru
          _
        // Predicated region
        $region33: #{tpu_custom_call.1} parent=11 // pred_check
          %p313 = pneg %p225
        $region34: #{tpu_custom_call.1} parent=11 // pred_check_branch
          %315 = sbr.rel (%p313) target = $region36
        $region35: #{tpu_custom_call.1} parent=11 // pred_region
          _
        $region36: #{tpu_custom_call.1} parent=11 // pred_fallthru
          _
      $region12: #{tpu_custom_call.1} parent=5 // pred_fallthru
        _
      %p316 = scmp.lt.s32.totalorder %s24, 2
      // Predicated region
      $region37: #{tpu_custom_call.1} parent=5 // pred_check
        %p317 = pneg %p316
      $region38: #{tpu_custom_call.1} parent=5 // pred_check_branch
        %319 = sbr.rel (%p317) target = $region40
      $region39: #{tpu_custom_call.1} parent=5 // pred_region
        // Predicated region
        $region41: #{tpu_custom_call.1} parent=39 // pred_check
          %p320 = pneg %p65
        $region42: #{tpu_custom_call.1} parent=39 // pred_check_branch
          %322 = sbr.rel (%p320) target = $region44
        $region43: #{tpu_custom_call.1} parent=39 // pred_region
          %s323 = sand.u32 %s55, 1
          %s324 = scalar_lea.sflag [#allocation7], %s323
          %s325 = sand.u32 %s55, 1
          %s326 = smul.addr %s325, 8
          %s327 = scalar_lea.vmem [#allocation6], %s326
          %s329 = ssub.s32 128, 128
          %330 = vsyncadd %s324, %s329
          %s331 = sadd.s32 %s32, %s31
          %s332 = smul.addr %s331, 128
          %s333 = scalar_lea.hbm %s0, %s332
          %s335 = sshll.u32 %s327, 4
          %s336 = int_to_ptr.vmem [resolvable:$true] %s335
          %338 = dma.hbm_to_vmem [thread:$0]  %s333, 128, %s336, %s324
        $region44: #{tpu_custom_call.1} parent=39 // pred_fallthru
          _
        // Predicated region
        $region45: #{tpu_custom_call.1} parent=39 // pred_check
          %p339 = pneg %p93
        $region46: #{tpu_custom_call.1} parent=39 // pred_check_branch
          %341 = sbr.rel (%p339) target = $region48
        $region47: #{tpu_custom_call.1} parent=39 // pred_region
          %s342 = sand.u32 %s24, 1
          %s343 = scalar_lea.sflag [#allocation10], %s342
          %s344 = sand.u32 %s83, 1
          %s345 = smul.addr %s344, 8
          %s346 = scalar_lea.vmem [#allocation9], %s345
          %s348 = ssub.s32 128, 128
          %349 = vsyncadd %s343, %s348
          %s350 = sadd.s32 %s33, %s31
          %s351 = smul.addr %s350, 128
          %s352 = scalar_lea.hbm %s1, %s351
          %s354 = sshll.u32 %s346, 4
          %s355 = int_to_ptr.vmem [resolvable:$true] %s354
          %357 = dma.hbm_to_vmem [thread:$0]  %s352, 128, %s355, %s343
        $region48: #{tpu_custom_call.1} parent=39 // pred_fallthru
          _
      $region40: #{tpu_custom_call.1} parent=5 // pred_fallthru
        _
      %p358 = scmp.le.s32.totalorder 1, %s24
      %p359 = scmp.lt.s32.totalorder %s24, 3
      %p360 = pnand %p358, %p359
      %p361 = pneg %p360
      // Predicated region
      $region49: #{tpu_custom_call.1} parent=5 // pred_check
        _
      $region50: #{tpu_custom_call.1} parent=5 // pred_check_branch
        %363 = sbr.rel (%p360) target = $region52
      $region51: #{tpu_custom_call.1} parent=5 // pred_region
        %s364 = ssub.s32 %s24, 1
        %s365 = sand.u32 %s58, 1
        %s366 = scalar_lea.sflag [#allocation7], %s365
        %s367 = sand.u32 %s58, 1
        %s368 = smul.addr %s367, 8
        %s369 = scalar_lea.vmem [#allocation6], %s368
        // Predicated region
        $region53: #{tpu_custom_call.1} parent=51 // pred_check
          %p370 = pneg %p71
        $region54: #{tpu_custom_call.1} parent=51 // pred_check_branch
          %372 = sbr.rel (%p370) target = $region56
        $region55: #{tpu_custom_call.1} parent=51 // pred_region
          %373 = dma.done %s366, 128
        $region56: #{tpu_custom_call.1} parent=51 // pred_fallthru
          _
        %s374 = sand.u32 %s29, 1
        %s375 = scalar_lea.sflag [#allocation10], %s374
        %s376 = sand.u32 %s86, 1
        %s377 = smul.addr %s376, 8
        %s378 = scalar_lea.vmem [#allocation9], %s377
        // Predicated region
        $region57: #{tpu_custom_call.1} parent=51 // pred_check
          %p379 = pneg %p99
        $region58: #{tpu_custom_call.1} parent=51 // pred_check_branch
          %381 = sbr.rel (%p379) target = $region60
        $region59: #{tpu_custom_call.1} parent=51 // pred_region
          %382 = dma.done %s375, 128
        $region60: #{tpu_custom_call.1} parent=51 // pred_fallthru
          _
        // Predicated region
        $region61: #{tpu_custom_call.1} parent=51 // pred_check
          %p383 = pneg %p120
        $region62: #{tpu_custom_call.1} parent=51 // pred_check_branch
          %385 = sbr.rel (%p383) target = $region64
        $region63: #{tpu_custom_call.1} parent=51 // pred_region
          %386 = dma.done [#allocation10], 512
        $region64: #{tpu_custom_call.1} parent=51 // pred_fallthru
          _
        // Predicated region
        $region65: #{tpu_custom_call.1} parent=51 // pred_check
          %p387 = pneg %p162
        $region66: #{tpu_custom_call.1} parent=51 // pred_check_branch
          %389 = sbr.rel (%p387) target = $region68
        $region67: #{tpu_custom_call.1} parent=51 // pred_region
          %390 = dma.done [#allocation13], 512
        $region68: #{tpu_custom_call.1} parent=51 // pred_fallthru
          _
        // Predicated region
        $region69: #{tpu_custom_call.1} parent=51 // pred_check
          %p391 = pneg %p204
        $region70: #{tpu_custom_call.1} parent=51 // pred_check_branch
          %393 = sbr.rel (%p391) target = $region72
        $region71: #{tpu_custom_call.1} parent=51 // pred_region
          %394 = dma.done [#allocation13], 512
        $region72: #{tpu_custom_call.1} parent=51 // pred_fallthru
          _
        %s395 = sand.u32 %s58, 1
        %s396 = scalar_lea.sflag [#allocation7], %s395
        %s397 = sand.u32 %s58, 1
        %s398 = smul.addr %s397, 8
        %s399 = scalar_lea.vmem [#allocation6], %s398
        %p400 = pneg %p71
        %p401 = pneg %p68
        %s402 = sand.u32 %s29, 1
        %s403 = scalar_lea.sflag [#allocation10], %s402
        %s404 = sand.u32 %s86, 1
        %s405 = smul.addr %s404, 8
        %s406 = scalar_lea.vmem [#allocation9], %s405
        %p407 = pneg %p99
        %p408 = pneg %p96
        %p409 = pneg %p120
        %p410 = pneg %p117
        %p411 = pneg %p141
        %p412 = pneg %p138
        %p413 = pneg %p162
        %p414 = pneg %p159
        %p415 = pneg %p183
        %p416 = pneg %p180
        %p417 = pneg %p204
        %p418 = pneg %p201
        %p419 = pneg %p225
        %p420 = pneg %p222
        %p421 = pneg %p253
        %p422 = pneg %p250
        %s423 = sand.u32 %s240, 1
        %s424 = scalar_lea.sflag [#allocation8], %s423
        %s425 = sand.u32 %s240, 1
        %s426 = smul.addr %s425, 8
        %s427 = scalar_lea.vmem [#allocation15], %s426
        %p428 = scmp.eq.s32.totalorder %s36, 0
        // Predicated region
        $region73: #{tpu_custom_call.1} parent=51 // pred_check
          %p429 = pneg %p428
        $region74: #{tpu_custom_call.1} parent=51 // pred_check_branch
          %431 = sbr.rel (%p429) target = $region76
        $region75: #{tpu_custom_call.1} parent=51 // pred_region
          %v432 = vld [vmem:[%s369] sm:$0xff]
          %v433 = vld [vmem:[#allocation11] sm:$0xff]
          %v434 = vld [vmem:[#allocation11 + $0x8] sm:$0xff]
          %v435 = vld [vmem:[#allocation11 + $0x10] sm:$0xff]
          %v436 = vld [vmem:[#allocation11 + $0x18] sm:$0xff]
          %v437 = vld [vmem:[%s3] sm:$0x1]
          %v439 = vlaneseq
          %v440 = vshrl.u32 %v439, 7
          %v441 = vsub.s32 0, %v440
          %v442 = vrot.slane %v437, %v441
          %vm444 = vcmask 261120
          %v446 = vsel %vm444, %v432, 0
          %448 = vmatprep.subr.mxu0 0.0
          %449 = vmatpush1.msra.mxu0 %v433
          %450 = vmatprep.subr.mxu0 0.0
          %451 = vmatpush1.msra.mxu0 %v434
          %452 = vmatprep.subr.mxu0 0.0
          %453 = vmatpush1.msra.mxu0 %v435
          %454 = vmatprep.subr.mxu0 0.0
          %455 = vmatpush1.msra.mxu0 %v436
          %456 = vmatprep.subr.mxu0 0.0
          %457 = vmatpush1.msra.mxu0 0.0
          %458 = vmatprep.subr.mxu0 0.0
          %459 = vmatpush1.msra.mxu0 0.0
          %460 = vmatprep.subr.mxu0 0.0
          %461 = vmatpush1.msra.mxu0 0.0
          %462 = vmatprep.subr.mxu0 0.0
          %463 = vmatpush1.msra.mxu0 0.0
          %464 = vmatprep.subr.mxu0 0.0
          %465 = vmatpush1.msra.mxu0 0.0
          %466 = vmatprep.subr.mxu0 0.0
          %467 = vmatpush1.msra.mxu0 0.0
          %468 = vmatprep.subr.mxu0 0.0
          %469 = vmatpush1.msra.mxu0 0.0
          %470 = vmatprep.subr.mxu0 0.0
          %471 = vmatpush1.msra.mxu0 0.0
          %472 = vmatprep.subr.mxu0 0.0
          %473 = vmatpush1.msra.mxu0 0.0
          %474 = vmatprep.subr.mxu0 0.0
          %475 = vmatpush1.msra.mxu0 0.0
          %476 = vmatprep.subr.mxu0 0.0
          %477 = vmatpush1.msra.mxu0 0.0
          %478 = vmatprep.subr.mxu0 0.0
          %479 = vmatpush1.msra.mxu0 0.0
          %480 = vmatprep.subr.mxu0 0.0
          %481 = vmatpush1.msra.mxu0 0.0
          %482 = vmatprep.subr.mxu0 0.0
          %483 = vmatpush1.msra.mxu0 0.0
          %484 = vmatprep.subr.mxu0 0.0
          %485 = vmatpush1.msra.mxu0 0.0
          %486 = vmatprep.subr.mxu0 0.0
          %487 = vmatpush1.msra.mxu0 0.0
          %488 = vmatprep.subr.mxu0 0.0
          %489 = vmatpush1.msra.mxu0 0.0
          %490 = vmatprep.subr.mxu0 0.0
          %491 = vmatpush1.msra.mxu0 0.0
          %492 = vmatprep.subr.mxu0 0.0
          %493 = vmatpush1.msra.mxu0 0.0
          %494 = vmatprep.subr.mxu0 0.0
          %495 = vmatpush1.msra.mxu0 0.0
          %496 = vmatprep.subr.mxu0 0.0
          %497 = vmatpush1.msra.mxu0 0.0
          %498 = vmatprep.subr.mxu0 0.0
          %499 = vmatpush1.msra.mxu0 0.0
          %500 = vmatprep.subr.mxu0 0.0
          %501 = vmatpush1.msra.mxu0 0.0
          %502 = vmatprep.subr.mxu0 0.0
          %503 = vmatpush1.msra.mxu0 0.0
          %504 = vmatprep.subr.mxu0 0.0
          %505 = vmatpush1.msra.mxu0 0.0
          %506 = vmatprep.subr.mxu0 0.0
          %507 = vmatpush1.msra.mxu0 0.0
          %508 = vmatprep.subr.mxu0 0.0
          %509 = vmatpush1.msra.mxu0 0.0
          %510 = vmatprep.subr.mxu0 0.0
          %511 = vmatpush1.msra.mxu0 0.0
          %512 = vmatprep.mubr.f32.mxu0 0.0
          %513 = vmatmul.mubr.f32.gmra.mrb[0].mxu0 %v446
          %v514 = vpop.f32.mrb[0].mxu0
          %v515 = vadd.f32 %v442, %v514
          %v516 = vpop.f32.mrb[0].mxu0
          %517 = vdwg.mxu0
          %518 = vst.msk [vmem:[#allocation2] sm:$0xff] %vm444, %v515
          %vm519 = vcmask 7168
          %520 = vst.msk [vmem:[#allocation3] sm:$0xff] %vm519, -inf
          %521 = vst.msk [vmem:[#allocation3 + $0x8] sm:$0xff] %vm519, -inf
          %522 = vst.msk [vmem:[#allocation3 + $0x10] sm:$0xff] %vm519, -inf
          %523 = vst.msk [vmem:[#allocation3 + $0x18] sm:$0xff] %vm519, -inf
          %524 = vst.msk [vmem:[#allocation4] sm:$0xff] %vm519, 0.0
          %525 = vst.msk [vmem:[#allocation4 + $0x8] sm:$0xff] %vm519, 0.0
          %526 = vst.msk [vmem:[#allocation4 + $0x10] sm:$0xff] %vm519, 0.0
          %527 = vst.msk [vmem:[#allocation4 + $0x18] sm:$0xff] %vm519, 0.0
          %528 = vst.msk [vmem:[#allocation5] sm:$0xff] %vm444, 0.0
        $region76: #{tpu_custom_call.1} parent=51 // pred_fallthru
          _
        %v529 = vld [vmem:[%s378] sm:$0xff]
        %v530 = vld [vmem:[#allocation12] sm:$0xff]
        %v531 = vld [vmem:[#allocation12 + $0x8] sm:$0xff]
        %v532 = vld [vmem:[#allocation12 + $0x10] sm:$0xff]
        %v533 = vld [vmem:[#allocation12 + $0x18] sm:$0xff]
        %v534 = vld [vmem:[%s5] sm:$0x1]
        %v536 = vlaneseq
        %v537 = vshrl.u32 %v536, 7
        %v538 = vsub.s32 0, %v537
        %v539 = vrot.slane %v534, %v538
        %vm541 = vcmask 261120
        %v543 = vsel %vm541, %v529, 0
        %545 = vmatprep.subr.mxu0 0.0
        %546 = vmatpush1.msra.mxu0 %v530
        %547 = vmatprep.subr.mxu0 0.0
        %548 = vmatpush1.msra.mxu0 %v531
        %549 = vmatprep.subr.mxu0 0.0
        %550 = vmatpush1.msra.mxu0 %v532
        %551 = vmatprep.subr.mxu0 0.0
        %552 = vmatpush1.msra.mxu0 %v533
        %553 = vmatprep.subr.mxu0 0.0
        %554 = vmatpush1.msra.mxu0 0.0
        %555 = vmatprep.subr.mxu0 0.0
        %556 = vmatpush1.msra.mxu0 0.0
        %557 = vmatprep.subr.mxu0 0.0
        %558 = vmatpush1.msra.mxu0 0.0
        %559 = vmatprep.subr.mxu0 0.0
        %560 = vmatpush1.msra.mxu0 0.0
        %561 = vmatprep.subr.mxu0 0.0
        %562 = vmatpush1.msra.mxu0 0.0
        %563 = vmatprep.subr.mxu0 0.0
        %564 = vmatpush1.msra.mxu0 0.0
        %565 = vmatprep.subr.mxu0 0.0
        %566 = vmatpush1.msra.mxu0 0.0
        %567 = vmatprep.subr.mxu0 0.0
        %568 = vmatpush1.msra.mxu0 0.0
        %569 = vmatprep.subr.mxu0 0.0
        %570 = vmatpush1.msra.mxu0 0.0
        %571 = vmatprep.subr.mxu0 0.0
        %572 = vmatpush1.msra.mxu0 0.0
        %573 = vmatprep.subr.mxu0 0.0
        %574 = vmatpush1.msra.mxu0 0.0
        %575 = vmatprep.subr.mxu0 0.0
        %576 = vmatpush1.msra.mxu0 0.0
        %577 = vmatprep.subr.mxu0 0.0
        %578 = vmatpush1.msra.mxu0 0.0
        %579 = vmatprep.subr.mxu0 0.0
        %580 = vmatpush1.msra.mxu0 0.0
        %581 = vmatprep.subr.mxu0 0.0
        %582 = vmatpush1.msra.mxu0 0.0
        %583 = vmatprep.subr.mxu0 0.0
        %584 = vmatpush1.msra.mxu0 0.0
        %585 = vmatprep.subr.mxu0 0.0
        %586 = vmatpush1.msra.mxu0 0.0
        %587 = vmatprep.subr.mxu0 0.0
        %588 = vmatpush1.msra.mxu0 0.0
        %589 = vmatprep.subr.mxu0 0.0
        %590 = vmatpush1.msra.mxu0 0.0
        %591 = vmatprep.subr.mxu0 0.0
        %592 = vmatpush1.msra.mxu0 0.0
        %593 = vmatprep.subr.mxu0 0.0
        %594 = vmatpush1.msra.mxu0 0.0
        %595 = vmatprep.subr.mxu0 0.0
        %596 = vmatpush1.msra.mxu0 0.0
        %597 = vmatprep.subr.mxu0 0.0
        %598 = vmatpush1.msra.mxu0 0.0
        %599 = vmatprep.subr.mxu0 0.0
        %600 = vmatpush1.msra.mxu0 0.0
        %601 = vmatprep.subr.mxu0 0.0
        %602 = vmatpush1.msra.mxu0 0.0
        %603 = vmatprep.subr.mxu0 0.0
        %604 = vmatpush1.msra.mxu0 0.0
        %605 = vmatprep.subr.mxu0 0.0
        %606 = vmatpush1.msra.mxu0 0.0
        %607 = vmatprep.subr.mxu0 0.0
        %608 = vmatpush1.msra.mxu0 0.0
        %609 = vmatprep.mubr.f32.mxu0 0.0
        %610 = vmatmul.mubr.f32.gmra.mrb[0].mxu0 %v543
        %v611 = vpop.f32.mrb[0].mxu0
        %v612 = vadd.f32 %v539, %v611
        %v613 = vpop.f32.mrb[0].mxu0
        %614 = vdwg.mxu0
        %v615 = vld [vmem:[#allocation2] sm:$0xff]
        %vm616 = vcmask 64512
        %v618 = vsel %vm616, %v615, 0
        %v621 = vsel %vm616, %v612, 0
        %623 = vmatprep.subr.mxu0 0.0
        %624 = vmatpush1.xpose.msra.mxu0 %v621
        %625 = vmatprep.subr.mxu0 0.0
        %626 = vmatpush1.xpose.msra.mxu0 0.0
        %627 = vmatprep.subr.mxu0 0.0
        %628 = vmatpush1.xpose.msra.mxu0 0.0
        %629 = vmatprep.subr.mxu0 0.0
        %630 = vmatpush1.xpose.msra.mxu0 0.0
        %631 = vmatprep.subr.mxu0 0.0
        %632 = vmatpush1.xpose.msra.mxu0 0.0
        %633 = vmatprep.subr.mxu0 0.0
        %634 = vmatpush1.xpose.msra.mxu0 0.0
        %635 = vmatprep.subr.mxu0 0.0
        %636 = vmatpush1.xpose.msra.mxu0 0.0
        %637 = vmatprep.subr.mxu0 0.0
        %638 = vmatpush1.xpose.msra.mxu0 0.0
        %639 = vmatprep.subr.mxu0 0.0
        %640 = vmatpush1.xpose.msra.mxu0 0.0
        %641 = vmatprep.subr.mxu0 0.0
        %642 = vmatpush1.xpose.msra.mxu0 0.0
        %643 = vmatprep.subr.mxu0 0.0
        %644 = vmatpush1.xpose.msra.mxu0 0.0
        %645 = vmatprep.subr.mxu0 0.0
        %646 = vmatpush1.xpose.msra.mxu0 0.0
        %647 = vmatprep.subr.mxu0 0.0
        %648 = vmatpush1.xpose.msra.mxu0 0.0
        %649 = vmatprep.subr.mxu0 0.0
        %650 = vmatpush1.xpose.msra.mxu0 0.0
        %651 = vmatprep.subr.mxu0 0.0
        %652 = vmatpush1.xpose.msra.mxu0 0.0
        %653 = vmatprep.subr.mxu0 0.0
        %654 = vmatpush1.xpose.msra.mxu0 0.0
        %655 = vmatprep.subr.mxu0 0.0
        %656 = vmatpush1.xpose.msra.mxu0 0.0
        %657 = vmatprep.subr.mxu0 0.0
        %658 = vmatpush1.xpose.msra.mxu0 0.0
        %659 = vmatprep.subr.mxu0 0.0
        %660 = vmatpush1.xpose.msra.mxu0 0.0
        %661 = vmatprep.subr.mxu0 0.0
        %662 = vmatpush1.xpose.msra.mxu0 0.0
        %663 = vmatprep.subr.mxu0 0.0
        %664 = vmatpush1.xpose.msra.mxu0 0.0
        %665 = vmatprep.subr.mxu0 0.0
        %666 = vmatpush1.xpose.msra.mxu0 0.0
        %667 = vmatprep.subr.mxu0 0.0
        %668 = vmatpush1.xpose.msra.mxu0 0.0
        %669 = vmatprep.subr.mxu0 0.0
        %670 = vmatpush1.xpose.msra.mxu0 0.0
        %671 = vmatprep.subr.mxu0 0.0
        %672 = vmatpush1.xpose.msra.mxu0 0.0
        %673 = vmatprep.subr.mxu0 0.0
        %674 = vmatpush1.xpose.msra.mxu0 0.0
        %675 = vmatprep.subr.mxu0 0.0
        %676 = vmatpush1.xpose.msra.mxu0 0.0
        %677 = vmatprep.subr.mxu0 0.0
        %678 = vmatpush1.xpose.msra.mxu0 0.0
        %679 = vmatprep.subr.mxu0 0.0
        %680 = vmatpush1.xpose.msra.mxu0 0.0
        %681 = vmatprep.subr.mxu0 0.0
        %682 = vmatpush1.xpose.msra.mxu0 0.0
        %683 = vmatprep.subr.mxu0 0.0
        %684 = vmatpush1.xpose.msra.mxu0 0.0
        %685 = vmatprep.subr.mxu0 0.0
        %686 = vmatpush1.xpose.msra.mxu0 0.0
        %687 = vmatprep.mubr.f32.mxu0 0.0
        %688 = vmatmul.mubr.f32.gmra.mrb[0].mxu0 %v618
        %v689 = vpop.f32.mrb[0].mxu0
        %v690 = vadd.f32 0.0, %v689
        %v691 = vpop.f32.mrb[0].mxu0
        %692 = vdwg.mxu0
        %v693 = vld [vmem:[#allocation3] sm:$0xff]
        %v694 = vsel %vm616, %v690, -inf
        %695 = vmax.xlane.f32.xlu0 %v694
        %v696 = vpop.xlane.xlu0 %695
        %v697 = vmax.f32 %v693, %v696
        %v698 = vsub.f32 %v693, %v697
        %v699 = vmul.f32 %v698, 1.442695
        %v700 = vpow.pop %v699
        %702 = vset.pattern.permute.xlu0 0
        %703 = vperm.xlu0 %702, %v697
        %v704 = vpop.permute.xlu0 %703
        %v706 = vsub.f32 %v690, %v704
        %v707 = vmul.f32 %v706, 1.442695
        %v708 = vpow.pop %v707
        %v709 = vld [vmem:[#allocation4] sm:$0xff]
        %v710 = vmul.f32 %v700, %v709
        %v711 = vsel %vm616, %v708, 0.0
        %712 = vadd.xlane.f32.xlu0 %v711
        %v713 = vpop.xlane.xlu0 %712
        %v714 = vadd.f32 %v710, %v713
        %vm715 = vcmask 7168
        %716 = vst.msk [vmem:[#allocation4] sm:$0xff] %vm715, %v714
        %v717 = vld [vmem:[#allocation5] sm:$0xff]
        %719 = vset.pattern.permute.xlu0 0
        %720 = vperm.xlu0 %719, %v700
        %v721 = vpop.permute.xlu0 %720
        %v723 = vmul.f32 %v721, %v717
        %724 = vrot.lane.b32.xlu0 %v612, 96
        %v725 = vpop.permute.xlu0 %724
        %v728 = vsel %vm616, %v708, 0
        %730 = vmatprep.subr.mxu0 0.0
        %731 = vmatpush1.msra.mxu0 %v725
        %732 = vmatprep.subr.mxu0 0.0
        %733 = vmatpush1.msra.mxu0 0.0
        %734 = vmatprep.subr.mxu0 0.0
        %735 = vmatpush1.msra.mxu0 0.0
        %736 = vmatprep.subr.mxu0 0.0
        %737 = vmatpush1.msra.mxu0 0.0
        %738 = vmatprep.subr.mxu0 0.0
        %739 = vmatpush1.msra.mxu0 0.0
        %740 = vmatprep.subr.mxu0 0.0
        %741 = vmatpush1.msra.mxu0 0.0
        %742 = vmatprep.subr.mxu0 0.0
        %743 = vmatpush1.msra.mxu0 0.0
        %744 = vmatprep.subr.mxu0 0.0
        %745 = vmatpush1.msra.mxu0 0.0
        %746 = vmatprep.subr.mxu0 0.0
        %747 = vmatpush1.msra.mxu0 0.0
        %748 = vmatprep.subr.mxu0 0.0
        %749 = vmatpush1.msra.mxu0 0.0
        %750 = vmatprep.subr.mxu0 0.0
        %751 = vmatpush1.msra.mxu0 0.0
        %752 = vmatprep.subr.mxu0 0.0
        %753 = vmatpush1.msra.mxu0 0.0
        %754 = vmatprep.subr.mxu0 0.0
        %755 = vmatpush1.msra.mxu0 0.0
        %756 = vmatprep.subr.mxu0 0.0
        %757 = vmatpush1.msra.mxu0 0.0
        %758 = vmatprep.subr.mxu0 0.0
        %759 = vmatpush1.msra.mxu0 0.0
        %760 = vmatprep.subr.mxu0 0.0
        %761 = vmatpush1.msra.mxu0 0.0
        %762 = vmatprep.subr.mxu0 0.0
        %763 = vmatpush1.msra.mxu0 0.0
        %764 = vmatprep.subr.mxu0 0.0
        %765 = vmatpush1.msra.mxu0 0.0
        %766 = vmatprep.subr.mxu0 0.0
        %767 = vmatpush1.msra.mxu0 0.0
        %768 = vmatprep.subr.mxu0 0.0
        %769 = vmatpush1.msra.mxu0 0.0
        %770 = vmatprep.subr.mxu0 0.0
        %771 = vmatpush1.msra.mxu0 0.0
        %772 = vmatprep.subr.mxu0 0.0
        %773 = vmatpush1.msra.mxu0 0.0
        %774 = vmatprep.subr.mxu0 0.0
        %775 = vmatpush1.msra.mxu0 0.0
        %776 = vmatprep.subr.mxu0 0.0
        %777 = vmatpush1.msra.mxu0 0.0
        %778 = vmatprep.subr.mxu0 0.0
        %779 = vmatpush1.msra.mxu0 0.0
        %780 = vmatprep.subr.mxu0 0.0
        %781 = vmatpush1.msra.mxu0 0.0
        %782 = vmatprep.subr.mxu0 0.0
        %783 = vmatpush1.msra.mxu0 0.0
        %784 = vmatprep.subr.mxu0 0.0
        %785 = vmatpush1.msra.mxu0 0.0
        %786 = vmatprep.subr.mxu0 0.0
        %787 = vmatpush1.msra.mxu0 0.0
        %788 = vmatprep.subr.mxu0 0.0
        %789 = vmatpush1.msra.mxu0 0.0
        %790 = vmatprep.subr.mxu0 0.0
        %791 = vmatpush1.msra.mxu0 0.0
        %792 = vmatprep.subr.mxu0 0.0
        %793 = vmatpush1.msra.mxu0 0.0
        %794 = vmatprep.mubr.f32.mxu0 0.0
        %795 = vmatmul.mubr.f32.gmra.mrb[0].mxu0 %v728
        %v796 = vpop.f32.mrb[0].mxu0
        %v797 = vadd.f32 0.0, %v796
        %v798 = vpop.f32.mrb[0].mxu0
        %799 = vdwg.mxu0
        %v800 = vadd.f32 %v723, %v797
        %801 = vst.msk [vmem:[#allocation5] sm:$0xff] %vm616, %v800
        %802 = vst.msk [vmem:[#allocation3] sm:$0xff] %vm715, %v697
        %v803 = vld [vmem:[#allocation2] sm:$0xff]
        %805 = vrot.lane.b32.xlu0 %v803, 120
        %v806 = vpop.permute.xlu0 %805
        %807 = vrot.lane.b32.xlu0 %v612, 120
        %v808 = vpop.permute.xlu0 %807
        %v809 = vsel %vm616, %v806, 0
        %v811 = vsel %vm616, %v808, 0
        %813 = vmatprep.subr.mxu0 0.0
        %814 = vmatpush1.xpose.msra.mxu0 %v811
        %815 = vmatprep.subr.mxu0 0.0
        %816 = vmatpush1.xpose.msra.mxu0 0.0
        %817 = vmatprep.subr.mxu0 0.0
        %818 = vmatpush1.xpose.msra.mxu0 0.0
        %819 = vmatprep.subr.mxu0 0.0
        %820 = vmatpush1.xpose.msra.mxu0 0.0
        %821 = vmatprep.subr.mxu0 0.0
        %822 = vmatpush1.xpose.msra.mxu0 0.0
        %823 = vmatprep.subr.mxu0 0.0
        %824 = vmatpush1.xpose.msra.mxu0 0.0
        %825 = vmatprep.subr.mxu0 0.0
        %826 = vmatpush1.xpose.msra.mxu0 0.0
        %827 = vmatprep.subr.mxu0 0.0
        %828 = vmatpush1.xpose.msra.mxu0 0.0
        %829 = vmatprep.subr.mxu0 0.0
        %830 = vmatpush1.xpose.msra.mxu0 0.0
        %831 = vmatprep.subr.mxu0 0.0
        %832 = vmatpush1.xpose.msra.mxu0 0.0
        %833 = vmatprep.subr.mxu0 0.0
        %834 = vmatpush1.xpose.msra.mxu0 0.0
        %835 = vmatprep.subr.mxu0 0.0
        %836 = vmatpush1.xpose.msra.mxu0 0.0
        %837 = vmatprep.subr.mxu0 0.0
        %838 = vmatpush1.xpose.msra.mxu0 0.0
        %839 = vmatprep.subr.mxu0 0.0
        %840 = vmatpush1.xpose.msra.mxu0 0.0
        %841 = vmatprep.subr.mxu0 0.0
        %842 = vmatpush1.xpose.msra.mxu0 0.0
        %843 = vmatprep.subr.mxu0 0.0
        %844 = vmatpush1.xpose.msra.mxu0 0.0
        %845 = vmatprep.subr.mxu0 0.0
        %846 = vmatpush1.xpose.msra.mxu0 0.0
        %847 = vmatprep.subr.mxu0 0.0
        %848 = vmatpush1.xpose.msra.mxu0 0.0
        %849 = vmatprep.subr.mxu0 0.0
        %850 = vmatpush1.xpose.msra.mxu0 0.0
        %851 = vmatprep.subr.mxu0 0.0
        %852 = vmatpush1.xpose.msra.mxu0 0.0
        %853 = vmatprep.subr.mxu0 0.0
        %854 = vmatpush1.xpose.msra.mxu0 0.0
        %855 = vmatprep.subr.mxu0 0.0
        %856 = vmatpush1.xpose.msra.mxu0 0.0
        %857 = vmatprep.subr.mxu0 0.0
        %858 = vmatpush1.xpose.msra.mxu0 0.0
        %859 = vmatprep.subr.mxu0 0.0
        %860 = vmatpush1.xpose.msra.mxu0 0.0
        %861 = vmatprep.subr.mxu0 0.0
        %862 = vmatpush1.xpose.msra.mxu0 0.0
        %863 = vmatprep.subr.mxu0 0.0
        %864 = vmatpush1.xpose.msra.mxu0 0.0
        %865 = vmatprep.subr.mxu0 0.0
        %866 = vmatpush1.xpose.msra.mxu0 0.0
        %867 = vmatprep.subr.mxu0 0.0
        %868 = vmatpush1.xpose.msra.mxu0 0.0
        %869 = vmatprep.subr.mxu0 0.0
        %870 = vmatpush1.xpose.msra.mxu0 0.0
        %871 = vmatprep.subr.mxu0 0.0
        %872 = vmatpush1.xpose.msra.mxu0 0.0
        %873 = vmatprep.subr.mxu0 0.0
        %874 = vmatpush1.xpose.msra.mxu0 0.0
        %875 = vmatprep.subr.mxu0 0.0
        %876 = vmatpush1.xpose.msra.mxu0 0.0
        %877 = vmatprep.mubr.f32.mxu0 0.0
        %878 = vmatmul.mubr.f32.gmra.mrb[0].mxu0 %v809
        %v879 = vpop.f32.mrb[0].mxu0
        %v880 = vadd.f32 0.0, %v879
        %v881 = vpop.f32.mrb[0].mxu0
        %882 = vdwg.mxu0
        %s883 = scalar_lea.vmem [#allocation3], 8
        %v884 = vld [vmem:[%s883] sm:$0xff]
        %v885 = vsel %vm616, %v880, -inf
        %886 = vmax.xlane.f32.xlu0 %v885
        %v887 = vpop.xlane.xlu0 %886
        %v888 = vmax.f32 %v884, %v887
        %v889 = vsub.f32 %v884, %v888
        %v890 = vmul.f32 %v889, 1.442695
        %v891 = vpow.pop %v890
        %893 = vset.pattern.permute.xlu0 0
        %894 = vperm.xlu0 %893, %v888
        %v895 = vpop.permute.xlu0 %894
        %v897 = vsub.f32 %v880, %v895
        %v898 = vmul.f32 %v897, 1.442695
        %v899 = vpow.pop %v898
        %s900 = scalar_lea.vmem [#allocation4], 8
        %v901 = vld [vmem:[%s900] sm:$0xff]
        %v902 = vmul.f32 %v891, %v901
        %v903 = vsel %vm616, %v899, 0.0
        %904 = vadd.xlane.f32.xlu0 %v903
        %v905 = vpop.xlane.xlu0 %904
        %v906 = vadd.f32 %v902, %v905
        %907 = vst.msk [vmem:[%s900] sm:$0xff] %vm715, %v906
        %v908 = vld [vmem:[#allocation5] sm:$0xff]
        %910 = vset.pattern.permute.xlu0 0
        %911 = vperm.xlu0 %910, %v891
        %v912 = vpop.permute.xlu0 %911
        %v914 = vmul.f32 %v912, %v908
        %915 = vrot.lane.b32.xlu0 %v612, 88
        %v916 = vpop.permute.xlu0 %915
        %v919 = vsel %vm616, %v899, 0
        %921 = vmatprep.subr.mxu0 0.0
        %922 = vmatpush1.msra.mxu0 %v916
        %923 = vmatprep.subr.mxu0 0.0
        %924 = vmatpush1.msra.mxu0 0.0
        %925 = vmatprep.subr.mxu0 0.0
        %926 = vmatpush1.msra.mxu0 0.0
        %927 = vmatprep.subr.mxu0 0.0
        %928 = vmatpush1.msra.mxu0 0.0
        %929 = vmatprep.subr.mxu0 0.0
        %930 = vmatpush1.msra.mxu0 0.0
        %931 = vmatprep.subr.mxu0 0.0
        %932 = vmatpush1.msra.mxu0 0.0
        %933 = vmatprep.subr.mxu0 0.0
        %934 = vmatpush1.msra.mxu0 0.0
        %935 = vmatprep.subr.mxu0 0.0
        %936 = vmatpush1.msra.mxu0 0.0
        %937 = vmatprep.subr.mxu0 0.0
        %938 = vmatpush1.msra.mxu0 0.0
        %939 = vmatprep.subr.mxu0 0.0
        %940 = vmatpush1.msra.mxu0 0.0
        %941 = vmatprep.subr.mxu0 0.0
        %942 = vmatpush1.msra.mxu0 0.0
        %943 = vmatprep.subr.mxu0 0.0
        %944 = vmatpush1.msra.mxu0 0.0
        %945 = vmatprep.subr.mxu0 0.0
        %946 = vmatpush1.msra.mxu0 0.0
        %947 = vmatprep.subr.mxu0 0.0
        %948 = vmatpush1.msra.mxu0 0.0
        %949 = vmatprep.subr.mxu0 0.0
        %950 = vmatpush1.msra.mxu0 0.0
        %951 = vmatprep.subr.mxu0 0.0
        %952 = vmatpush1.msra.mxu0 0.0
        %953 = vmatprep.subr.mxu0 0.0
        %954 = vmatpush1.msra.mxu0 0.0
        %955 = vmatprep.subr.mxu0 0.0
        %956 = vmatpush1.msra.mxu0 0.0
        %957 = vmatprep.subr.mxu0 0.0
        %958 = vmatpush1.msra.mxu0 0.0
        %959 = vmatprep.subr.mxu0 0.0
        %960 = vmatpush1.msra.mxu0 0.0
        %961 = vmatprep.subr.mxu0 0.0
        %962 = vmatpush1.msra.mxu0 0.0
        %963 = vmatprep.subr.mxu0 0.0
        %964 = vmatpush1.msra.mxu0 0.0
        %965 = vmatprep.subr.mxu0 0.0
        %966 = vmatpush1.msra.mxu0 0.0
        %967 = vmatprep.subr.mxu0 0.0
        %968 = vmatpush1.msra.mxu0 0.0
        %969 = vmatprep.subr.mxu0 0.0
        %970 = vmatpush1.msra.mxu0 0.0
        %971 = vmatprep.subr.mxu0 0.0
        %972 = vmatpush1.msra.mxu0 0.0
        %973 = vmatprep.subr.mxu0 0.0
        %974 = vmatpush1.msra.mxu0 0.0
        %975 = vmatprep.subr.mxu0 0.0
        %976 = vmatpush1.msra.mxu0 0.0
        %977 = vmatprep.subr.mxu0 0.0
        %978 = vmatpush1.msra.mxu0 0.0
        %979 = vmatprep.subr.mxu0 0.0
        %980 = vmatpush1.msra.mxu0 0.0
        %981 = vmatprep.subr.mxu0 0.0
        %982 = vmatpush1.msra.mxu0 0.0
        %983 = vmatprep.subr.mxu0 0.0
        %984 = vmatpush1.msra.mxu0 0.0
        %985 = vmatprep.mubr.f32.mxu0 0.0
        %986 = vmatmul.mubr.f32.gmra.mrb[0].mxu0 %v919
        %v987 = vpop.f32.mrb[0].mxu0
        %v988 = vadd.f32 0.0, %v987
        %v989 = vpop.f32.mrb[0].mxu0
        %990 = vdwg.mxu0
        %992 = vrot.lane.b32.xlu0 %v988, 8
        %v993 = vpop.permute.xlu0 %992
        %v995 = vadd.f32 %v914, %v993
        %vm996 = vcmask 130112
        %997 = vst.msk [vmem:[#allocation5] sm:$0xff] %vm996, %v995
        %998 = vst.msk [vmem:[%s883] sm:$0xff] %vm715, %v888
        %v999 = vld [vmem:[#allocation2] sm:$0xff]
        %1001 = vrot.lane.b32.xlu0 %v999, 112
        %v1002 = vpop.permute.xlu0 %1001
        %1003 = vrot.lane.b32.xlu0 %v612, 112
        %v1004 = vpop.permute.xlu0 %1003
        %v1005 = vsel %vm616, %v1002, 0
        %v1007 = vsel %vm616, %v1004, 0
        %1009 = vmatprep.subr.mxu0 0.0
        %1010 = vmatpush1.xpose.msra.mxu0 %v1007
        %1011 = vmatprep.subr.mxu0 0.0
        %1012 = vmatpush1.xpose.msra.mxu0 0.0
        %1013 = vmatprep.subr.mxu0 0.0
        %1014 = vmatpush1.xpose.msra.mxu0 0.0
        %1015 = vmatprep.subr.mxu0 0.0
        %1016 = vmatpush1.xpose.msra.mxu0 0.0
        %1017 = vmatprep.subr.mxu0 0.0
        %1018 = vmatpush1.xpose.msra.mxu0 0.0
        %1019 = vmatprep.subr.mxu0 0.0
        %1020 = vmatpush1.xpose.msra.mxu0 0.0
        %1021 = vmatprep.subr.mxu0 0.0
        %1022 = vmatpush1.xpose.msra.mxu0 0.0
        %1023 = vmatprep.subr.mxu0 0.0
        %1024 = vmatpush1.xpose.msra.mxu0 0.0
        %1025 = vmatprep.subr.mxu0 0.0
        %1026 = vmatpush1.xpose.msra.mxu0 0.0
        %1027 = vmatprep.subr.mxu0 0.0
        %1028 = vmatpush1.xpose.msra.mxu0 0.0
        %1029 = vmatprep.subr.mxu0 0.0
        %1030 = vmatpush1.xpose.msra.mxu0 0.0
        %1031 = vmatprep.subr.mxu0 0.0
        %1032 = vmatpush1.xpose.msra.mxu0 0.0
        %1033 = vmatprep.subr.mxu0 0.0
        %1034 = vmatpush1.xpose.msra.mxu0 0.0
        %1035 = vmatprep.subr.mxu0 0.0
        %1036 = vmatpush1.xpose.msra.mxu0 0.0
        %1037 = vmatprep.subr.mxu0 0.0
        %1038 = vmatpush1.xpose.msra.mxu0 0.0
        %1039 = vmatprep.subr.mxu0 0.0
        %1040 = vmatpush1.xpose.msra.mxu0 0.0
        %1041 = vmatprep.subr.mxu0 0.0
        %1042 = vmatpush1.xpose.msra.mxu0 0.0
        %1043 = vmatprep.subr.mxu0 0.0
        %1044 = vmatpush1.xpose.msra.mxu0 0.0
        %1045 = vmatprep.subr.mxu0 0.0
        %1046 = vmatpush1.xpose.msra.mxu0 0.0
        %1047 = vmatprep.subr.mxu0 0.0
        %1048 = vmatpush1.xpose.msra.mxu0 0.0
        %1049 = vmatprep.subr.mxu0 0.0
        %1050 = vmatpush1.xpose.msra.mxu0 0.0
        %1051 = vmatprep.subr.mxu0 0.0
        %1052 = vmatpush1.xpose.msra.mxu0 0.0
        %1053 = vmatprep.subr.mxu0 0.0
        %1054 = vmatpush1.xpose.msra.mxu0 0.0
        %1055 = vmatprep.subr.mxu0 0.0
        %1056 = vmatpush1.xpose.msra.mxu0 0.0
        %1057 = vmatprep.subr.mxu0 0.0
        %1058 = vmatpush1.xpose.msra.mxu0 0.0
        %1059 = vmatprep.subr.mxu0 0.0
        %1060 = vmatpush1.xpose.msra.mxu0 0.0
        %1061 = vmatprep.subr.mxu0 0.0
        %1062 = vmatpush1.xpose.msra.mxu0 0.0
        %1063 = vmatprep.subr.mxu0 0.0
        %1064 = vmatpush1.xpose.msra.mxu0 0.0
        %1065 = vmatprep.subr.mxu0 0.0
        %1066 = vmatpush1.xpose.msra.mxu0 0.0
        %1067 = vmatprep.subr.mxu0 0.0
        %1068 = vmatpush1.xpose.msra.mxu0 0.0
        %1069 = vmatprep.subr.mxu0 0.0
        %1070 = vmatpush1.xpose.msra.mxu0 0.0
        %1071 = vmatprep.subr.mxu0 0.0
        %1072 = vmatpush1.xpose.msra.mxu0 0.0
        %1073 = vmatprep.mubr.f32.mxu0 0.0
        %1074 = vmatmul.mubr.f32.gmra.mrb[0].mxu0 %v1005
        %v1075 = vpop.f32.mrb[0].mxu0
        %v1076 = vadd.f32 0.0, %v1075
        %v1077 = vpop.f32.mrb[0].mxu0
        %1078 = vdwg.mxu0
        %s1079 = scalar_lea.vmem [#allocation3], 16
        %v1080 = vld [vmem:[%s1079] sm:$0xff]
        %v1081 = vsel %vm616, %v1076, -inf
        %1082 = vmax.xlane.f32.xlu0 %v1081
        %v1083 = vpop.xlane.xlu0 %1082
        %v1084 = vmax.f32 %v1080, %v1083
        %v1085 = vsub.f32 %v1080, %v1084
        %v1086 = vmul.f32 %v1085, 1.442695
        %v1087 = vpow.pop %v1086
        %1089 = vset.pattern.permute.xlu0 0
        %1090 = vperm.xlu0 %1089, %v1084
        %v1091 = vpop.permute.xlu0 %1090
        %v1093 = vsub.f32 %v1076, %v1091
        %v1094 = vmul.f32 %v1093, 1.442695
        %v1095 = vpow.pop %v1094
        %s1096 = scalar_lea.vmem [#allocation4], 16
        %v1097 = vld [vmem:[%s1096] sm:$0xff]
        %v1098 = vmul.f32 %v1087, %v1097
        %v1099 = vsel %vm616, %v1095, 0.0
        %1100 = vadd.xlane.f32.xlu0 %v1099
        %v1101 = vpop.xlane.xlu0 %1100
        %v1102 = vadd.f32 %v1098, %v1101
        %1103 = vst.msk [vmem:[%s1096] sm:$0xff] %vm715, %v1102
        %v1104 = vld [vmem:[#allocation5] sm:$0xff]
        %1106 = vset.pattern.permute.xlu0 0
        %1107 = vperm.xlu0 %1106, %v1087
        %v1108 = vpop.permute.xlu0 %1107
        %v1110 = vmul.f32 %v1108, %v1104
        %1111 = vrot.lane.b32.xlu0 %v612, 80
        %v1112 = vpop.permute.xlu0 %1111
        %v1115 = vsel %vm616, %v1095, 0
        %1117 = vmatprep.subr.mxu0 0.0
        %1118 = vmatpush1.msra.mxu0 %v1112
        %1119 = vmatprep.subr.mxu0 0.0
        %1120 = vmatpush1.msra.mxu0 0.0
        %1121 = vmatprep.subr.mxu0 0.0
        %1122 = vmatpush1.msra.mxu0 0.0
        %1123 = vmatprep.subr.mxu0 0.0
        %1124 = vmatpush1.msra.mxu0 0.0
        %1125 = vmatprep.subr.mxu0 0.0
        %1126 = vmatpush1.msra.mxu0 0.0
        %1127 = vmatprep.subr.mxu0 0.0
        %1128 = vmatpush1.msra.mxu0 0.0
        %1129 = vmatprep.subr.mxu0 0.0
        %1130 = vmatpush1.msra.mxu0 0.0
        %1131 = vmatprep.subr.mxu0 0.0
        %1132 = vmatpush1.msra.mxu0 0.0
        %1133 = vmatprep.subr.mxu0 0.0
        %1134 = vmatpush1.msra.mxu0 0.0
        %1135 = vmatprep.subr.mxu0 0.0
        %1136 = vmatpush1.msra.mxu0 0.0
        %1137 = vmatprep.subr.mxu0 0.0
        %1138 = vmatpush1.msra.mxu0 0.0
        %1139 = vmatprep.subr.mxu0 0.0
        %1140 = vmatpush1.msra.mxu0 0.0
        %1141 = vmatprep.subr.mxu0 0.0
        %1142 = vmatpush1.msra.mxu0 0.0
        %1143 = vmatprep.subr.mxu0 0.0
        %1144 = vmatpush1.msra.mxu0 0.0
        %1145 = vmatprep.subr.mxu0 0.0
        %1146 = vmatpush1.msra.mxu0 0.0
        %1147 = vmatprep.subr.mxu0 0.0
        %1148 = vmatpush1.msra.mxu0 0.0
        %1149 = vmatprep.subr.mxu0 0.0
        %1150 = vmatpush1.msra.mxu0 0.0
        %1151 = vmatprep.subr.mxu0 0.0
        %1152 = vmatpush1.msra.mxu0 0.0
        %1153 = vmatprep.subr.mxu0 0.0
        %1154 = vmatpush1.msra.mxu0 0.0
        %1155 = vmatprep.subr.mxu0 0.0
        %1156 = vmatpush1.msra.mxu0 0.0
        %1157 = vmatprep.subr.mxu0 0.0
        %1158 = vmatpush1.msra.mxu0 0.0
        %1159 = vmatprep.subr.mxu0 0.0
        %1160 = vmatpush1.msra.mxu0 0.0
        %1161 = vmatprep.subr.mxu0 0.0
        %1162 = vmatpush1.msra.mxu0 0.0
        %1163 = vmatprep.subr.mxu0 0.0
        %1164 = vmatpush1.msra.mxu0 0.0
        %1165 = vmatprep.subr.mxu0 0.0
        %1166 = vmatpush1.msra.mxu0 0.0
        %1167 = vmatprep.subr.mxu0 0.0
        %1168 = vmatpush1.msra.mxu0 0.0
        %1169 = vmatprep.subr.mxu0 0.0
        %1170 = vmatpush1.msra.mxu0 0.0
        %1171 = vmatprep.subr.mxu0 0.0
        %1172 = vmatpush1.msra.mxu0 0.0
        %1173 = vmatprep.subr.mxu0 0.0
        %1174 = vmatpush1.msra.mxu0 0.0
        %1175 = vmatprep.subr.mxu0 0.0
        %1176 = vmatpush1.msra.mxu0 0.0
        %1177 = vmatprep.subr.mxu0 0.0
        %1178 = vmatpush1.msra.mxu0 0.0
        %1179 = vmatprep.subr.mxu0 0.0
        %1180 = vmatpush1.msra.mxu0 0.0
        %1181 = vmatprep.mubr.f32.mxu0 0.0
        %1182 = vmatmul.mubr.f32.gmra.mrb[0].mxu0 %v1115
        %v1183 = vpop.f32.mrb[0].mxu0
        %v1184 = vadd.f32 0.0, %v1183
        %v1185 = vpop.f32.mrb[0].mxu0
        %1186 = vdwg.mxu0
        %1188 = vrot.lane.b32.xlu0 %v1184, 16
        %v1189 = vpop.permute.xlu0 %1188
        %v1191 = vadd.f32 %v1110, %v1189
        %vm1192 = vcmask 195712
        %1193 = vst.msk [vmem:[#allocation5] sm:$0xff] %vm1192, %v1191
        %1194 = vst.msk [vmem:[%s1079] sm:$0xff] %vm715, %v1084
        %v1195 = vld [vmem:[#allocation2] sm:$0xff]
        %1197 = vrot.lane.b32.xlu0 %v1195, 104
        %v1198 = vpop.permute.xlu0 %1197
        %1199 = vrot.lane.b32.xlu0 %v612, 104
        %v1200 = vpop.permute.xlu0 %1199
        %v1201 = vsel %vm616, %v1198, 0
        %v1203 = vsel %vm616, %v1200, 0
        %1205 = vmatprep.subr.mxu0 0.0
        %1206 = vmatpush1.xpose.msra.mxu0 %v1203
        %1207 = vmatprep.subr.mxu0 0.0
        %1208 = vmatpush1.xpose.msra.mxu0 0.0
        %1209 = vmatprep.subr.mxu0 0.0
        %1210 = vmatpush1.xpose.msra.mxu0 0.0
        %1211 = vmatprep.subr.mxu0 0.0
        %1212 = vmatpush1.xpose.msra.mxu0 0.0
        %1213 = vmatprep.subr.mxu0 0.0
        %1214 = vmatpush1.xpose.msra.mxu0 0.0
        %1215 = vmatprep.subr.mxu0 0.0
        %1216 = vmatpush1.xpose.msra.mxu0 0.0
        %1217 = vmatprep.subr.mxu0 0.0
        %1218 = vmatpush1.xpose.msra.mxu0 0.0
        %1219 = vmatprep.subr.mxu0 0.0
        %1220 = vmatpush1.xpose.msra.mxu0 0.0
        %1221 = vmatprep.subr.mxu0 0.0
        %1222 = vmatpush1.xpose.msra.mxu0 0.0
        %1223 = vmatprep.subr.mxu0 0.0
        %1224 = vmatpush1.xpose.msra.mxu0 0.0
        %1225 = vmatprep.subr.mxu0 0.0
        %1226 = vmatpush1.xpose.msra.mxu0 0.0
        %1227 = vmatprep.subr.mxu0 0.0
        %1228 = vmatpush1.xpose.msra.mxu0 0.0
        %1229 = vmatprep.subr.mxu0 0.0
        %1230 = vmatpush1.xpose.msra.mxu0 0.0
        %1231 = vmatprep.subr.mxu0 0.0
        %1232 = vmatpush1.xpose.msra.mxu0 0.0
        %1233 = vmatprep.subr.mxu0 0.0
        %1234 = vmatpush1.xpose.msra.mxu0 0.0
        %1235 = vmatprep.subr.mxu0 0.0
        %1236 = vmatpush1.xpose.msra.mxu0 0.0
        %1237 = vmatprep.subr.mxu0 0.0
        %1238 = vmatpush1.xpose.msra.mxu0 0.0
        %1239 = vmatprep.subr.mxu0 0.0
        %1240 = vmatpush1.xpose.msra.mxu0 0.0
        %1241 = vmatprep.subr.mxu0 0.0
        %1242 = vmatpush1.xpose.msra.mxu0 0.0
        %1243 = vmatprep.subr.mxu0 0.0
        %1244 = vmatpush1.xpose.msra.mxu0 0.0
        %1245 = vmatprep.subr.mxu0 0.0
        %1246 = vmatpush1.xpose.msra.mxu0 0.0
        %1247 = vmatprep.subr.mxu0 0.0
        %1248 = vmatpush1.xpose.msra.mxu0 0.0
        %1249 = vmatprep.subr.mxu0 0.0
        %1250 = vmatpush1.xpose.msra.mxu0 0.0
        %1251 = vmatprep.subr.mxu0 0.0
        %1252 = vmatpush1.xpose.msra.mxu0 0.0
        %1253 = vmatprep.subr.mxu0 0.0
        %1254 = vmatpush1.xpose.msra.mxu0 0.0
        %1255 = vmatprep.subr.mxu0 0.0
        %1256 = vmatpush1.xpose.msra.mxu0 0.0
        %1257 = vmatprep.subr.mxu0 0.0
        %1258 = vmatpush1.xpose.msra.mxu0 0.0
        %1259 = vmatprep.subr.mxu0 0.0
        %1260 = vmatpush1.xpose.msra.mxu0 0.0
        %1261 = vmatprep.subr.mxu0 0.0
        %1262 = vmatpush1.xpose.msra.mxu0 0.0
        %1263 = vmatprep.subr.mxu0 0.0
        %1264 = vmatpush1.xpose.msra.mxu0 0.0
        %1265 = vmatprep.subr.mxu0 0.0
        %1266 = vmatpush1.xpose.msra.mxu0 0.0
        %1267 = vmatprep.subr.mxu0 0.0
        %1268 = vmatpush1.xpose.msra.mxu0 0.0
        %1269 = vmatprep.mubr.f32.mxu0 0.0
        %1270 = vmatmul.mubr.f32.gmra.mrb[0].mxu0 %v1201
        %v1271 = vpop.f32.mrb[0].mxu0
        %v1272 = vadd.f32 0.0, %v1271
        %v1273 = vpop.f32.mrb[0].mxu0
        %1274 = vdwg.mxu0
        %s1275 = scalar_lea.vmem [#allocation3], 24
        %v1276 = vld [vmem:[%s1275] sm:$0xff]
        %v1277 = vsel %vm616, %v1272, -inf
        %1278 = vmax.xlane.f32.xlu0 %v1277
        %v1279 = vpop.xlane.xlu0 %1278
        %v1280 = vmax.f32 %v1276, %v1279
        %v1281 = vsub.f32 %v1276, %v1280
        %v1282 = vmul.f32 %v1281, 1.442695
        %v1283 = vpow.pop %v1282
        %1285 = vset.pattern.permute.xlu0 0
        %1286 = vperm.xlu0 %1285, %v1280
        %v1287 = vpop.permute.xlu0 %1286
        %v1289 = vsub.f32 %v1272, %v1287
        %v1290 = vmul.f32 %v1289, 1.442695
        %v1291 = vpow.pop %v1290
        %s1292 = scalar_lea.vmem [#allocation4], 24
        %v1293 = vld [vmem:[%s1292] sm:$0xff]
        %v1294 = vmul.f32 %v1283, %v1293
        %v1295 = vsel %vm616, %v1291, 0.0
        %1296 = vadd.xlane.f32.xlu0 %v1295
        %v1297 = vpop.xlane.xlu0 %1296
        %v1298 = vadd.f32 %v1294, %v1297
        %1299 = vst.msk [vmem:[%s1292] sm:$0xff] %vm715, %v1298
        %v1300 = vld [vmem:[#allocation5] sm:$0xff]
        %1302 = vset.pattern.permute.xlu0 0
        %1303 = vperm.xlu0 %1302, %v1283
        %v1304 = vpop.permute.xlu0 %1303
        %v1306 = vmul.f32 %v1304, %v1300
        %1307 = vrot.lane.b32.xlu0 %v612, 72
        %v1308 = vpop.permute.xlu0 %1307
        %v1311 = vsel %vm616, %v1291, 0
        %1313 = vmatprep.subr.mxu0 0.0
        %1314 = vmatpush1.msra.mxu0 %v1308
        %1315 = vmatprep.subr.mxu0 0.0
        %1316 = vmatpush1.msra.mxu0 0.0
        %1317 = vmatprep.subr.mxu0 0.0
        %1318 = vmatpush1.msra.mxu0 0.0
        %1319 = vmatprep.subr.mxu0 0.0
        %1320 = vmatpush1.msra.mxu0 0.0
        %1321 = vmatprep.subr.mxu0 0.0
        %1322 = vmatpush1.msra.mxu0 0.0
        %1323 = vmatprep.subr.mxu0 0.0
        %1324 = vmatpush1.msra.mxu0 0.0
        %1325 = vmatprep.subr.mxu0 0.0
        %1326 = vmatpush1.msra.mxu0 0.0
        %1327 = vmatprep.subr.mxu0 0.0
        %1328 = vmatpush1.msra.mxu0 0.0
        %1329 = vmatprep.subr.mxu0 0.0
        %1330 = vmatpush1.msra.mxu0 0.0
        %1331 = vmatprep.subr.mxu0 0.0
        %1332 = vmatpush1.msra.mxu0 0.0
        %1333 = vmatprep.subr.mxu0 0.0
        %1334 = vmatpush1.msra.mxu0 0.0
        %1335 = vmatprep.subr.mxu0 0.0
        %1336 = vmatpush1.msra.mxu0 0.0
        %1337 = vmatprep.subr.mxu0 0.0
        %1338 = vmatpush1.msra.mxu0 0.0
        %1339 = vmatprep.subr.mxu0 0.0
        %1340 = vmatpush1.msra.mxu0 0.0
        %1341 = vmatprep.subr.mxu0 0.0
        %1342 = vmatpush1.msra.mxu0 0.0
        %1343 = vmatprep.subr.mxu0 0.0
        %1344 = vmatpush1.msra.mxu0 0.0
        %1345 = vmatprep.subr.mxu0 0.0
        %1346 = vmatpush1.msra.mxu0 0.0
        %1347 = vmatprep.subr.mxu0 0.0
        %1348 = vmatpush1.msra.mxu0 0.0
        %1349 = vmatprep.subr.mxu0 0.0
        %1350 = vmatpush1.msra.mxu0 0.0
        %1351 = vmatprep.subr.mxu0 0.0
        %1352 = vmatpush1.msra.mxu0 0.0
        %1353 = vmatprep.subr.mxu0 0.0
        %1354 = vmatpush1.msra.mxu0 0.0
        %1355 = vmatprep.subr.mxu0 0.0
        %1356 = vmatpush1.msra.mxu0 0.0
        %1357 = vmatprep.subr.mxu0 0.0
        %1358 = vmatpush1.msra.mxu0 0.0
        %1359 = vmatprep.subr.mxu0 0.0
        %1360 = vmatpush1.msra.mxu0 0.0
        %1361 = vmatprep.subr.mxu0 0.0
        %1362 = vmatpush1.msra.mxu0 0.0
        %1363 = vmatprep.subr.mxu0 0.0
        %1364 = vmatpush1.msra.mxu0 0.0
        %1365 = vmatprep.subr.mxu0 0.0
        %1366 = vmatpush1.msra.mxu0 0.0
        %1367 = vmatprep.subr.mxu0 0.0
        %1368 = vmatpush1.msra.mxu0 0.0
        %1369 = vmatprep.subr.mxu0 0.0
        %1370 = vmatpush1.msra.mxu0 0.0
        %1371 = vmatprep.subr.mxu0 0.0
        %1372 = vmatpush1.msra.mxu0 0.0
        %1373 = vmatprep.subr.mxu0 0.0
        %1374 = vmatpush1.msra.mxu0 0.0
        %1375 = vmatprep.subr.mxu0 0.0
        %1376 = vmatpush1.msra.mxu0 0.0
        %1377 = vmatprep.mubr.f32.mxu0 0.0
        %1378 = vmatmul.mubr.f32.gmra.mrb[0].mxu0 %v1311
        %v1379 = vpop.f32.mrb[0].mxu0
        %v1380 = vadd.f32 0.0, %v1379
        %v1381 = vpop.f32.mrb[0].mxu0
        %1382 = vdwg.mxu0
        %1384 = vrot.lane.b32.xlu0 %v1380, 24
        %v1385 = vpop.permute.xlu0 %1384
        %v1387 = vadd.f32 %v1306, %v1385
        %vm1388 = vcmask 261312
        %1389 = vst.msk [vmem:[#allocation5] sm:$0xff] %vm1388, %v1387
        %1390 = vst.msk [vmem:[%s1275] sm:$0xff] %vm715, %v1280
        // Predicated region
        $region77: #{tpu_custom_call.1} parent=51 // pred_check
          %p1391 = pneg %p428
        $region78: #{tpu_custom_call.1} parent=51 // pred_check_branch
          %1393 = sbr.rel (%p1391) target = $region80
        $region79: #{tpu_custom_call.1} parent=51 // pred_region
          %v1394 = vld [vmem:[#allocation4] sm:$0xff]
          %v1395 = vrcp.pop %v1394
          %v1396 = vld [vmem:[#allocation5] sm:$0xff]
          %1398 = vset.pattern.permute.xlu0 0
          %1399 = vperm.xlu0 %1398, %v1395
          %v1400 = vpop.permute.xlu0 %1399
          %v1402 = vmul.f32 %v1396, %v1400
          %1403 = vst.msk [vmem:[#allocation5] sm:$0xff] %vm616, %v1402
          %v1404 = vld [vmem:[%s900] sm:$0xff]
          %v1405 = vrcp.pop %v1404
          %v1406 = vld [vmem:[#allocation5] sm:$0xff]
          %1408 = vset.pattern.permute.xlu0 0
          %1409 = vperm.xlu0 %1408, %v1405
          %v1410 = vpop.permute.xlu0 %1409
          %v1412 = vmul.f32 %v1406, %v1410
          %1413 = vst.msk [vmem:[#allocation5] sm:$0xff] %vm996, %v1412
          %v1414 = vld [vmem:[%s1096] sm:$0xff]
          %v1415 = vrcp.pop %v1414
          %v1416 = vld [vmem:[#allocation5] sm:$0xff]
          %1418 = vset.pattern.permute.xlu0 0
          %1419 = vperm.xlu0 %1418, %v1415
          %v1420 = vpop.permute.xlu0 %1419
          %v1422 = vmul.f32 %v1416, %v1420
          %1423 = vst.msk [vmem:[#allocation5] sm:$0xff] %vm1192, %v1422
          %v1424 = vld [vmem:[%s1292] sm:$0xff]
          %v1425 = vrcp.pop %v1424
          %v1426 = vld [vmem:[#allocation5] sm:$0xff]
          %1428 = vset.pattern.permute.xlu0 0
          %1429 = vperm.xlu0 %1428, %v1425
          %v1430 = vpop.permute.xlu0 %1429
          %v1432 = vmul.f32 %v1426, %v1430
          %1433 = vst.msk [vmem:[#allocation5] sm:$0xff] %vm1388, %v1432
          %v1434 = vld [vmem:[#allocation5] sm:$0xff]
          %v1435 = vld [vmem:[#allocation14] sm:$0xff]
          %v1436 = vld [vmem:[#allocation14 + $0x8] sm:$0xff]
          %v1437 = vld [vmem:[#allocation14 + $0x10] sm:$0xff]
          %v1438 = vld [vmem:[#allocation14 + $0x18] sm:$0xff]
          %v1439 = vld [vmem:[%s7] sm:$0x1]
          %v1441 = vlaneseq
          %v1442 = vshrl.u32 %v1441, 7
          %v1443 = vsub.s32 0, %v1442
          %v1444 = vrot.slane %v1439, %v1443
          %v1447 = vsel %vm541, %v1434, 0
          %1449 = vmatprep.subr.mxu0 0.0
          %1450 = vmatpush1.msra.mxu0 %v1435
          %1451 = vmatprep.subr.mxu0 0.0
          %1452 = vmatpush1.msra.mxu0 %v1436
          %1453 = vmatprep.subr.mxu0 0.0
          %1454 = vmatpush1.msra.mxu0 %v1437
          %1455 = vmatprep.subr.mxu0 0.0
          %1456 = vmatpush1.msra.mxu0 %v1438
          %1457 = vmatprep.subr.mxu0 0.0
          %1458 = vmatpush1.msra.mxu0 0.0
          %1459 = vmatprep.subr.mxu0 0.0
          %1460 = vmatpush1.msra.mxu0 0.0
          %1461 = vmatprep.subr.mxu0 0.0
          %1462 = vmatpush1.msra.mxu0 0.0
          %1463 = vmatprep.subr.mxu0 0.0
          %1464 = vmatpush1.msra.mxu0 0.0
          %1465 = vmatprep.subr.mxu0 0.0
          %1466 = vmatpush1.msra.mxu0 0.0
          %1467 = vmatprep.subr.mxu0 0.0
          %1468 = vmatpush1.msra.mxu0 0.0
          %1469 = vmatprep.subr.mxu0 0.0
          %1470 = vmatpush1.msra.mxu0 0.0
          %1471 = vmatprep.subr.mxu0 0.0
          %1472 = vmatpush1.msra.mxu0 0.0
          %1473 = vmatprep.subr.mxu0 0.0
          %1474 = vmatpush1.msra.mxu0 0.0
          %1475 = vmatprep.subr.mxu0 0.0
          %1476 = vmatpush1.msra.mxu0 0.0
          %1477 = vmatprep.subr.mxu0 0.0
          %1478 = vmatpush1.msra.mxu0 0.0
          %1479 = vmatprep.subr.mxu0 0.0
          %1480 = vmatpush1.msra.mxu0 0.0
          %1481 = vmatprep.subr.mxu0 0.0
          %1482 = vmatpush1.msra.mxu0 0.0
          %1483 = vmatprep.subr.mxu0 0.0
          %1484 = vmatpush1.msra.mxu0 0.0
          %1485 = vmatprep.subr.mxu0 0.0
          %1486 = vmatpush1.msra.mxu0 0.0
          %1487 = vmatprep.subr.mxu0 0.0
          %1488 = vmatpush1.msra.mxu0 0.0
          %1489 = vmatprep.subr.mxu0 0.0
          %1490 = vmatpush1.msra.mxu0 0.0
          %1491 = vmatprep.subr.mxu0 0.0
          %1492 = vmatpush1.msra.mxu0 0.0
          %1493 = vmatprep.subr.mxu0 0.0
          %1494 = vmatpush1.msra.mxu0 0.0
          %1495 = vmatprep.subr.mxu0 0.0
          %1496 = vmatpush1.msra.mxu0 0.0
          %1497 = vmatprep.subr.mxu0 0.0
          %1498 = vmatpush1.msra.mxu0 0.0
          %1499 = vmatprep.subr.mxu0 0.0
          %1500 = vmatpush1.msra.mxu0 0.0
          %1501 = vmatprep.subr.mxu0 0.0
          %1502 = vmatpush1.msra.mxu0 0.0
          %1503 = vmatprep.subr.mxu0 0.0
          %1504 = vmatpush1.msra.mxu0 0.0
          %1505 = vmatprep.subr.mxu0 0.0
          %1506 = vmatpush1.msra.mxu0 0.0
          %1507 = vmatprep.subr.mxu0 0.0
          %1508 = vmatpush1.msra.mxu0 0.0
          %1509 = vmatprep.subr.mxu0 0.0
          %1510 = vmatpush1.msra.mxu0 0.0
          %1511 = vmatprep.subr.mxu0 0.0
          %1512 = vmatpush1.msra.mxu0 0.0
          %1513 = vmatprep.mubr.f32.mxu0 0.0
          %1514 = vmatmul.mubr.f32.gmra.mrb[0].mxu0 %v1447
          %v1515 = vpop.f32.mrb[0].mxu0
          %v1516 = vadd.f32 %v1444, %v1515
          %v1517 = vpop.f32.mrb[0].mxu0
          %1518 = vdwg.mxu0
          %1519 = vst.msk [vmem:[%s427] sm:$0xff] %vm541, %v1516
        $region80: #{tpu_custom_call.1} parent=51 // pred_fallthru
          _
        %s1520 = sand.u32 %s240, 1
        %s1521 = scalar_lea.sflag [#allocation8], %s1520
        %s1522 = sand.u32 %s240, 1
        %s1523 = smul.addr %s1522, 8
        %s1524 = scalar_lea.vmem [#allocation15], %s1523
        // Predicated region
        $region81: #{tpu_custom_call.1} parent=51 // pred_check
          %p1525 = pneg %p250
        $region82: #{tpu_custom_call.1} parent=51 // pred_check_branch
          %1527 = sbr.rel (%p1525) target = $region84
        $region83: #{tpu_custom_call.1} parent=51 // pred_region
          %s1529 = ssub.s32 128, 128
          %1530 = vsyncadd %s1521, %s1529
          %s1531 = sadd.s32 %s35, %s34
          %s1532 = smul.addr %s1531, 128
          %s1533 = scalar_lea.hbm %s8, %s1532
          %s1535 = sshll.u32 %s1524, 4
          %s1536 = int_to_ptr.vmem [resolvable:$true] %s1535
          %1538 = dma.vmem_to_hbm [thread:$0]  %s1536, 128, %s1533, %s1521
        $region84: #{tpu_custom_call.1} parent=51 // pred_fallthru
          _
      $region52: #{tpu_custom_call.1} parent=5 // pred_fallthru
        _
      %p1539 = scmp.le.s32.totalorder 2, %s24
      // Predicated region
      $region85: #{tpu_custom_call.1} parent=5 // pred_check
        %p1540 = pneg %p1539
      $region86: #{tpu_custom_call.1} parent=5 // pred_check_branch
        %1542 = sbr.rel (%p1540) target = $region88
      $region87: #{tpu_custom_call.1} parent=5 // pred_region
        %s1543 = ssub.s32 %s24, 2
        // Predicated region
        $region89: #{tpu_custom_call.1} parent=87 // pred_check
          %p1544 = pneg %p256
        $region90: #{tpu_custom_call.1} parent=87 // pred_check_branch
          %1546 = sbr.rel (%p1544) target = $region92
        $region91: #{tpu_custom_call.1} parent=87 // pred_region
          %s1547 = sand.u32 %s241, 1
          %s1548 = scalar_lea.sflag [#allocation8], %s1547
          %s1549 = sand.u32 %s241, 1
          %s1550 = smul.addr %s1549, 8
          %s1551 = scalar_lea.vmem [#allocation15], %s1550
          %1552 = dma.done %s1548, 128
        $region92: #{tpu_custom_call.1} parent=87 // pred_fallthru
          _
      $region88: #{tpu_custom_call.1} parent=5 // pred_fallthru
        _
    $region6: #{tpu_custom_call.1} parent=1 // loop_footer
      %s28 = sadd.s32 1, %s24
    $region7: #{tpu_custom_call.1} parent=1 // loop_footer_branch
      %23 = sbr.rel target = $region3
    $region8: #{tpu_custom_call.1} parent=1 // loop_exit
      _
    %1553 = vsyncpa [#allocation7], 1
    %s1554 = scalar_lea.sflag [#allocation7], 1
    %1555 = vsyncpa %s1554, 1
    %1556 = vsyncpa [#allocation10], 1
    %s1557 = scalar_lea.sflag [#allocation10], 1
    %1558 = vsyncpa %s1557, 1
    %1559 = vsyncpa [#allocation13], 1
    %1560 = vsyncpa [#allocation8], 1
    %s1561 = scalar_lea.sflag [#allocation8], 1
    %1562 = vsyncpa %s1561, 1

// kernel: tpu_custom_call.1
$region0: #{tpu_custom_call.1}
  #allocation0 [shape = 'u32[]', space=smem, size = 0x4, offset = 0x4, fixed_abs, tag = 'smem constant byte address 0x4 - core index']
  #allocation1 [shape = 'u32[144,128]{1,0:T(1,128)}', space=vmem, size = 0x12000, scoped, tag = 'internal scratch']
  #allocation2 [shape = 'f32[8,32]{1,0:T(8,128)}', space=vmem, size = 0x1000, scoped, tag = 'scratch operand']
  #allocation3 [shape = 'f32[4,8,1]{2,1,0:T(8,128)}', space=vmem, size = 0x4000, scoped, tag = 'scratch operand']
  #allocation4 [shape = 'f32[4,8,1]{2,1,0:T(8,128)}', space=vmem, size = 0x4000, scoped, tag = 'scratch operand']
  #allocation5 [shape = 'f32[8,32]{1,0:T(8,128)}', space=vmem, size = 0x1000, scoped, tag = 'scratch operand']
  %s0 = inlined_call_operand.hbm [shape: f32[2,8,32], index: 0, kind: input, shape index: {}]
  %s1 = inlined_call_operand.hbm [shape: f32[2,8,32], index: 1, kind: input, shape index: {}]
  %s2 = inlined_call_operand.hbm [shape: f32[32,32], index: 2, kind: input, shape index: {}]
  %s3 = inlined_call_operand.vmem [shape: f32[1,32], index: 3, kind: input, shape index: {}]
  %s4 = inlined_call_operand.hbm [shape: f32[32,64], index: 4, kind: input, shape index: {}]
  %s5 = inlined_call_operand.vmem [shape: f32[1,64], index: 5, kind: input, shape index: {}]
  %s6 = inlined_call_operand.hbm [shape: f32[32,32], index: 6, kind: input, shape index: {}]
  %s7 = inlined_call_operand.vmem [shape: f32[1,32], index: 7, kind: input, shape index: {}]
  %s8 = inlined_call_operand.hbm [shape: f32[2,8,32], index: 8, kind: output, shape index: {}]
  %s9 = sld [smem:[#allocation0]]
  $region93: #{tpu_custom_call.1} parent=0
    _
  %s11 = ssub.s32 1, %s9
  %s12 = scalar_select 0, %s11, %s9
  $region1: #{tpu_custom_call.1} parent=0
    #allocation6 [shape = 'u8[8192]{0}', space=vmem, size = 0x2000, scoped, tag = 'input window, operand 0']
    #allocation7 [shape = 's32[2]{0}', space=sflag, size = 0x8, scoped, tag = 'scoped memory for tpu_custom_call.1']
    #allocation8 [shape = 's32[2]{0}', space=sflag, size = 0x8, scoped, tag = 'scoped memory for tpu_custom_call.1']
    #allocation9 [shape = 'u8[8192]{0}', space=vmem, size = 0x2000, scoped, tag = 'input window, operand 1']
    #allocation10 [shape = 's32[2]{0}', space=sflag, size = 0x8, scoped, tag = 'scoped memory for tpu_custom_call.1']
    #allocation11 [shape = 'u8[16384]{0}', space=vmem, size = 0x4000, scoped, tag = 'input window, operand 2, single buffered']
    #allocation12 [shape = 'u8[16384]{0}', space=vmem, size = 0x4000, scoped, tag = 'input window, operand 4, single buffered']
    #allocation13 [shape = 's32[1]{0}', space=sflag, size = 0x4, scoped, tag = 'scoped memory for tpu_custom_call.1']
    #allocation14 [shape = 'u8[16384]{0}', space=vmem, size = 0x4000, scoped, tag = 'input window, operand 6, single buffered']
    #allocation15 [shape = 'u8[8192]{0}', space=vmem, size = 0x2000, scoped, tag = 'output window, operand 0']
    %13 = vsyncpa [#allocation7], 0
    %s14 = scalar_lea.sflag [#allocation7], 1
    %15 = vsyncpa %s14, 0
    %16 = vsyncpa [#allocation10], 0
    %s17 = scalar_lea.sflag [#allocation10], 1
    %18 = vsyncpa %s17, 0
    %19 = vsyncpa [#allocation13], 0
    %20 = vsyncpa [#allocation8], 0
    %s21 = scalar_lea.sflag [#allocation8], 1
    %22 = vsyncpa %s21, 0
    loop: start=0, step=1, limit=4
    $region2: #{tpu_custom_call.1} parent=1 // loop_pre_header
      _
    $region3: #{tpu_custom_call.1} parent=1 // loop_header
      %s24 = sphi 0, %s28
      %p25 = scmp.ge.s32.totalorder %s24, 4
      %s31 = sphi 0, %s50
      %s32 = sphi 0, %s46
      %s33 = sphi 0, %s42
      %s34 = sphi 0, %s31
      %s35 = sphi 0, %s32
      %s36 = sphi 0, %s33
      %s37 = sphi 0, %s34
      %s38 = sphi 0, %s35
      %s39 = sphi 0, %s36
      %s55 = sphi 0, %s57
      %s58 = sphi 0, %s55
      %s59 = sphi 0, %s58
      %s75 = sphi 0, %s59
      %s83 = sphi 0, %s85
      %s86 = sphi 0, %s83
      %s87 = sphi 0, %s86
      %s103 = sphi 0, %s87
      %s107 = sphi 0, %s107
      %s109 = sphi 0, %s107
      %s110 = sphi 0, %s109
      %s124 = sphi 0, %s110
      %s128 = sphi 0, %s128
      %s130 = sphi 0, %s128
      %s131 = sphi 0, %s130
      %s145 = sphi 0, %s131
      %s149 = sphi 0, %s149
      %s151 = sphi 0, %s149
      %s152 = sphi 0, %s151
      %s166 = sphi 0, %s152
      %s170 = sphi 0, %s170
      %s172 = sphi 0, %s170
      %s173 = sphi 0, %s172
      %s187 = sphi 0, %s173
      %s191 = sphi 0, %s191
      %s193 = sphi 0, %s191
      %s194 = sphi 0, %s193
      %s208 = sphi 0, %s194
      %s212 = sphi 0, %s212
      %s214 = sphi 0, %s212
      %s215 = sphi 0, %s214
      %s229 = sphi 0, %s215
      %s237 = sphi 0, %s239
      %s240 = sphi 0, %s237
      %s241 = sphi 0, %s240
      %s257 = sphi 0, %s241
    $region4: #{tpu_custom_call.1} parent=1 // loop_header_branch
      %27 = sbr.rel (%p25) target = $region8
    $region5: #{tpu_custom_call.1} parent=1 // loop_body
      %s29 = ssub.s32 %s24, 1
      %s30 = ssub.s32 %s24, 2
      %s40 = sadd.s32 1, %s33
      %p41 = scmp.ge.s32.totalorder %s40, 1
      %s42 = scalar_select %p41, 0, %s40
      %s43 = sadd.s32 1, %s32
      %s44 = scalar_select %p41, %s43, %s32
      %p45 = scmp.ge.s32.totalorder %s44, 1
      %s46 = scalar_select %p45, 0, %s44
      %s47 = sadd.s32 1, %s31
      %s48 = scalar_select %p45, %s47, %s31
      %p49 = scmp.ge.s32.totalorder %s48, 2
      %s50 = scalar_select %p49, 0, %s48
      %s51 = ssub.s32 %s31, %s50
      %s52 = ssub.s32 %s32, %s46
      %s53 = sor.u32 %s51, %s52
      %p54 = scmp.eq.s32.totalorder %s53, 0
      %s56 = sadd.s32 %s55, 1
      %s57 = scalar_select %p54, %s55, %s56
      %p60 = pneg %p54
      %p61 = scmp.eq.s32.totalorder %s24, 1
      %p62 = por %p60, %p61
      %p63 = scmp.ne.s32.totalorder %s55, %s58
      %p64 = scmp.eq.s32.totalorder %s24, 0
      %p65 = por %p63, %p64
      %p66 = scmp.ne.s32.totalorder %s55, %s58
      %p67 = scmp.eq.s32.totalorder %s29, 1
      %p68 = por %p66, %p67
      %p69 = scmp.ne.s32.totalorder %s58, %s59
      %p70 = scmp.eq.s32.totalorder %s29, 0
      %p71 = por %p69, %p70
      %p72 = scmp.ne.s32.totalorder %s58, %s59
      %p73 = scmp.eq.s32.totalorder %s30, 1
      %p74 = por %p72, %p73
      %p76 = scmp.ne.s32.totalorder %s59, %s75
      %p77 = scmp.eq.s32.totalorder %s30, 0
      %p78 = por %p76, %p77
      %s79 = ssub.s32 %s31, %s50
      %s80 = ssub.s32 %s33, %s42
      %s81 = sor.u32 %s79, %s80
      %p82 = scmp.eq.s32.totalorder %s81, 0
      %s84 = sadd.s32 %s83, 1
      %s85 = scalar_select %p82, %s83, %s84
      %p88 = pneg %p82
      %p89 = scmp.eq.s32.totalorder %s24, 1
      %p90 = por %p88, %p89
      %p91 = scmp.ne.s32.totalorder %s83, %s86
      %p92 = scmp.eq.s32.totalorder %s24, 0
      %p93 = por %p91, %p92
      %p94 = scmp.ne.s32.totalorder %s83, %s86
      %p95 = scmp.eq.s32.totalorder %s29, 1
      %p96 = por %p94, %p95
      %p97 = scmp.ne.s32.totalorder %s86, %s87
      %p98 = scmp.eq.s32.totalorder %s29, 0
      %p99 = por %p97, %p98
      %p100 = scmp.ne.s32.totalorder %s86, %s87
      %p101 = scmp.eq.s32.totalorder %s30, 1
      %p102 = por %p100, %p101
      %p104 = scmp.ne.s32.totalorder %s87, %s103
      %p105 = scmp.eq.s32.totalorder %s30, 0
      %p106 = por %p104, %p105
      %s108 = sadd.s32 %s107, 1
      %p111 = scmp.eq.s32.totalorder %s24, 1
      %p112 = scmp.ne.s32.totalorder %s107, %s109
      %p113 = scmp.eq.s32.totalorder %s24, 0
      %p114 = por %p112, %p113
      %p115 = scmp.ne.s32.totalorder %s107, %s109
      %p116 = scmp.eq.s32.totalorder %s29, 1
      %p117 = por %p115, %p116
      %p118 = scmp.ne.s32.totalorder %s109, %s110
      %p119 = scmp.eq.s32.totalorder %s29, 0
      %p120 = por %p118, %p119
      %p121 = scmp.ne.s32.totalorder %s109, %s110
      %p122 = scmp.eq.s32.totalorder %s30, 1
      %p123 = por %p121, %p122
      %p125 = scmp.ne.s32.totalorder %s110, %s124
      %p126 = scmp.eq.s32.totalorder %s30, 0
      %p127 = por %p125, %p126
      %s129 = sadd.s32 %s128, 1
      %p132 = scmp.eq.s32.totalorder %s24, 1
      %p133 = scmp.ne.s32.totalorder %s128, %s130
      %p134 = scmp.eq.s32.totalorder %s24, 0
      %p135 = por %p133, %p134
      %p136 = scmp.ne.s32.totalorder %s128, %s130
      %p137 = scmp.eq.s32.totalorder %s29, 1
      %p138 = por %p136, %p137
      %p139 = scmp.ne.s32.totalorder %s130, %s131
      %p140 = scmp.eq.s32.totalorder %s29, 0
      %p141 = por %p139, %p140
      %p142 = scmp.ne.s32.totalorder %s130, %s131
      %p143 = scmp.eq.s32.totalorder %s30, 1
      %p144 = por %p142, %p143
      %p146 = scmp.ne.s32.totalorder %s131, %s145
      %p147 = scmp.eq.s32.totalorder %s30, 0
      %p148 = por %p146, %p147
      %s150 = sadd.s32 %s149, 1
      %p153 = scmp.eq.s32.totalorder %s24, 1
      %p154 = scmp.ne.s32.totalorder %s149, %s151
      %p155 = scmp.eq.s32.totalorder %s24, 0
      %p156 = por %p154, %p155
      %p157 = scmp.ne.s32.totalorder %s149, %s151
      %p158 = scmp.eq.s32.totalorder %s29, 1
      %p159 = por %p157, %p158
      %p160 = scmp.ne.s32.totalorder %s151, %s152
      %p161 = scmp.eq.s32.totalorder %s29, 0
      %p162 = por %p160, %p161
      %p163 = scmp.ne.s32.totalorder %s151, %s152
      %p164 = scmp.eq.s32.totalorder %s30, 1
      %p165 = por %p163, %p164
      %p167 = scmp.ne.s32.totalorder %s152, %s166
      %p168 = scmp.eq.s32.totalorder %s30, 0
      %p169 = por %p167, %p168
      %s171 = sadd.s32 %s170, 1
      %p174 = scmp.eq.s32.totalorder %s24, 1
      %p175 = scmp.ne.s32.totalorder %s170, %s172
      %p176 = scmp.eq.s32.totalorder %s24, 0
      %p177 = por %p175, %p176
      %p178 = scmp.ne.s32.totalorder %s170, %s172
      %p179 = scmp.eq.s32.totalorder %s29, 1
      %p180 = por %p178, %p179
      %p181 = scmp.ne.s32.totalorder %s172, %s173
      %p182 = scmp.eq.s32.totalorder %s29, 0
      %p183 = por %p181, %p182
      %p184 = scmp.ne.s32.totalorder %s172, %s173
      %p185 = scmp.eq.s32.totalorder %s30, 1
      %p186 = por %p184, %p185
      %p188 = scmp.ne.s32.totalorder %s173, %s187
      %p189 = scmp.eq.s32.totalorder %s30, 0
      %p190 = por %p188, %p189
      %s192 = sadd.s32 %s191, 1
      %p195 = scmp.eq.s32.totalorder %s24, 1
      %p196 = scmp.ne.s32.totalorder %s191, %s193
      %p197 = scmp.eq.s32.totalorder %s24, 0
      %p198 = por %p196, %p197
      %p199 = scmp.ne.s32.totalorder %s191, %s193
      %p200 = scmp.eq.s32.totalorder %s29, 1
      %p201 = por %p199, %p200
      %p202 = scmp.ne.s32.totalorder %s193, %s194
      %p203 = scmp.eq.s32.totalorder %s29, 0
      %p204 = por %p202, %p203
      %p205 = scmp.ne.s32.totalorder %s193, %s194
      %p206 = scmp.eq.s32.totalorder %s30, 1
      %p207 = por %p205, %p206
      %p209 = scmp.ne.s32.totalorder %s194, %s208
      %p210 = scmp.eq.s32.totalorder %s30, 0
      %p211 = por %p209, %p210
      %s213 = sadd.s32 %s212, 1
      %p216 = scmp.eq.s32.totalorder %s24, 1
      %p217 = scmp.ne.s32.totalorder %s212, %s214
      %p218 = scmp.eq.s32.totalorder %s24, 0
      %p219 = por %p217, %p218
      %p220 = scmp.ne.s32.totalorder %s212, %s214
      %p221 = scmp.eq.s32.totalorder %s29, 1
      %p222 = por %p220, %p221
      %p223 = scmp.ne.s32.totalorder %s214, %s215
      %p224 = scmp.eq.s32.totalorder %s29, 0
      %p225 = por %p223, %p224
      %p226 = scmp.ne.s32.totalorder %s214, %s215
      %p227 = scmp.eq.s32.totalorder %s30, 1
      %p228 = por %p226, %p227
      %p230 = scmp.ne.s32.totalorder %s215, %s229
      %p231 = scmp.eq.s32.totalorder %s30, 0
      %p232 = por %p230, %p231
      %s233 = ssub.s32 %s31, %s50
      %s234 = ssub.s32 %s32, %s46
      %s235 = sor.u32 %s233, %s234
      %p236 = scmp.eq.s32.totalorder %s235, 0
      %s238 = sadd.s32 %s237, 1
      %s239 = scalar_select %p236, %s237, %s238
      %p242 = pneg %p236
      %p243 = scmp.eq.s32.totalorder %s24, 1
      %p244 = por %p242, %p243
      %p245 = scmp.ne.s32.totalorder %s237, %s240
      %p246 = scmp.eq.s32.totalorder %s24, 0
      %p247 = por %p245, %p246
      %p248 = scmp.ne.s32.totalorder %s237, %s240
      %p249 = scmp.eq.s32.totalorder %s29, 1
      %p250 = por %p248, %p249
      %p251 = scmp.ne.s32.totalorder %s240, %s241
      %p252 = scmp.eq.s32.totalorder %s29, 0
      %p253 = por %p251, %p252
      %p254 = scmp.ne.s32.totalorder %s240, %s241
      %p255 = scmp.eq.s32.totalorder %s30, 1
      %p256 = por %p254, %p255
      %p258 = scmp.ne.s32.totalorder %s241, %s257
      %p259 = scmp.eq.s32.totalorder %s30, 0
      %p260 = por %p258, %p259
      %p261 = scmp.le.s32.totalorder 1, %s24
      %p262 = scmp.lt.s32.totalorder %s24, 3
      %p263 = pnand %p261, %p262
      %p264 = pneg %p263
      // Predicated region
      $region9: #{tpu_custom_call.1} parent=5 // pred_check
        _
      $region10: #{tpu_custom_call.1} parent=5 // pred_check_branch
        %266 = sbr.rel (%p263) target = $region12
      $region11: #{tpu_custom_call.1} parent=5 // pred_region
        %s267 = ssub.s32 %s24, 1
        // Predicated region
        $region13: #{tpu_custom_call.1} parent=11 // pred_check
          %p268 = pneg %p120
        $region14: #{tpu_custom_call.1} parent=11 // pred_check_branch
          %270 = sbr.rel (%p268) target = $region16
        $region15: #{tpu_custom_call.1} parent=11 // pred_region
          %s272 = ssub.s32 512, 512
          %273 = vsyncadd [#allocation10], %s272
          %s274 = sshll.u32 [#allocation11], 4
          %s275 = int_to_ptr.vmem [resolvable:$true] %s274
          %280 = dma.hbm_to_vmem [thread:$0]  %s2, 512, %s275, [#allocation10], 128, 128, 8
        $region16: #{tpu_custom_call.1} parent=11 // pred_fallthru
          _
        // Predicated region
        $region17: #{tpu_custom_call.1} parent=11 // pred_check
          %p281 = pneg %p141
        $region18: #{tpu_custom_call.1} parent=11 // pred_check_branch
          %283 = sbr.rel (%p281) target = $region20
        $region19: #{tpu_custom_call.1} parent=11 // pred_region
          _
        $region20: #{tpu_custom_call.1} parent=11 // pred_fallthru
          _
        // Predicated region
        $region21: #{tpu_custom_call.1} parent=11 // pred_check
          %p284 = pneg %p162
        $region22: #{tpu_custom_call.1} parent=11 // pred_check_branch
          %286 = sbr.rel (%p284) target = $region24
        $region23: #{tpu_custom_call.1} parent=11 // pred_region
          %s288 = ssub.s32 512, 512
          %289 = vsyncadd [#allocation13], %s288
          %s290 = sshll.u32 [#allocation12], 4
          %s291 = int_to_ptr.vmem [resolvable:$true] %s290
          %296 = dma.hbm_to_vmem [thread:$0]  %s4, 512, %s291, [#allocation13], 128, 128, 8
        $region24: #{tpu_custom_call.1} parent=11 // pred_fallthru
          _
        // Predicated region
        $region25: #{tpu_custom_call.1} parent=11 // pred_check
          %p297 = pneg %p183
        $region26: #{tpu_custom_call.1} parent=11 // pred_check_branch
          %299 = sbr.rel (%p297) target = $region28
        $region27: #{tpu_custom_call.1} parent=11 // pred_region
          _
        $region28: #{tpu_custom_call.1} parent=11 // pred_fallthru
          _
        // Predicated region
        $region29: #{tpu_custom_call.1} parent=11 // pred_check
          %p300 = pneg %p204
        $region30: #{tpu_custom_call.1} parent=11 // pred_check_branch
          %302 = sbr.rel (%p300) target = $region32
        $region31: #{tpu_custom_call.1} parent=11 // pred_region
          %s304 = ssub.s32 512, 512
          %305 = vsyncadd [#allocation13], %s304
          %s306 = sshll.u32 [#allocation14], 4
          %s307 = int_to_ptr.vmem [resolvable:$true] %s306
          %312 = dma.hbm_to_vmem [thread:$0]  %s6, 512, %s307, [#allocation13], 128, 128, 8
        $region32: #{tpu_custom_call.1} parent=11 // pred_fallthru
          _
        // Predicated region
        $region33: #{tpu_custom_call.1} parent=11 // pred_check
          %p313 = pneg %p225
        $region34: #{tpu_custom_call.1} parent=11 // pred_check_branch
          %315 = sbr.rel (%p313) target = $region36
        $region35: #{tpu_custom_call.1} parent=11 // pred_region
          _
        $region36: #{tpu_custom_call.1} parent=11 // pred_fallthru
          _
      $region12: #{tpu_custom_call.1} parent=5 // pred_fallthru
        _
      %p316 = scmp.lt.s32.totalorder %s24, 2
      // Predicated region
      $region37: #{tpu_custom_call.1} parent=5 // pred_check
        %p317 = pneg %p316
      $region38: #{tpu_custom_call.1} parent=5 // pred_check_branch
        %319 = sbr.rel (%p317) target = $region40
      $region39: #{tpu_custom_call.1} parent=5 // pred_region
        // Predicated region
        $region41: #{tpu_custom_call.1} parent=39 // pred_check
          %p320 = pneg %p65
        $region42: #{tpu_custom_call.1} parent=39 // pred_check_branch
          %322 = sbr.rel (%p320) target = $region44
        $region43: #{tpu_custom_call.1} parent=39 // pred_region
          %s323 = sand.u32 %s55, 1
          %s324 = scalar_lea.sflag [#allocation7], %s323
          %s325 = sand.u32 %s55, 1
          %s326 = smul.addr %s325, 8
          %s327 = scalar_lea.vmem [#allocation6], %s326
          %s329 = ssub.s32 128, 128
          %330 = vsyncadd %s324, %s329
          %s331 = sadd.s32 %s32, %s31
          %s332 = smul.addr %s331, 128
          %s333 = scalar_lea.hbm %s0, %s332
          %s335 = sshll.u32 %s327, 4
          %s336 = int_to_ptr.vmem [resolvable:$true] %s335
          %338 = dma.hbm_to_vmem [thread:$0]  %s333, 128, %s336, %s324
        $region44: #{tpu_custom_call.1} parent=39 // pred_fallthru
          _
        // Predicated region
        $region45: #{tpu_custom_call.1} parent=39 // pred_check
          %p339 = pneg %p93
        $region46: #{tpu_custom_call.1} parent=39 // pred_check_branch
          %341 = sbr.rel (%p339) target = $region48
        $region47: #{tpu_custom_call.1} parent=39 // pred_region
          %s342 = sand.u32 %s24, 1
          %s343 = scalar_lea.sflag [#allocation10], %s342
          %s344 = sand.u32 %s83, 1
          %s345 = smul.addr %s344, 8
          %s346 = scalar_lea.vmem [#allocation9], %s345
          %s348 = ssub.s32 128, 128
          %349 = vsyncadd %s343, %s348
          %s350 = sadd.s32 %s33, %s31
          %s351 = smul.addr %s350, 128
          %s352 = scalar_lea.hbm %s1, %s351
          %s354 = sshll.u32 %s346, 4
          %s355 = int_to_ptr.vmem [resolvable:$true] %s354
          %357 = dma.hbm_to_vmem [thread:$0]  %s352, 128, %s355, %s343
        $region48: #{tpu_custom_call.1} parent=39 // pred_fallthru
          _
      $region40: #{tpu_custom_call.1} parent=5 // pred_fallthru
        _
      %p358 = scmp.le.s32.totalorder 1, %s24
      %p359 = scmp.lt.s32.totalorder %s24, 3
      %p360 = pnand %p358, %p359
      %p361 = pneg %p360
      // Predicated region
      $region49: #{tpu_custom_call.1} parent=5 // pred_check
        _
      $region50: #{tpu_custom_call.1} parent=5 // pred_check_branch
        %363 = sbr.rel (%p360) target = $region52
      $region51: #{tpu_custom_call.1} parent=5 // pred_region
        %s364 = ssub.s32 %s24, 1
        %s365 = sand.u32 %s58, 1
        %s366 = scalar_lea.sflag [#allocation7], %s365
        %s367 = sand.u32 %s58, 1
        %s368 = smul.addr %s367, 8
        %s369 = scalar_lea.vmem [#allocation6], %s368
        // Predicated region
        $region53: #{tpu_custom_call.1} parent=51 // pred_check
          %p370 = pneg %p71
        $region54: #{tpu_custom_call.1} parent=51 // pred_check_branch
          %372 = sbr.rel (%p370) target = $region56
        $region55: #{tpu_custom_call.1} parent=51 // pred_region
          %373 = dma.done %s366, 128
        $region56: #{tpu_custom_call.1} parent=51 // pred_fallthru
          _
        %s374 = sand.u32 %s29, 1
        %s375 = scalar_lea.sflag [#allocation10], %s374
        %s376 = sand.u32 %s86, 1
        %s377 = smul.addr %s376, 8
        %s378 = scalar_lea.vmem [#allocation9], %s377
        // Predicated region
        $region57: #{tpu_custom_call.1} parent=51 // pred_check
          %p379 = pneg %p99
        $region58: #{tpu_custom_call.1} parent=51 // pred_check_branch
          %381 = sbr.rel (%p379) target = $region60
        $region59: #{tpu_custom_call.1} parent=51 // pred_region
          %382 = dma.done %s375, 128
        $region60: #{tpu_custom_call.1} parent=51 // pred_fallthru
          _
        // Predicated region
        $region61: #{tpu_custom_call.1} parent=51 // pred_check
          %p383 = pneg %p120
        $region62: #{tpu_custom_call.1} parent=51 // pred_check_branch
          %385 = sbr.rel (%p383) target = $region64
        $region63: #{tpu_custom_call.1} parent=51 // pred_region
          %386 = dma.done [#allocation10], 512
        $region64: #{tpu_custom_call.1} parent=51 // pred_fallthru
          _
        // Predicated region
        $region65: #{tpu_custom_call.1} parent=51 // pred_check
          %p387 = pneg %p162
        $region66: #{tpu_custom_call.1} parent=51 // pred_check_branch
          %389 = sbr.rel (%p387) target = $region68
        $region67: #{tpu_custom_call.1} parent=51 // pred_region
          %390 = dma.done [#allocation13], 512
        $region68: #{tpu_custom_call.1} parent=51 // pred_fallthru
          _
        // Predicated region
        $region69: #{tpu_custom_call.1} parent=51 // pred_check
          %p391 = pneg %p204
        $region70: #{tpu_custom_call.1} parent=51 // pred_check_branch
          %393 = sbr.rel (%p391) target = $region72
        $region71: #{tpu_custom_call.1} parent=51 // pred_region
          %394 = dma.done [#allocation13], 512
        $region72: #{tpu_custom_call.1} parent=51 // pred_fallthru
          _
        %s395 = sand.u32 %s58, 1
        %s396 = scalar_lea.sflag [#allocation7], %s395
        %s397 = sand.u32 %s58, 1
        %s398 = smul.addr %s397, 8
        %s399 = scalar_lea.vmem [#allocation6], %s398
        %p400 = pneg %p71
        %p401 = pneg %p68
        %s402 = sand.u32 %s29, 1
        %s403 = scalar_lea.sflag [#allocation10], %s402
        %s404 = sand.u32 %s86, 1
        %s405 = smul.addr %s404, 8
        %s406 = scalar_lea.vmem [#allocation9], %s405
        %p407 = pneg %p99
        %p408 = pneg %p96
        %p409 = pneg %p120
        %p410 = pneg %p117
        %p411 = pneg %p141
        %p412 = pneg %p138
        %p413 = pneg %p162
        %p414 = pneg %p159
        %p415 = pneg %p183
        %p416 = pneg %p180
        %p417 = pneg %p204
        %p418 = pneg %p201
        %p419 = pneg %p225
        %p420 = pneg %p222
        %p421 = pneg %p253
        %p422 = pneg %p250
        %s423 = sand.u32 %s240, 1
        %s424 = scalar_lea.sflag [#allocation8], %s423
        %s425 = sand.u32 %s240, 1
        %s426 = smul.addr %s425, 8
        %s427 = scalar_lea.vmem [#allocation15], %s426
        %p428 = scmp.eq.s32.totalorder %s36, 0
        // Predicated region
        $region73: #{tpu_custom_call.1} parent=51 // pred_check
          %p429 = pneg %p428
        $region74: #{tpu_custom_call.1} parent=51 // pred_check_branch
          %431 = sbr.rel (%p429) target = $region76
        $region75: #{tpu_custom_call.1} parent=51 // pred_region
          %v432 = vld [vmem:[%s369] sm:$0xff]
          %v433 = vld [vmem:[#allocation11] sm:$0xff]
          %v434 = vld [vmem:[#allocation11 + $0x8] sm:$0xff]
          %v435 = vld [vmem:[#allocation11 + $0x10] sm:$0xff]
          %v436 = vld [vmem:[#allocation11 + $0x18] sm:$0xff]
          %v437 = vld [vmem:[%s3] sm:$0x1]
          %v439 = vlaneseq
          %v440 = vshrl.u32 %v439, 7
          %v441 = vsub.s32 0, %v440
          %v442 = vrot.slane %v437, %v441
          %vm444 = vcmask 261120
          %v446 = vsel %vm444, %v432, 0
          %448 = vmatprep.subr.mxu0 0.0
          %449 = vmatpush1.msra.mxu0 %v433
          %450 = vmatprep.subr.mxu0 0.0
          %451 = vmatpush1.msra.mxu0 %v434
          %452 = vmatprep.subr.mxu0 0.0
          %453 = vmatpush1.msra.mxu0 %v435
          %454 = vmatprep.subr.mxu0 0.0
          %455 = vmatpush1.msra.mxu0 %v436
          %456 = vmatprep.subr.mxu0 0.0
          %457 = vmatpush1.msra.mxu0 0.0
          %458 = vmatprep.subr.mxu0 0.0
          %459 = vmatpush1.msra.mxu0 0.0
          %460 = vmatprep.subr.mxu0 0.0
          %461 = vmatpush1.msra.mxu0 0.0
          %462 = vmatprep.subr.mxu0 0.0
          %463 = vmatpush1.msra.mxu0 0.0
          %464 = vmatprep.subr.mxu0 0.0
          %465 = vmatpush1.msra.mxu0 0.0
          %466 = vmatprep.subr.mxu0 0.0
          %467 = vmatpush1.msra.mxu0 0.0
          %468 = vmatprep.subr.mxu0 0.0
          %469 = vmatpush1.msra.mxu0 0.0
          %470 = vmatprep.subr.mxu0 0.0
          %471 = vmatpush1.msra.mxu0 0.0
          %472 = vmatprep.subr.mxu0 0.0
          %473 = vmatpush1.msra.mxu0 0.0
          %474 = vmatprep.subr.mxu0 0.0
          %475 = vmatpush1.msra.mxu0 0.0
          %476 = vmatprep.subr.mxu0 0.0
          %477 = vmatpush1.msra.mxu0 0.0
          %478 = vmatprep.subr.mxu0 0.0
          %479 = vmatpush1.msra.mxu0 0.0
          %480 = vmatprep.subr.mxu0 0.0
          %481 = vmatpush1.msra.mxu0 0.0
          %482 = vmatprep.subr.mxu0 0.0
          %483 = vmatpush1.msra.mxu0 0.0
          %484 = vmatprep.subr.mxu0 0.0
          %485 = vmatpush1.msra.mxu0 0.0
          %486 = vmatprep.subr.mxu0 0.0
          %487 = vmatpush1.msra.mxu0 0.0
          %488 = vmatprep.subr.mxu0 0.0
          %489 = vmatpush1.msra.mxu0 0.0
          %490 = vmatprep.subr.mxu0 0.0
          %491 = vmatpush1.msra.mxu0 0.0
          %492 = vmatprep.subr.mxu0 0.0
          %493 = vmatpush1.msra.mxu0 0.0
          %494 = vmatprep.subr.mxu0 0.0
          %495 = vmatpush1.msra.mxu0 0.0
          %496 = vmatprep.subr.mxu0 0.0
          %497 = vmatpush1.msra.mxu0 0.0
          %498 = vmatprep.subr.mxu0 0.0
          %499 = vmatpush1.msra.mxu0 0.0
          %500 = vmatprep.subr.mxu0 0.0
          %501 = vmatpush1.msra.mxu0 0.0
          %502 = vmatprep.subr.mxu0 0.0
          %503 = vmatpush1.msra.mxu0 0.0
          %504 = vmatprep.subr.mxu0 0.0
          %505 = vmatpush1.msra.mxu0 0.0
          %506 = vmatprep.subr.mxu0 0.0
          %507 = vmatpush1.msra.mxu0 0.0
          %508 = vmatprep.subr.mxu0 0.0
          %509 = vmatpush1.msra.mxu0 0.0
          %510 = vmatprep.subr.mxu0 0.0
          %511 = vmatpush1.msra.mxu0 0.0
          %512 = vmatprep.mubr.f32.mxu0 0.0
          %513 = vmatmul.mubr.f32.gmra.mrb[0].mxu0 %v446
          %v514 = vpop.f32.mrb[0].mxu0
          %v515 = vadd.f32 %v442, %v514
          %v516 = vpop.f32.mrb[0].mxu0
          %517 = vdwg.mxu0
          %518 = vst.msk [vmem:[#allocation2] sm:$0xff] %vm444, %v515
          %vm519 = vcmask 7168
          %520 = vst.msk [vmem:[#allocation3] sm:$0xff] %vm519, -inf
          %521 = vst.msk [vmem:[#allocation3 + $0x8] sm:$0xff] %vm519, -inf
          %522 = vst.msk [vmem:[#allocation3 + $0x10] sm:$0xff] %vm519, -inf
          %523 = vst.msk [vmem:[#allocation3 + $0x18] sm:$0xff] %vm519, -inf
          %524 = vst.msk [vmem:[#allocation4] sm:$0xff] %vm519, 0.0
          %525 = vst.msk [vmem:[#allocation4 + $0x8] sm:$0xff] %vm519, 0.0
          %526 = vst.msk [vmem:[#allocation4 + $0x10] sm:$0xff] %vm519, 0.0
          %527 = vst.msk [vmem:[#allocation4 + $0x18] sm:$0xff] %vm519, 0.0
          %528 = vst.msk [vmem:[#allocation5] sm:$0xff] %vm444, 0.0
        $region76: #{tpu_custom_call.1} parent=51 // pred_fallthru
          _
        %v529 = vld [vmem:[%s378] sm:$0xff]
        %v530 = vld [vmem:[#allocation12] sm:$0xff]
        %v531 = vld [vmem:[#allocation12 + $0x8] sm:$0xff]
        %v532 = vld [vmem:[#allocation12 + $0x10] sm:$0xff]
        %v533 = vld [vmem:[#allocation12 + $0x18] sm:$0xff]
        %v534 = vld [vmem:[%s5] sm:$0x1]
        %v536 = vlaneseq
        %v537 = vshrl.u32 %v536, 7
        %v538 = vsub.s32 0, %v537
        %v539 = vrot.slane %v534, %v538
        %vm541 = vcmask 261120
        %v543 = vsel %vm541, %v529, 0
        %545 = vmatprep.subr.mxu0 0.0
        %546 = vmatpush1.msra.mxu0 %v530
        %547 = vmatprep.subr.mxu0 0.0
        %548 = vmatpush1.msra.mxu0 %v531
        %549 = vmatprep.subr.mxu0 0.0
        %550 = vmatpush1.msra.mxu0 %v532
        %551 = vmatprep.subr.mxu0 0.0
        %552 = vmatpush1.msra.mxu0 %v533
        %553 = vmatprep.subr.mxu0 0.0
        %554 = vmatpush1.msra.mxu0 0.0
        %555 = vmatprep.subr.mxu0 0.0
        %556 = vmatpush1.msra.mxu0 0.0
        %557 = vmatprep.subr.mxu0 0.0
        %558 = vmatpush1.msra.mxu0 0.0
        %559 = vmatprep.subr.mxu0 0.0
        %560 = vmatpush1.msra.mxu0 0.0
        %561 = vmatprep.subr.mxu0 0.0
        %562 = vmatpush1.msra.mxu0 0.0
        %563 = vmatprep.subr.mxu0 0.0
        %564 = vmatpush1.msra.mxu0 0.0
        %565 = vmatprep.subr.mxu0 0.0
        %566 = vmatpush1.msra.mxu0 0.0
        %567 = vmatprep.subr.mxu0 0.0
        %568 = vmatpush1.msra.mxu0 0.0
        %569 = vmatprep.subr.mxu0 0.0
        %570 = vmatpush1.msra.mxu0 0.0
        %571 = vmatprep.subr.mxu0 0.0
        %572 = vmatpush1.msra.mxu0 0.0
        %573 = vmatprep.subr.mxu0 0.0
        %574 = vmatpush1.msra.mxu0 0.0
        %575 = vmatprep.subr.mxu0 0.0
        %576 = vmatpush1.msra.mxu0 0.0
        %577 = vmatprep.subr.mxu0 0.0
        %578 = vmatpush1.msra.mxu0 0.0
        %579 = vmatprep.subr.mxu0 0.0
        %580 = vmatpush1.msra.mxu0 0.0
        %581 = vmatprep.subr.mxu0 0.0
        %582 = vmatpush1.msra.mxu0 0.0
        %583 = vmatprep.subr.mxu0 0.0
        %584 = vmatpush1.msra.mxu0 0.0
        %585 = vmatprep.subr.mxu0 0.0
        %586 = vmatpush1.msra.mxu0 0.0
        %587 = vmatprep.subr.mxu0 0.0
        %588 = vmatpush1.msra.mxu0 0.0
        %589 = vmatprep.subr.mxu0 0.0
        %590 = vmatpush1.msra.mxu0 0.0
        %591 = vmatprep.subr.mxu0 0.0
        %592 = vmatpush1.msra.mxu0 0.0
        %593 = vmatprep.subr.mxu0 0.0
        %594 = vmatpush1.msra.mxu0 0.0
        %595 = vmatprep.subr.mxu0 0.0
        %596 = vmatpush1.msra.mxu0 0.0
        %597 = vmatprep.subr.mxu0 0.0
        %598 = vmatpush1.msra.mxu0 0.0
        %599 = vmatprep.subr.mxu0 0.0
        %600 = vmatpush1.msra.mxu0 0.0
        %601 = vmatprep.subr.mxu0 0.0
        %602 = vmatpush1.msra.mxu0 0.0
        %603 = vmatprep.subr.mxu0 0.0
        %604 = vmatpush1.msra.mxu0 0.0
        %605 = vmatprep.subr.mxu0 0.0
        %606 = vmatpush1.msra.mxu0 0.0
        %607 = vmatprep.subr.mxu0 0.0
        %608 = vmatpush1.msra.mxu0 0.0
        %609 = vmatprep.mubr.f32.mxu0 0.0
        %610 = vmatmul.mubr.f32.gmra.mrb[0].mxu0 %v543
        %v611 = vpop.f32.mrb[0].mxu0
        %v612 = vadd.f32 %v539, %v611
        %v613 = vpop.f32.mrb[0].mxu0
        %614 = vdwg.mxu0
        %v615 = vld [vmem:[#allocation2] sm:$0xff]
        %vm616 = vcmask 64512
        %v618 = vsel %vm616, %v615, 0
        %v621 = vsel %vm616, %v612, 0
        %623 = vmatprep.subr.mxu0 0.0
        %624 = vmatpush1.xpose.msra.mxu0 %v621
        %625 = vmatprep.subr.mxu0 0.0
        %626 = vmatpush1.xpose.msra.mxu0 0.0
        %627 = vmatprep.subr.mxu0 0.0
        %628 = vmatpush1.xpose.msra.mxu0 0.0
        %629 = vmatprep.subr.mxu0 0.0
        %630 = vmatpush1.xpose.msra.mxu0 0.0
        %631 = vmatprep.subr.mxu0 0.0
        %632 = vmatpush1.xpose.msra.mxu0 0.0
        %633 = vmatprep.subr.mxu0 0.0
        %634 = vmatpush1.xpose.msra.mxu0 0.0
        %635 = vmatprep.subr.mxu0 0.0
        %636 = vmatpush1.xpose.msra.mxu0 0.0
        %637 = vmatprep.subr.mxu0 0.0
        %638 = vmatpush1.xpose.msra.mxu0 0.0
        %639 = vmatprep.subr.mxu0 0.0
        %640 = vmatpush1.xpose.msra.mxu0 0.0
        %641 = vmatprep.subr.mxu0 0.0
        %642 = vmatpush1.xpose.msra.mxu0 0.0
        %643 = vmatprep.subr.mxu0 0.0
        %644 = vmatpush1.xpose.msra.mxu0 0.0
        %645 = vmatprep.subr.mxu0 0.0
        %646 = vmatpush1.xpose.msra.mxu0 0.0
        %647 = vmatprep.subr.mxu0 0.0
        %648 = vmatpush1.xpose.msra.mxu0 0.0
        %649 = vmatprep.subr.mxu0 0.0
        %650 = vmatpush1.xpose.msra.mxu0 0.0
        %651 = vmatprep.subr.mxu0 0.0
        %652 = vmatpush1.xpose.msra.mxu0 0.0
        %653 = vmatprep.subr.mxu0 0.0
        %654 = vmatpush1.xpose.msra.mxu0 0.0
        %655 = vmatprep.subr.mxu0 0.0
        %656 = vmatpush1.xpose.msra.mxu0 0.0
        %657 = vmatprep.subr.mxu0 0.0
        %658 = vmatpush1.xpose.msra.mxu0 0.0
        %659 = vmatprep.subr.mxu0 0.0
        %660 = vmatpush1.xpose.msra.mxu0 0.0
        %661 = vmatprep.subr.mxu0 0.0
        %662 = vmatpush1.xpose.msra.mxu0 0.0
        %663 = vmatprep.subr.mxu0 0.0
        %664 = vmatpush1.xpose.msra.mxu0 0.0
        %665 = vmatprep.subr.mxu0 0.0
        %666 = vmatpush1.xpose.msra.mxu0 0.0
        %667 = vmatprep.subr.mxu0 0.0
        %668 = vmatpush1.xpose.msra.mxu0 0.0
        %669 = vmatprep.subr.mxu0 0.0
        %670 = vmatpush1.xpose.msra.mxu0 0.0
        %671 = vmatprep.subr.mxu0 0.0
        %672 = vmatpush1.xpose.msra.mxu0 0.0
        %673 = vmatprep.subr.mxu0 0.0
        %674 = vmatpush1.xpose.msra.mxu0 0.0
        %675 = vmatprep.subr.mxu0 0.0
        %676 = vmatpush1.xpose.msra.mxu0 0.0
        %677 = vmatprep.subr.mxu0 0.0
        %678 = vmatpush1.xpose.msra.mxu0 0.0
        %679 = vmatprep.subr.mxu0 0.0
        %680 = vmatpush1.xpose.msra.mxu0 0.0
        %681 = vmatprep.subr.mxu0 0.0
        %682 = vmatpush1.xpose.msra.mxu0 0.0
        %683 = vmatprep.subr.mxu0 0.0
        %684 = vmatpush1.xpose.msra.mxu0 0.0
        %685 = vmatprep.subr.mxu0 0.0
        %686 = vmatpush1.xpose.msra.mxu0 0.0
        %687 = vmatprep.mubr.f32.mxu0 0.0
        %688 = vmatmul.mubr.f32.gmra.mrb[0].mxu0 %v618
        %v689 = vpop.f32.mrb[0].mxu0
        %v690 = vadd.f32 0.0, %v689
        %v691 = vpop.f32.mrb[0].mxu0
        %692 = vdwg.mxu0
        %v693 = vld [vmem:[#allocation3] sm:$0xff]
        %v694 = vsel %vm616, %v690, -inf
        %695 = vmax.xlane.f32.xlu0 %v694
        %v696 = vpop.xlane.xlu0 %695
        %v697 = vmax.f32 %v693, %v696
        %v698 = vsub.f32 %v693, %v697
        %v699 = vmul.f32 %v698, 1.442695
        %v700 = vpow.pop %v699
        %702 = vset.pattern.permute.xlu0 0
        %703 = vperm.xlu0 %702, %v697
        %v704 = vpop.permute.xlu0 %703
        %v706 = vsub.f32 %v690, %v704
        %v707 = vmul.f32 %v706, 1.442695
        %v708 = vpow.pop %v707
        %v709 = vld [vmem:[#allocation4] sm:$0xff]
        %v710 = vmul.f32 %v700, %v709
        %v711 = vsel %vm616, %v708, 0.0
        %712 = vadd.xlane.f32.xlu0 %v711
        %v713 = vpop.xlane.xlu0 %712
        %v714 = vadd.f32 %v710, %v713
        %vm715 = vcmask 7168
        %716 = vst.msk [vmem:[#allocation4] sm:$0xff] %vm715, %v714
        %v717 = vld [vmem:[#allocation5] sm:$0xff]
        %719 = vset.pattern.permute.xlu0 0
        %720 = vperm.xlu0 %719, %v700
        %v721 = vpop.permute.xlu0 %720
        %v723 = vmul.f32 %v721, %v717
        %724 = vrot.lane.b32.xlu0 %v612, 96
        %v725 = vpop.permute.xlu0 %724
        %v728 = vsel %vm616, %v708, 0
        %730 = vmatprep.subr.mxu0 0.0
        %731 = vmatpush1.msra.mxu0 %v725
        %732 = vmatprep.subr.mxu0 0.0
        %733 = vmatpush1.msra.mxu0 0.0
        %734 = vmatprep.subr.mxu0 0.0
        %735 = vmatpush1.msra.mxu0 0.0
        %736 = vmatprep.subr.mxu0 0.0
        %737 = vmatpush1.msra.mxu0 0.0
        %738 = vmatprep.subr.mxu0 0.0
        %739 = vmatpush1.msra.mxu0 0.0
        %740 = vmatprep.subr.mxu0 0.0
        %741 = vmatpush1.msra.mxu0 0.0
        %742 = vmatprep.subr.mxu0 0.0
        %743 = vmatpush1.msra.mxu0 0.0
        %744 = vmatprep.subr.mxu0 0.0
        %745 = vmatpush1.msra.mxu0 0.0
        %746 = vmatprep.subr.mxu0 0.0
        %747 = vmatpush1.msra.mxu0 0.0
        %748 = vmatprep.subr.mxu0 0.0
        %749 = vmatpush1.msra.mxu0 0.0
        %750 = vmatprep.subr.mxu0 0.0
        %751 = vmatpush1.msra.mxu0 0.0
        %752 = vmatprep.subr.mxu0 0.0
        %753 = vmatpush1.msra.mxu0 0.0
        %754 = vmatprep.subr.mxu0 0.0
        %755 = vmatpush1.msra.mxu0 0.0
        %756 = vmatprep.subr.mxu0 0.0
        %757 = vmatpush1.msra.mxu0 0.0
        %758 = vmatprep.subr.mxu0 0.0
        %759 = vmatpush1.msra.mxu0 0.0
        %760 = vmatprep.subr.mxu0 0.0
        %761 = vmatpush1.msra.mxu0 0.0
        %762 = vmatprep.subr.mxu0 0.0
        %763 = vmatpush1.msra.mxu0 0.0
        %764 = vmatprep.subr.mxu0 0.0
        %765 = vmatpush1.msra.mxu0 0.0
        %766 = vmatprep.subr.mxu0 0.0
        %767 = vmatpush1.msra.mxu0 0.0
        %768 = vmatprep.subr.mxu0 0.0
        %769 = vmatpush1.msra.mxu0 0.0
        %770 = vmatprep.subr.mxu0 0.0
        %771 = vmatpush1.msra.mxu0 0.0
        %772 = vmatprep.subr.mxu0 0.0
        %773 = vmatpush1.msra.mxu0 0.0
        %774 = vmatprep.subr.mxu0 0.0
        %775 = vmatpush1.msra.mxu0 0.0
        %776 = vmatprep.subr.mxu0 0.0
        %777 = vmatpush1.msra.mxu0 0.0
        %778 = vmatprep.subr.mxu0 0.0
        %779 = vmatpush1.msra.mxu0 0.0
        %780 = vmatprep.subr.mxu0 0.0
        %781 = vmatpush1.msra.mxu0 0.0
        %782 = vmatprep.subr.mxu0 0.0
        %783 = vmatpush1.msra.mxu0 0.0
        %784 = vmatprep.subr.mxu0 0.0
        %785 = vmatpush1.msra.mxu0 0.0
        %786 = vmatprep.subr.mxu0 0.0
        %787 = vmatpush1.msra.mxu0 0.0
        %788 = vmatprep.subr.mxu0 0.0
        %789 = vmatpush1.msra.mxu0 0.0
        %790 = vmatprep.subr.mxu0 0.0
        %791 = vmatpush1.msra.mxu0 0.0
        %792 = vmatprep.subr.mxu0 0.0
        %793 = vmatpush1.msra.mxu0 0.0
        %794 = vmatprep.mubr.f32.mxu0 0.0
        %795 = vmatmul.mubr.f32.gmra.mrb[0].mxu0 %v728
        %v796 = vpop.f32.mrb[0].mxu0
        %v797 = vadd.f32 0.0, %v796
        %v798 = vpop.f32.mrb[0].mxu0
        %799 = vdwg.mxu0
        %v800 = vadd.f32 %v723, %v797
        %801 = vst.msk [vmem:[#allocation5] sm:$0xff] %vm616, %v800
        %802 = vst.msk [vmem:[#allocation3] sm:$0xff] %vm715, %v697
        %v803 = vld [vmem:[#allocation2] sm:$0xff]
        %805 = vrot.lane.b32.xlu0 %v803, 120
        %v806 = vpop.permute.xlu0 %805
        %807 = vrot.lane.b32.xlu0 %v612, 120
        %v808 = vpop.permute.xlu0 %807
        %v809 = vsel %vm616, %v806, 0
        %v811 = vsel %vm616, %v808, 0
        %813 = vmatprep.subr.mxu0 0.0
        %814 = vmatpush1.xpose.msra.mxu0 %v811
        %815 = vmatprep.subr.mxu0 0.0
        %816 = vmatpush1.xpose.msra.mxu0 0.0
        %817 = vmatprep.subr.mxu0 0.0
        %818 = vmatpush1.xpose.msra.mxu0 0.0
        %819 = vmatprep.subr.mxu0 0.0
        %820 = vmatpush1.xpose.msra.mxu0 0.0
        %821 = vmatprep.subr.mxu0 0.0
        %822 = vmatpush1.xpose.msra.mxu0 0.0
        %823 = vmatprep.subr.mxu0 0.0
        %824 = vmatpush1.xpose.msra.mxu0 0.0
        %825 = vmatprep.subr.mxu0 0.0
        %826 = vmatpush1.xpose.msra.mxu0 0.0
        %827 = vmatprep.subr.mxu0 0.0
        %828 = vmatpush1.xpose.msra.mxu0 0.0
        %829 = vmatprep.subr.mxu0 0.0
        %830 = vmatpush1.xpose.msra.mxu0 0.0
        %831 = vmatprep.subr.mxu0 0.0
        %832 = vmatpush1.xpose.msra.mxu0 0.0
        %833 = vmatprep.subr.mxu0 0.0
        %834 = vmatpush1.xpose.msra.mxu0 0.0
        %835 = vmatprep.subr.mxu0 0.0
        %836 = vmatpush1.xpose.msra.mxu0 0.0
        %837 = vmatprep.subr.mxu0 0.0
        %838 = vmatpush1.xpose.msra.mxu0 0.0
        %839 = vmatprep.subr.mxu0 0.0
        %840 = vmatpush1.xpose.msra.mxu0 0.0
        %841 = vmatprep.subr.mxu0 0.0
        %842 = vmatpush1.xpose.msra.mxu0 0.0
        %843 = vmatprep.subr.mxu0 0.0
        %844 = vmatpush1.xpose.msra.mxu0 0.0
        %845 = vmatprep.subr.mxu0 0.0
        %846 = vmatpush1.xpose.msra.mxu0 0.0
        %847 = vmatprep.subr.mxu0 0.0
        %848 = vmatpush1.xpose.msra.mxu0 0.0
        %849 = vmatprep.subr.mxu0 0.0
        %850 = vmatpush1.xpose.msra.mxu0 0.0
        %851 = vmatprep.subr.mxu0 0.0
        %852 = vmatpush1.xpose.msra.mxu0 0.0
        %853 = vmatprep.subr.mxu0 0.0
        %854 = vmatpush1.xpose.msra.mxu0 0.0
        %855 = vmatprep.subr.mxu0 0.0
        %856 = vmatpush1.xpose.msra.mxu0 0.0
        %857 = vmatprep.subr.mxu0 0.0
        %858 = vmatpush1.xpose.msra.mxu0 0.0
        %859 = vmatprep.subr.mxu0 0.0
        %860 = vmatpush1.xpose.msra.mxu0 0.0
        %861 = vmatprep.subr.mxu0 0.0
        %862 = vmatpush1.xpose.msra.mxu0 0.0
        %863 = vmatprep.subr.mxu0 0.0
        %864 = vmatpush1.xpose.msra.mxu0 0.0
        %865 = vmatprep.subr.mxu0 0.0
        %866 = vmatpush1.xpose.msra.mxu0 0.0
        %867 = vmatprep.subr.mxu0 0.0
        %868 = vmatpush1.xpose.msra.mxu0 0.0
        %869 = vmatprep.subr.mxu0 0.0
        %870 = vmatpush1.xpose.msra.mxu0 0.0
        %871 = vmatprep.subr.mxu0 0.0
        %872 = vmatpush1.xpose.msra.mxu0 0.0
        %873 = vmatprep.subr.mxu0 0.0
        %874 = vmatpush1.xpose.msra.mxu0 0.0
        %875 = vmatprep.subr.mxu0 0.0
        %876 = vmatpush1.xpose.msra.mxu0 0.0
        %877 = vmatprep.mubr.f32.mxu0 0.0
        %878 = vmatmul.mubr.f32.gmra.mrb[0].mxu0 %v809
        %v879 = vpop.f32.mrb[0].mxu0
        %v880 = vadd.f32 0.0, %v879
        %v881 = vpop.f32.mrb[0].mxu0
        %882 = vdwg.mxu0
        %s883 = scalar_lea.vmem [#allocation3], 8
        %v884 = vld [vmem:[%s883] sm:$0xff]
        %v885 = vsel %vm616, %v880, -inf
        %886 = vmax.xlane.f32.xlu0 %v885
        %v887 = vpop.xlane.xlu0 %886
        %v888 = vmax.f32 %v884, %v887
        %v889 = vsub.f32 %v884, %v888
        %v890 = vmul.f32 %v889, 1.442695
        %v891 = vpow.pop %v890
        %893 = vset.pattern.permute.xlu0 0
        %894 = vperm.xlu0 %893, %v888
        %v895 = vpop.permute.xlu0 %894
        %v897 = vsub.f32 %v880, %v895
        %v898 = vmul.f32 %v897, 1.442695
        %v899 = vpow.pop %v898
        %s900 = scalar_lea.vmem [#allocation4], 8
        %v901 = vld [vmem:[%s900] sm:$0xff]
        %v902 = vmul.f32 %v891, %v901
        %v903 = vsel %vm616, %v899, 0.0
        %904 = vadd.xlane.f32.xlu0 %v903
        %v905 = vpop.xlane.xlu0 %904
        %v906 = vadd.f32 %v902, %v905
        %907 = vst.msk [vmem:[%s900] sm:$0xff] %vm715, %v906
        %v908 = vld [vmem:[#allocation5] sm:$0xff]
        %910 = vset.pattern.permute.xlu0 0
        %911 = vperm.xlu0 %910, %v891
        %v912 = vpop.permute.xlu0 %911
        %v914 = vmul.f32 %v912, %v908
        %915 = vrot.lane.b32.xlu0 %v612, 88
        %v916 = vpop.permute.xlu0 %915
        %v919 = vsel %vm616, %v899, 0
        %921 = vmatprep.subr.mxu0 0.0
        %922 = vmatpush1.msra.mxu0 %v916
        %923 = vmatprep.subr.mxu0 0.0
        %924 = vmatpush1.msra.mxu0 0.0
        %925 = vmatprep.subr.mxu0 0.0
        %926 = vmatpush1.msra.mxu0 0.0
        %927 = vmatprep.subr.mxu0 0.0
        %928 = vmatpush1.msra.mxu0 0.0
        %929 = vmatprep.subr.mxu0 0.0
        %930 = vmatpush1.msra.mxu0 0.0
        %931 = vmatprep.subr.mxu0 0.0
        %932 = vmatpush1.msra.mxu0 0.0
        %933 = vmatprep.subr.mxu0 0.0
        %934 = vmatpush1.msra.mxu0 0.0
        %935 = vmatprep.subr.mxu0 0.0
        %936 = vmatpush1.msra.mxu0 0.0
        %937 = vmatprep.subr.mxu0 0.0
        %938 = vmatpush1.msra.mxu0 0.0
        %939 = vmatprep.subr.mxu0 0.0
        %940 = vmatpush1.msra.mxu0 0.0
        %941 = vmatprep.subr.mxu0 0.0
        %942 = vmatpush1.msra.mxu0 0.0
        %943 = vmatprep.subr.mxu0 0.0
        %944 = vmatpush1.msra.mxu0 0.0
        %945 = vmatprep.subr.mxu0 0.0
        %946 = vmatpush1.msra.mxu0 0.0
        %947 = vmatprep.subr.mxu0 0.0
        %948 = vmatpush1.msra.mxu0 0.0
        %949 = vmatprep.subr.mxu0 0.0
        %950 = vmatpush1.msra.mxu0 0.0
        %951 = vmatprep.subr.mxu0 0.0
        %952 = vmatpush1.msra.mxu0 0.0
        %953 = vmatprep.subr.mxu0 0.0
        %954 = vmatpush1.msra.mxu0 0.0
        %955 = vmatprep.subr.mxu0 0.0
        %956 = vmatpush1.msra.mxu0 0.0
        %957 = vmatprep.subr.mxu0 0.0
        %958 = vmatpush1.msra.mxu0 0.0
        %959 = vmatprep.subr.mxu0 0.0
        %960 = vmatpush1.msra.mxu0 0.0
        %961 = vmatprep.subr.mxu0 0.0
        %962 = vmatpush1.msra.mxu0 0.0
        %963 = vmatprep.subr.mxu0 0.0
        %964 = vmatpush1.msra.mxu0 0.0
        %965 = vmatprep.subr.mxu0 0.0
        %966 = vmatpush1.msra.mxu0 0.0
        %967 = vmatprep.subr.mxu0 0.0
        %968 = vmatpush1.msra.mxu0 0.0
        %969 = vmatprep.subr.mxu0 0.0
        %970 = vmatpush1.msra.mxu0 0.0
        %971 = vmatprep.subr.mxu0 0.0
        %972 = vmatpush1.msra.mxu0 0.0
        %973 = vmatprep.subr.mxu0 0.0
        %974 = vmatpush1.msra.mxu0 0.0
        %975 = vmatprep.subr.mxu0 0.0
        %976 = vmatpush1.msra.mxu0 0.0
        %977 = vmatprep.subr.mxu0 0.0
        %978 = vmatpush1.msra.mxu0 0.0
        %979 = vmatprep.subr.mxu0 0.0
        %980 = vmatpush1.msra.mxu0 0.0
        %981 = vmatprep.subr.mxu0 0.0
        %982 = vmatpush1.msra.mxu0 0.0
        %983 = vmatprep.subr.mxu0 0.0
        %984 = vmatpush1.msra.mxu0 0.0
        %985 = vmatprep.mubr.f32.mxu0 0.0
        %986 = vmatmul.mubr.f32.gmra.mrb[0].mxu0 %v919
        %v987 = vpop.f32.mrb[0].mxu0
        %v988 = vadd.f32 0.0, %v987
        %v989 = vpop.f32.mrb[0].mxu0
        %990 = vdwg.mxu0
        %992 = vrot.lane.b32.xlu0 %v988, 8
        %v993 = vpop.permute.xlu0 %992
        %v995 = vadd.f32 %v914, %v993
        %vm996 = vcmask 130112
        %997 = vst.msk [vmem:[#allocation5] sm:$0xff] %vm996, %v995
        %998 = vst.msk [vmem:[%s883] sm:$0xff] %vm715, %v888
        %v999 = vld [vmem:[#allocation2] sm:$0xff]
        %1001 = vrot.lane.b32.xlu0 %v999, 112
        %v1002 = vpop.permute.xlu0 %1001
        %1003 = vrot.lane.b32.xlu0 %v612, 112
        %v1004 = vpop.permute.xlu0 %1003
        %v1005 = vsel %vm616, %v1002, 0
        %v1007 = vsel %vm616, %v1004, 0
        %1009 = vmatprep.subr.mxu0 0.0
        %1010 = vmatpush1.xpose.msra.mxu0 %v1007
        %1011 = vmatprep.subr.mxu0 0.0
        %1012 = vmatpush1.xpose.msra.mxu0 0.0
        %1013 = vmatprep.subr.mxu0 0.0
        %1014 = vmatpush1.xpose.msra.mxu0 0.0
        %1015 = vmatprep.subr.mxu0 0.0
        %1016 = vmatpush1.xpose.msra.mxu0 0.0
        %1017 = vmatprep.subr.mxu0 0.0
        %1018 = vmatpush1.xpose.msra.mxu0 0.0
        %1019 = vmatprep.subr.mxu0 0.0
        %1020 = vmatpush1.xpose.msra.mxu0 0.0
        %1021 = vmatprep.subr.mxu0 0.0
        %1022 = vmatpush1.xpose.msra.mxu0 0.0
        %1023 = vmatprep.subr.mxu0 0.0
        %1024 = vmatpush1.xpose.msra.mxu0 0.0
        %1025 = vmatprep.subr.mxu0 0.0
        %1026 = vmatpush1.xpose.msra.mxu0 0.0
        %1027 = vmatprep.subr.mxu0 0.0
        %1028 = vmatpush1.xpose.msra.mxu0 0.0
        %1029 = vmatprep.subr.mxu0 0.0
        %1030 = vmatpush1.xpose.msra.mxu0 0.0
        %1031 = vmatprep.subr.mxu0 0.0
        %1032 = vmatpush1.xpose.msra.mxu0 0.0
        %1033 = vmatprep.subr.mxu0 0.0
        %1034 = vmatpush1.xpose.msra.mxu0 0.0
        %1035 = vmatprep.subr.mxu0 0.0
        %1036 = vmatpush1.xpose.msra.mxu0 0.0
        %1037 = vmatprep.subr.mxu0 0.0
        %1038 = vmatpush1.xpose.msra.mxu0 0.0
        %1039 = vmatprep.subr.mxu0 0.0
        %1040 = vmatpush1.xpose.msra.mxu0 0.0
        %1041 = vmatprep.subr.mxu0 0.0
        %1042 = vmatpush1.xpose.msra.mxu0 0.0
        %1043 = vmatprep.subr.mxu0 0.0
        %1044 = vmatpush1.xpose.msra.mxu0 0.0
        %1045 = vmatprep.subr.mxu0 0.0
        %1046 = vmatpush1.xpose.msra.mxu0 0.0
        %1047 = vmatprep.subr.mxu0 0.0
        %1048 = vmatpush1.xpose.msra.mxu0 0.0
        %1049 = vmatprep.subr.mxu0 0.0
        %1050 = vmatpush1.xpose.msra.mxu0 0.0
        %1051 = vmatprep.subr.mxu0 0.0
        %1052 = vmatpush1.xpose.msra.mxu0 0.0
        %1053 = vmatprep.subr.mxu0 0.0
        %1054 = vmatpush1.xpose.msra.mxu0 0.0
        %1055 = vmatprep.subr.mxu0 0.0
        %1056 = vmatpush1.xpose.msra.mxu0 0.0
        %1057 = vmatprep.subr.mxu0 0.0
        %1058 = vmatpush1.xpose.msra.mxu0 0.0
        %1059 = vmatprep.subr.mxu0 0.0
        %1060 = vmatpush1.xpose.msra.mxu0 0.0
        %1061 = vmatprep.subr.mxu0 0.0
        %1062 = vmatpush1.xpose.msra.mxu0 0.0
        %1063 = vmatprep.subr.mxu0 0.0
        %1064 = vmatpush1.xpose.msra.mxu0 0.0
        %1065 = vmatprep.subr.mxu0 0.0
        %1066 = vmatpush1.xpose.msra.mxu0 0.0
        %1067 = vmatprep.subr.mxu0 0.0
        %1068 = vmatpush1.xpose.msra.mxu0 0.0
        %1069 = vmatprep.subr.mxu0 0.0
        %1070 = vmatpush1.xpose.msra.mxu0 0.0
        %1071 = vmatprep.subr.mxu0 0.0
        %1072 = vmatpush1.xpose.msra.mxu0 0.0
        %1073 = vmatprep.mubr.f32.mxu0 0.0
        %1074 = vmatmul.mubr.f32.gmra.mrb[0].mxu0 %v1005
        %v1075 = vpop.f32.mrb[0].mxu0
        %v1076 = vadd.f32 0.0, %v1075
        %v1077 = vpop.f32.mrb[0].mxu0
        %1078 = vdwg.mxu0
        %s1079 = scalar_lea.vmem [#allocation3], 16
        %v1080 = vld [vmem:[%s1079] sm:$0xff]
        %v1081 = vsel %vm616, %v1076, -inf
        %1082 = vmax.xlane.f32.xlu0 %v1081
        %v1083 = vpop.xlane.xlu0 %1082
        %v1084 = vmax.f32 %v1080, %v1083
        %v1085 = vsub.f32 %v1080, %v1084
        %v1086 = vmul.f32 %v1085, 1.442695
        %v1087 = vpow.pop %v1086
        %1089 = vset.pattern.permute.xlu0 0
        %1090 = vperm.xlu0 %1089, %v1084
        %v1091 = vpop.permute.xlu0 %1090
        %v1093 = vsub.f32 %v1076, %v1091
        %v1094 = vmul.f32 %v1093, 1.442695
        %v1095 = vpow.pop %v1094
        %s1096 = scalar_lea.vmem [#allocation4], 16
        %v1097 = vld [vmem:[%s1096] sm:$0xff]
        %v1098 = vmul.f32 %v1087, %v1097
        %v1099 = vsel %vm616, %v1095, 0.0
        %1100 = vadd.xlane.f32.xlu0 %v1099
        %v1101 = vpop.xlane.xlu0 %1100
        %v1102 = vadd.f32 %v1098, %v1101
        %1103 = vst.msk [vmem:[%s1096] sm:$0xff] %vm715, %v1102
        %v1104 = vld [vmem:[#allocation5] sm:$0xff]
        %1106 = vset.pattern.permute.xlu0 0
        %1107 = vperm.xlu0 %1106, %v1087
        %v1108 = vpop.permute.xlu0 %1107
        %v1110 = vmul.f32 %v1108, %v1104
        %1111 = vrot.lane.b32.xlu0 %v612, 80
        %v1112 = vpop.permute.xlu0 %1111
        %v1115 = vsel %vm616, %v1095, 0
        %1117 = vmatprep.subr.mxu0 0.0
        %1118 = vmatpush1.msra.mxu0 %v1112
        %1119 = vmatprep.subr.mxu0 0.0
        %1120 = vmatpush1.msra.mxu0 0.0
        %1121 = vmatprep.subr.mxu0 0.0
        %1122 = vmatpush1.msra.mxu0 0.0
        %1123 = vmatprep.subr.mxu0 0.0
        %1124 = vmatpush1.msra.mxu0 0.0
        %1125 = vmatprep.subr.mxu0 0.0
        %1126 = vmatpush1.msra.mxu0 0.0
        %1127 = vmatprep.subr.mxu0 0.0
        %1128 = vmatpush1.msra.mxu0 0.0
        %1129 = vmatprep.subr.mxu0 0.0
        %1130 = vmatpush1.msra.mxu0 0.0
        %1131 = vmatprep.subr.mxu0 0.0
        %1132 = vmatpush1.msra.mxu0 0.0
        %1133 = vmatprep.subr.mxu0 0.0
        %1134 = vmatpush1.msra.mxu0 0.0
        %1135 = vmatprep.subr.mxu0 0.0
        %1136 = vmatpush1.msra.mxu0 0.0
        %1137 = vmatprep.subr.mxu0 0.0
        %1138 = vmatpush1.msra.mxu0 0.0
        %1139 = vmatprep.subr.mxu0 0.0
        %1140 = vmatpush1.msra.mxu0 0.0
        %1141 = vmatprep.subr.mxu0 0.0
        %1142 = vmatpush1.msra.mxu0 0.0
        %1143 = vmatprep.subr.mxu0 0.0
        %1144 = vmatpush1.msra.mxu0 0.0
        %1145 = vmatprep.subr.mxu0 0.0
        %1146 = vmatpush1.msra.mxu0 0.0
        %1147 = vmatprep.subr.mxu0 0.0
        %1148 = vmatpush1.msra.mxu0 0.0
        %1149 = vmatprep.subr.mxu0 0.0
        %1150 = vmatpush1.msra.mxu0 0.0
        %1151 = vmatprep.subr.mxu0 0.0
        %1152 = vmatpush1.msra.mxu0 0.0
        %1153 = vmatprep.subr.mxu0 0.0
        %1154 = vmatpush1.msra.mxu0 0.0
        %1155 = vmatprep.subr.mxu0 0.0
        %1156 = vmatpush1.msra.mxu0 0.0
        %1157 = vmatprep.subr.mxu0 0.0
        %1158 = vmatpush1.msra.mxu0 0.0
        %1159 = vmatprep.subr.mxu0 0.0
        %1160 = vmatpush1.msra.mxu0 0.0
        %1161 = vmatprep.subr.mxu0 0.0
        %1162 = vmatpush1.msra.mxu0 0.0
        %1163 = vmatprep.subr.mxu0 0.0
        %1164 = vmatpush1.msra.mxu0 0.0
        %1165 = vmatprep.subr.mxu0 0.0
        %1166 = vmatpush1.msra.mxu0 0.0
        %1167 = vmatprep.subr.mxu0 0.0
        %1168 = vmatpush1.msra.mxu0 0.0
        %1169 = vmatprep.subr.mxu0 0.0
        %1170 = vmatpush1.msra.mxu0 0.0
        %1171 = vmatprep.subr.mxu0 0.0
        %1172 = vmatpush1.msra.mxu0 0.0
        %1173 = vmatprep.subr.mxu0 0.0
        %1174 = vmatpush1.msra.mxu0 0.0
        %1175 = vmatprep.subr.mxu0 0.0
        %1176 = vmatpush1.msra.mxu0 0.0
        %1177 = vmatprep.subr.mxu0 0.0
        %1178 = vmatpush1.msra.mxu0 0.0
        %1179 = vmatprep.subr.mxu0 0.0
        %1180 = vmatpush1.msra.mxu0 0.0
        %1181 = vmatprep.mubr.f32.mxu0 0.0
        %1182 = vmatmul.mubr.f32.gmra.mrb[0].mxu0 %v1115
        %v1183 = vpop.f32.mrb[0].mxu0
        %v1184 = vadd.f32 0.0, %v1183
        %v1185 = vpop.f32.mrb[0].mxu0
        %1186 = vdwg.mxu0
        %1188 = vrot.lane.b32.xlu0 %v1184, 16
        %v1189 = vpop.permute.xlu0 %1188
        %v1191 = vadd.f32 %v1110, %v1189
        %vm1192 = vcmask 195712
        %1193 = vst.msk [vmem:[#allocation5] sm:$0xff] %vm1192, %v1191
        %1194 = vst.msk [vmem:[%s1079] sm:$0xff] %vm715, %v1084
        %v1195 = vld [vmem:[#allocation2] sm:$0xff]
        %1197 = vrot.lane.b32.xlu0 %v1195, 104
        %v1198 = vpop.permute.xlu0 %1197
        %1199 = vrot.lane.b32.xlu0 %v612, 104
        %v1200 = vpop.permute.xlu0 %1199
        %v1201 = vsel %vm616, %v1198, 0
        %v1203 = vsel %vm616, %v1200, 0
        %1205 = vmatprep.subr.mxu0 0.0
        %1206 = vmatpush1.xpose.msra.mxu0 %v1203
        %1207 = vmatprep.subr.mxu0 0.0
        %1208 = vmatpush1.xpose.msra.mxu0 0.0
        %1209 = vmatprep.subr.mxu0 0.0
        %1210 = vmatpush1.xpose.msra.mxu0 0.0
        %1211 = vmatprep.subr.mxu0 0.0
        %1212 = vmatpush1.xpose.msra.mxu0 0.0
        %1213 = vmatprep.subr.mxu0 0.0
        %1214 = vmatpush1.xpose.msra.mxu0 0.0
        %1215 = vmatprep.subr.mxu0 0.0
        %1216 = vmatpush1.xpose.msra.mxu0 0.0
        %1217 = vmatprep.subr.mxu0 0.0
        %1218 = vmatpush1.xpose.msra.mxu0 0.0
        %1219 = vmatprep.subr.mxu0 0.0
        %1220 = vmatpush1.xpose.msra.mxu0 0.0
        %1221 = vmatprep.subr.mxu0 0.0
        %1222 = vmatpush1.xpose.msra.mxu0 0.0
        %1223 = vmatprep.subr.mxu0 0.0
        %1224 = vmatpush1.xpose.msra.mxu0 0.0
        %1225 = vmatprep.subr.mxu0 0.0
        %1226 = vmatpush1.xpose.msra.mxu0 0.0
        %1227 = vmatprep.subr.mxu0 0.0
        %1228 = vmatpush1.xpose.msra.mxu0 0.0
        %1229 = vmatprep.subr.mxu0 0.0
        %1230 = vmatpush1.xpose.msra.mxu0 0.0
        %1231 = vmatprep.subr.mxu0 0.0
        %1232 = vmatpush1.xpose.msra.mxu0 0.0
        %1233 = vmatprep.subr.mxu0 0.0
        %1234 = vmatpush1.xpose.msra.mxu0 0.0
        %1235 = vmatprep.subr.mxu0 0.0
        %1236 = vmatpush1.xpose.msra.mxu0 0.0
        %1237 = vmatprep.subr.mxu0 0.0
        %1238 = vmatpush1.xpose.msra.mxu0 0.0
        %1239 = vmatprep.subr.mxu0 0.0
        %1240 = vmatpush1.xpose.msra.mxu0 0.0
        %1241 = vmatprep.subr.mxu0 0.0
        %1242 = vmatpush1.xpose.msra.mxu0 0.0
        %1243 = vmatprep.subr.mxu0 0.0
        %1244 = vmatpush1.xpose.msra.mxu0 0.0
        %1245 = vmatprep.subr.mxu0 0.0
        %1246 = vmatpush1.xpose.msra.mxu0 0.0
        %1247 = vmatprep.subr.mxu0 0.0
        %1248 = vmatpush1.xpose.msra.mxu0 0.0
        %1249 = vmatprep.subr.mxu0 0.0
        %1250 = vmatpush1.xpose.msra.mxu0 0.0
        %1251 = vmatprep.subr.mxu0 0.0
        %1252 = vmatpush1.xpose.msra.mxu0 0.0
        %1253 = vmatprep.subr.mxu0 0.0
        %1254 = vmatpush1.xpose.msra.mxu0 0.0
        %1255 = vmatprep.subr.mxu0 0.0
        %1256 = vmatpush1.xpose.msra.mxu0 0.0
        %1257 = vmatprep.subr.mxu0 0.0
        %1258 = vmatpush1.xpose.msra.mxu0 0.0
        %1259 = vmatprep.subr.mxu0 0.0
        %1260 = vmatpush1.xpose.msra.mxu0 0.0
        %1261 = vmatprep.subr.mxu0 0.0
        %1262 = vmatpush1.xpose.msra.mxu0 0.0
        %1263 = vmatprep.subr.mxu0 0.0
        %1264 = vmatpush1.xpose.msra.mxu0 0.0
        %1265 = vmatprep.subr.mxu0 0.0
        %1266 = vmatpush1.xpose.msra.mxu0 0.0
        %1267 = vmatprep.subr.mxu0 0.0
        %1268 = vmatpush1.xpose.msra.mxu0 0.0
        %1269 = vmatprep.mubr.f32.mxu0 0.0
        %1270 = vmatmul.mubr.f32.gmra.mrb[0].mxu0 %v1201
        %v1271 = vpop.f32.mrb[0].mxu0
        %v1272 = vadd.f32 0.0, %v1271
        %v1273 = vpop.f32.mrb[0].mxu0
        %1274 = vdwg.mxu0
        %s1275 = scalar_lea.vmem [#allocation3], 24
        %v1276 = vld [vmem:[%s1275] sm:$0xff]
        %v1277 = vsel %vm616, %v1272, -inf
        %1278 = vmax.xlane.f32.xlu0 %v1277
        %v1279 = vpop.xlane.xlu0 %1278
        %v1280 = vmax.f32 %v1276, %v1279
        %v1281 = vsub.f32 %v1276, %v1280
        %v1282 = vmul.f32 %v1281, 1.442695
        %v1283 = vpow.pop %v1282
        %1285 = vset.pattern.permute.xlu0 0
        %1286 = vperm.xlu0 %1285, %v1280
        %v1287 = vpop.permute.xlu0 %1286
        %v1289 = vsub.f32 %v1272, %v1287
        %v1290 = vmul.f32 %v1289, 1.442695
        %v1291 = vpow.pop %v1290
        %s1292 = scalar_lea.vmem [#allocation4], 24
        %v1293 = vld [vmem:[%s1292] sm:$0xff]
        %v1294 = vmul.f32 %v1283, %v1293
        %v1295 = vsel %vm616, %v1291, 0.0
        %1296 = vadd.xlane.f32.xlu0 %v1295
        %v1297 = vpop.xlane.xlu0 %1296
        %v1298 = vadd.f32 %v1294, %v1297
        %1299 = vst.msk [vmem:[%s1292] sm:$0xff] %vm715, %v1298
        %v1300 = vld [vmem:[#allocation5] sm:$0xff]
        %1302 = vset.pattern.permute.xlu0 0
        %1303 = vperm.xlu0 %1302, %v1283
        %v1304 = vpop.permute.xlu0 %1303
        %v1306 = vmul.f32 %v1304, %v1300
        %1307 = vrot.lane.b32.xlu0 %v612, 72
        %v1308 = vpop.permute.xlu0 %1307
        %v1311 = vsel %vm616, %v1291, 0
        %1313 = vmatprep.subr.mxu0 0.0
        %1314 = vmatpush1.msra.mxu0 %v1308
        %1315 = vmatprep.subr.mxu0 0.0
        %1316 = vmatpush1.msra.mxu0 0.0
        %1317 = vmatprep.subr.mxu0 0.0
        %1318 = vmatpush1.msra.mxu0 0.0
        %1319 = vmatprep.subr.mxu0 0.0
        %1320 = vmatpush1.msra.mxu0 0.0
        %1321 = vmatprep.subr.mxu0 0.0
        %1322 = vmatpush1.msra.mxu0 0.0
        %1323 = vmatprep.subr.mxu0 0.0
        %1324 = vmatpush1.msra.mxu0 0.0
        %1325 = vmatprep.subr.mxu0 0.0
        %1326 = vmatpush1.msra.mxu0 0.0
        %1327 = vmatprep.subr.mxu0 0.0
        %1328 = vmatpush1.msra.mxu0 0.0
        %1329 = vmatprep.subr.mxu0 0.0
        %1330 = vmatpush1.msra.mxu0 0.0
        %1331 = vmatprep.subr.mxu0 0.0
        %1332 = vmatpush1.msra.mxu0 0.0
        %1333 = vmatprep.subr.mxu0 0.0
        %1334 = vmatpush1.msra.mxu0 0.0
        %1335 = vmatprep.subr.mxu0 0.0
        %1336 = vmatpush1.msra.mxu0 0.0
        %1337 = vmatprep.subr.mxu0 0.0
        %1338 = vmatpush1.msra.mxu0 0.0
        %1339 = vmatprep.subr.mxu0 0.0
        %1340 = vmatpush1.msra.mxu0 0.0
        %1341 = vmatprep.subr.mxu0 0.0
        %1342 = vmatpush1.msra.mxu0 0.0
        %1343 = vmatprep.subr.mxu0 0.0
        %1344 = vmatpush1.msra.mxu0 0.0
        %1345 = vmatprep.subr.mxu0 0.0
        %1346 = vmatpush1.msra.mxu0 0.0
        %1347 = vmatprep.subr.mxu0 0.0
        %1348 = vmatpush1.msra.mxu0 0.0
        %1349 = vmatprep.subr.mxu0 0.0
        %1350 = vmatpush1.msra.mxu0 0.0
        %1351 = vmatprep.subr.mxu0 0.0
        %1352 = vmatpush1.msra.mxu0 0.0
        %1353 = vmatprep.subr.mxu0 0.0
        %1354 = vmatpush1.msra.mxu0 0.0
        %1355 = vmatprep.subr.mxu0 0.0
        %1356 = vmatpush1.msra.mxu0 0.0
        %1357 = vmatprep.subr.mxu0 0.0
        %1358 = vmatpush1.msra.mxu0 0.0
        %1359 = vmatprep.subr.mxu0 0.0
        %1360 = vmatpush1.msra.mxu0 0.0
        %1361 = vmatprep.subr.mxu0 0.0
        %1362 = vmatpush1.msra.mxu0 0.0
        %1363 = vmatprep.subr.mxu0 0.0
        %1364 = vmatpush1.msra.mxu0 0.0
        %1365 = vmatprep.subr.mxu0 0.0
        %1366 = vmatpush1.msra.mxu0 0.0
        %1367 = vmatprep.subr.mxu0 0.0
        %1368 = vmatpush1.msra.mxu0 0.0
        %1369 = vmatprep.subr.mxu0 0.0
        %1370 = vmatpush1.msra.mxu0 0.0
        %1371 = vmatprep.subr.mxu0 0.0
        %1372 = vmatpush1.msra.mxu0 0.0
        %1373 = vmatprep.subr.mxu0 0.0
        %1374 = vmatpush1.msra.mxu0 0.0
        %1375 = vmatprep.subr.mxu0 0.0
        %1376 = vmatpush1.msra.mxu0 0.0
        %1377 = vmatprep.mubr.f32.mxu0 0.0
        %1378 = vmatmul.mubr.f32.gmra.mrb[0].mxu0 %v1311
        %v1379 = vpop.f32.mrb[0].mxu0
        %v1380 = vadd.f32 0.0, %v1379
        %v1381 = vpop.f32.mrb[0].mxu0
        %1382 = vdwg.mxu0
        %1384 = vrot.lane.b32.xlu0 %v1380, 24
        %v1385 = vpop.permute.xlu0 %1384
        %v1387 = vadd.f32 %v1306, %v1385
        %vm1388 = vcmask 261312
        %1389 = vst.msk [vmem:[#allocation5] sm:$0xff] %vm1388, %v1387
        %1390 = vst.msk [vmem:[%s1275] sm:$0xff] %vm715, %v1280
        // Predicated region
        $region77: #{tpu_custom_call.1} parent=51 // pred_check
          %p1391 = pneg %p428
        $region78: #{tpu_custom_call.1} parent=51 // pred_check_branch
          %1393 = sbr.rel (%p1391) target = $region80
        $region79: #{tpu_custom_call.1} parent=51 // pred_region
          %v1394 = vld [vmem:[#allocation4] sm:$0xff]
          %v1395 = vrcp.pop %v1394
          %v1396 = vld [vmem:[#allocation5] sm:$0xff]
          %1398 = vset.pattern.permute.xlu0 0
          %1399 = vperm.xlu0 %1398, %v1395
          %v1400 = vpop.permute.xlu0 %1399
          %v1402 = vmul.f32 %v1396, %v1400
          %1403 = vst.msk [vmem:[#allocation5] sm:$0xff] %vm616, %v1402
          %v1404 = vld [vmem:[%s900] sm:$0xff]
          %v1405 = vrcp.pop %v1404
          %v1406 = vld [vmem:[#allocation5] sm:$0xff]
          %1408 = vset.pattern.permute.xlu0 0
          %1409 = vperm.xlu0 %1408, %v1405
          %v1410 = vpop.permute.xlu0 %1409
          %v1412 = vmul.f32 %v1406, %v1410
          %1413 = vst.msk [vmem:[#allocation5] sm:$0xff] %vm996, %v1412
          %v1414 = vld [vmem:[%s1096] sm:$0xff]
          %v1415 = vrcp.pop %v1414
          %v1416 = vld [vmem:[#allocation5] sm:$0xff]
          %1418 = vset.pattern.permute.xlu0 0
          %1419 = vperm.xlu0 %1418, %v1415
          %v1420 = vpop.permute.xlu0 %1419
          %v1422 = vmul.f32 %v1416, %v1420
          %1423 = vst.msk [vmem:[#allocation5] sm:$0xff] %vm1192, %v1422
          %v1424 = vld [vmem:[%s1292] sm:$0xff]
          %v1425 = vrcp.pop %v1424
          %v1426 = vld [vmem:[#allocation5] sm:$0xff]
          %1428 = vset.pattern.permute.xlu0 0
          %1429 = vperm.xlu0 %1428, %v1425
          %v1430 = vpop.permute.xlu0 %1429
          %v1432 = vmul.f32 %v1426, %v1430
          %1433 = vst.msk [vmem:[#allocation5] sm:$0xff] %vm1388, %v1432
          %v1434 = vld [vmem:[#allocation5] sm:$0xff]
          %v1435 = vld [vmem:[#allocation14] sm:$0xff]
          %v1436 = vld [vmem:[#allocation14 + $0x8] sm:$0xff]
          %v1437 = vld [vmem:[#allocation14 + $0x10] sm:$0xff]
          %v1438 = vld [vmem:[#allocation14 + $0x18] sm:$0xff]
          %v1439 = vld [vmem:[%s7] sm:$0x1]
          %v1441 = vlaneseq
          %v1442 = vshrl.u32 %v1441, 7
          %v1443 = vsub.s32 0, %v1442
          %v1444 = vrot.slane %v1439, %v1443
          %v1447 = vsel %vm541, %v1434, 0
          %1449 = vmatprep.subr.mxu0 0.0
          %1450 = vmatpush1.msra.mxu0 %v1435
          %1451 = vmatprep.subr.mxu0 0.0
          %1452 = vmatpush1.msra.mxu0 %v1436
          %1453 = vmatprep.subr.mxu0 0.0
          %1454 = vmatpush1.msra.mxu0 %v1437
          %1455 = vmatprep.subr.mxu0 0.0
          %1456 = vmatpush1.msra.mxu0 %v1438
          %1457 = vmatprep.subr.mxu0 0.0
          %1458 = vmatpush1.msra.mxu0 0.0
          %1459 = vmatprep.subr.mxu0 0.0
          %1460 = vmatpush1.msra.mxu0 0.0
          %1461 = vmatprep.subr.mxu0 0.0
          %1462 = vmatpush1.msra.mxu0 0.0
          %1463 = vmatprep.subr.mxu0 0.0
          %1464 = vmatpush1.msra.mxu0 0.0
          %1465 = vmatprep.subr.mxu0 0.0
          %1466 = vmatpush1.msra.mxu0 0.0
          %1467 = vmatprep.subr.mxu0 0.0
          %1468 = vmatpush1.msra.mxu0 0.0
          %1469 = vmatprep.subr.mxu0 0.0
          %1470 = vmatpush1.msra.mxu0 0.0
          %1471 = vmatprep.subr.mxu0 0.0
          %1472 = vmatpush1.msra.mxu0 0.0
          %1473 = vmatprep.subr.mxu0 0.0
          %1474 = vmatpush1.msra.mxu0 0.0
          %1475 = vmatprep.subr.mxu0 0.0
          %1476 = vmatpush1.msra.mxu0 0.0
          %1477 = vmatprep.subr.mxu0 0.0
          %1478 = vmatpush1.msra.mxu0 0.0
          %1479 = vmatprep.subr.mxu0 0.0
          %1480 = vmatpush1.msra.mxu0 0.0
          %1481 = vmatprep.subr.mxu0 0.0
          %1482 = vmatpush1.msra.mxu0 0.0
          %1483 = vmatprep.subr.mxu0 0.0
          %1484 = vmatpush1.msra.mxu0 0.0
          %1485 = vmatprep.subr.mxu0 0.0
          %1486 = vmatpush1.msra.mxu0 0.0
          %1487 = vmatprep.subr.mxu0 0.0
          %1488 = vmatpush1.msra.mxu0 0.0
          %1489 = vmatprep.subr.mxu0 0.0
          %1490 = vmatpush1.msra.mxu0 0.0
          %1491 = vmatprep.subr.mxu0 0.0
          %1492 = vmatpush1.msra.mxu0 0.0
          %1493 = vmatprep.subr.mxu0 0.0
          %1494 = vmatpush1.msra.mxu0 0.0
          %1495 = vmatprep.subr.mxu0 0.0
          %1496 = vmatpush1.msra.mxu0 0.0
          %1497 = vmatprep.subr.mxu0 0.0
          %1498 = vmatpush1.msra.mxu0 0.0
          %1499 = vmatprep.subr.mxu0 0.0
          %1500 = vmatpush1.msra.mxu0 0.0
          %1501 = vmatprep.subr.mxu0 0.0
          %1502 = vmatpush1.msra.mxu0 0.0
          %1503 = vmatprep.subr.mxu0 0.0
          %1504 = vmatpush1.msra.mxu0 0.0
          %1505 = vmatprep.subr.mxu0 0.0
          %1506 = vmatpush1.msra.mxu0 0.0
          %1507 = vmatprep.subr.mxu0 0.0
          %1508 = vmatpush1.msra.mxu0 0.0
          %1509 = vmatprep.subr.mxu0 0.0
          %1510 = vmatpush1.msra.mxu0 0.0
          %1511 = vmatprep.subr.mxu0 0.0
          %1512 = vmatpush1.msra.mxu0 0.0
          %1513 = vmatprep.mubr.f32.mxu0 0.0
          %1514 = vmatmul.mubr.f32.gmra.mrb[0].mxu0 %v1447
          %v1515 = vpop.f32.mrb[0].mxu0
          %v1516 = vadd.f32 %v1444, %v1515
          %v1517 = vpop.f32.mrb[0].mxu0
          %1518 = vdwg.mxu0
          %1519 = vst.msk [vmem:[%s427] sm:$0xff] %vm541, %v1516
        $region80: #{tpu_custom_call.1} parent=51 // pred_fallthru
          _
        %s1520 = sand.u32 %s240, 1
        %s1521 = scalar_lea.sflag [#allocation8], %s1520
        %s1522 = sand.u32 %s240, 1
        %s1523 = smul.addr %s1522, 8
        %s1524 = scalar_lea.vmem [#allocation15], %s1523
        // Predicated region
        $region81: #{tpu_custom_call.1} parent=51 // pred_check
          %p1525 = pneg %p250
        $region82: #{tpu_custom_call.1} parent=51 // pred_check_branch
          %1527 = sbr.rel (%p1525) target = $region84
        $region83: #{tpu_custom_call.1} parent=51 // pred_region
          %s1529 = ssub.s32 128, 128
          %1530 = vsyncadd %s1521, %s1529
          %s1531 = sadd.s32 %s35, %s34
          %s1532 = smul.addr %s1531, 128
          %s1533 = scalar_lea.hbm %s8, %s1532
          %s1535 = sshll.u32 %s1524, 4
          %s1536 = int_to_ptr.vmem [resolvable:$true] %s1535
          %1538 = dma.vmem_to_hbm [thread:$0]  %s1536, 128, %s1533, %s1521
        $region84: #{tpu_custom_call.1} parent=51 // pred_fallthru
          _
      $region52: #{tpu_custom_call.1} parent=5 // pred_fallthru
        _
      %p1539 = scmp.le.s32.totalorder 2, %s24
      // Predicated region
      $region85: #{tpu_custom_call.1} parent=5 // pred_check
        %p1540 = pneg %p1539
      $region86: #{tpu_custom_call.1} parent=5 // pred_check_branch
        %1542 = sbr.rel (%p1540) target = $region88
      $region87: #{tpu_custom_call.1} parent=5 // pred_region
        %s1543 = ssub.s32 %s24, 2
        // Predicated region
        $region89: #{tpu_custom_call.1} parent=87 // pred_check
          %p1544 = pneg %p256
        $region90: #{tpu_custom_call.1} parent=87 // pred_check_branch
          %1546 = sbr.rel (%p1544) target = $region92
        $region91: #{tpu_custom_call.1} parent=87 // pred_region
          %s1547 = sand.u32 %s241, 1
          %s1548 = scalar_lea.sflag [#allocation8], %s1547
          %s1549 = sand.u32 %s241, 1
          %s1550 = smul.addr %s1549, 8
          %s1551 = scalar_lea.vmem [#allocation15], %s1550
          %1552 = dma.done %s1548, 128
        $region92: #{tpu_custom_call.1} parent=87 // pred_fallthru
          _
      $region88: #{tpu_custom_call.1} parent=5 // pred_fallthru
        _
    $region6: #{tpu_custom_call.1} parent=1 // loop_footer
      %s28 = sadd.s32 1, %s24
    $region7: #{tpu_custom_call.1} parent=1 // loop_footer_branch
      %23 = sbr.rel target = $region3
    $region8: #{tpu_custom_call.1} parent=1 // loop_exit
      _
    %1553 = vsyncpa [#allocation7], 1
    %s1554 = scalar_lea.sflag [#allocation7], 1
    %1555 = vsyncpa %s1554, 1
    %1556 = vsyncpa [#allocation10], 1
    %s1557 = scalar_lea.sflag [#allocation10], 1
    %1558 = vsyncpa %s1557, 1
    %1559 = vsyncpa [#allocation13], 1
    %1560 = vsyncpa [#allocation8], 1
    %s1561 = scalar_lea.sflag [#allocation8], 1
    %1562 = vsyncpa %s1561, 1

</llo_original>
